<compile_context>
chip_gen: v7x
topology: tpu7x:2x2x1
jax: 0.10.0
libtpu: 0.0.40
codegen_flags: <defaults>
</compile_context>

<pallas_src>
import functools
import math

import jax
import jax.numpy as jnp
from jax.experimental import pallas as pl
from jax.experimental.pallas import tpu as pltpu

LN_EPS = 1e-5                 # nn.LayerNorm default
MM_DTYPE = jnp.bfloat16       # MXU operand dtype (accumulation is always f32)
AUX_SLOT = 64                 # lanes reserved for aux logits in the packed output
PACK_W = 128                  # packed output lane width (multiple of 128 -> unmasked vst)
NEG_INF = -1e30


def _layernorm(x, g, b):
    mu = jnp.mean(x, axis=-1, keepdims=True)
    var = jnp.mean((x - mu) ** 2, axis=-1, keepdims=True)
    return (x - mu) * jax.lax.rsqrt(var + LN_EPS) * g + b


# --------------------------- fused forward kernel -----------------------------
def make_fused_kernel(*, num_heads, head_dim, n_mlp, b_chunk, s_real, s_pad, E, P_pad):
    R = b_chunk * s_pad

    def kernel(aug_hbm, pos_ref, wemb_hbm,
               ln1g_ref, ln1b_ref, wqkv_ref, bqkv_ref, wout_ref, bout_ref,
               ln2g_ref, ln2b_ref, *rest):
        mlp_refs = rest[:2 * n_mlp]
        auxw_ref = rest[2 * n_mlp]
        auxb_ref = rest[2 * n_mlp + 1]
        out_ref = rest[2 * n_mlp + 2]
        x_sc = rest[2 * n_mlp + 3]            # VMEM scratch (R, E) f32: resident activations

        chunk = pl.program_id(0)              # outer ("parallel") axis = batch chunk
        blk = pl.program_id(1)                # inner ("arbitrary") axis = transformer block

        # ---- block 0 only: patch embedding + cls token + pos embed (dropout_pos = id).
        # aug / w_emb live in HBM (pl.ANY) and are DMA'd into a scoped VMEM region that
        # is released before the rest of the block loop runs.
        @pl.when(blk == 0)
        def _():
            def embed(aug_buf, wemb_buf, sems):
                cp_a = pltpu.make_async_copy(aug_hbm.at[chunk], aug_buf, sems.at[0])
                cp_w = pltpu.make_async_copy(wemb_hbm, wemb_buf, sems.at[1])
                cp_a.start()
                cp_w.start()
                cp_a.wait()
                cp_w.wait()
                emb = jnp.dot(aug_buf[...], wemb_buf[...],
                              preferred_element_type=jnp.float32)        # (R, E)
                x_sc[...] = (emb.reshape(b_chunk, s_pad, E)
                             + pos_ref[...]).reshape(R, E)

            pl.run_scoped(embed,
                          pltpu.VMEM((R, P_pad), MM_DTYPE),
                          pltpu.VMEM((P_pad, E), MM_DTYPE),
                          pltpu.SemaphoreType.DMA((2,)))

        x = x_sc[...]                          # (R, E) f32, R = Bc*Sp

        # ---------------------------- attention branch ----------------------------
        xn = _layernorm(x, ln1g_ref[...], ln1b_ref[...])
        # 1/sqrt(head_dim) is pre-folded into the Q columns of wqkv / bqkv at pack time.
        qkv = jnp.dot(xn.astype(MM_DTYPE), wqkv_ref[...],
                      preferred_element_type=jnp.float32) + bqkv_ref[...]
        qkv_b = qkv.astype(MM_DTYPE)           # single cast before the head loop

        if s_pad > s_real:                     # mask padded key positions in every block
            key_pad = jax.lax.broadcasted_iota(jnp.int32, (1, 1, s_pad), 2) >= s_real
        else:
            key_pad = None

        wout = wout_ref[...]                   # (E, E) bf16, loaded once
        attn = None
        for h in range(num_heads):             # H iterations (not Bc*H); no stacks/concats
            c0 = h * head_dim
            qh = qkv_b[:, c0:c0 + head_dim].reshape(b_chunk, s_pad, head_dim)
            kh = qkv_b[:, E + c0:E + c0 + head_dim].reshape(b_chunk, s_pad, head_dim)
            vh = qkv_b[:, 2 * E + c0:2 * E + c0 + head_dim].reshape(b_chunk, s_pad, head_dim)

            s = jnp.einsum('bqd,bkd->bqk', qh, kh,
                           preferred_element_type=jnp.float32)           # (Bc, Sp, Sp)
            if key_pad is not None:
                s = jnp.where(key_pad, NEG_INF, s)
            s = s - jnp.max(s, axis=-1, keepdims=True)
            p = jnp.exp(s)
            p = p * pl.reciprocal(jnp.sum(p, axis=-1, keepdims=True), approx=True)
            ctx = jnp.einsum('bqk,bkd->bqd', p.astype(MM_DTYPE), vh,
                             preferred_element_type=jnp.float32)         # (Bc, Sp, d)

            # head merge folded into the output projection: sum_h ctx_h @ w_out[h*d:(h+1)*d]
            part = jnp.dot(ctx.reshape(R, head_dim).astype(MM_DTYPE),
                           wout[c0:c0 + head_dim, :],
                           preferred_element_type=jnp.float32)
            attn = part if attn is None else attn + part
        attn = attn + bout_ref[...]

        resid = x + attn                       # features_after_attn_res (attn dropout = id)

        # ------------------------------- MLP branch --------------------------------
        h_act = _layernorm(resid, ln2g_ref[...], ln2b_ref[...])
        for i in range(n_mlp):
            w = mlp_refs[2 * i][...]
            bb = mlp_refs[2 * i + 1][...]
            h_act = jnp.dot(h_act.astype(MM_DTYPE), w,
                            preferred_element_type=jnp.float32) + bb
            if i < n_mlp - 1:
                # TODO(synk): nn.GELU() default is erf-exact; tanh approximation used for
                # guaranteed Mosaic lowering (max abs deviation ~1e-3).
                h_act = jax.nn.gelu(h_act, approximate=True)
        out = resid + h_act
        x_sc[...] = out                        # carried to next block, never leaves VMEM

        # ---- aux head + cls feature, packed into one lane-dense 128-wide slab ----
        cls_out = out.reshape(b_chunk, s_pad, E)[:, 0, :]     # (Bc, E), post-MLP cls row
        feat = resid.reshape(b_chunk, s_pad, E)[:, 0, :]      # (Bc, E), pre-MLP cls row
        aux = jnp.dot(cls_out.astype(MM_DTYPE), auxw_ref[...],
                      preferred_element_type=jnp.float32) + auxb_ref[...]   # (Bc, AUX_SLOT)
        parts = [aux, feat]
        tail = PACK_W - AUX_SLOT - E
        if tail > 0:
            parts.append(jnp.zeros((b_chunk, tail), jnp.float32))
        out_ref[...] = jnp.concatenate(parts, axis=-1)

    return kernel


# ------------------------------ parameter packing ------------------------------
def pack_params(params, *, num_heads):
    """One-time packing: stack per-block weights, pad, cast to bf16, fold q scale.

    Call this ONCE outside the forward path; the result is passed straight into
    vit_forward so no per-call re-stacking / re-casting happens in HBM.
    """
    blocks = params["blocks"]
    nb = len(blocks)
    S, E = params["pos"].shape
    Sp = ((S + 7) // 8) * 8                     # sublane-friendly sequence length
    head_dim = E // num_heads
    scale = 1.0 / math.sqrt(head_dim)           # PyTorch MHA q scaling
    P = params["patch_w"].shape[0]
    P_aug = P + 2
    P_pad = ((P_aug + 127) // 128) * 128        # lane-dense augmented patch rows

    def stack(name):
        return jnp.stack([blk[name] for blk in blocks], axis=0)

    # augmented patch-embedding weight: [patch_w ; patch_b ; cls_token ; zero pad]
    w_emb = jnp.concatenate([params["patch_w"], params["patch_b"], params["cls"]], axis=0)
    w_emb = jnp.pad(w_emb, ((0, P_pad - P_aug), (0, 0))).astype(MM_DTYPE)
    pos = jnp.pad(params["pos"], ((0, Sp - S), (0, 0)))       # (Sp, E) f32, padded rows = 0

    # fold 1/sqrt(head_dim) into the Q third of the fused QKV projection
    qscale = jnp.concatenate([jnp.full((E,), scale, jnp.float32),
                              jnp.ones((2 * E,), jnp.float32)])
    w_in = stack("w_in") * qscale
    b_in = stack("b_in") * qscale

    # zero-filled padding -> padded lanes of the aux output are exactly 0
    aux_w = stack("aux_w")                      # (nb, E, C)
    aux_b = stack("aux_b")                      # (nb, 1, C)
    C = aux_w.shape[-1]
    aux_w = jnp.zeros((nb, E, AUX_SLOT), jnp.float32).at[:, :, :C].set(aux_w)
    aux_b = jnp.zeros((nb, 1, AUX_SLOT), jnp.float32).at[:, :, :C].set(aux_b)

    n_mlp = len(blocks[0]["mlp"])
    mlp = []
    for l in range(n_mlp):
        wl = jnp.stack([blk["mlp"][l][0] for blk in blocks], axis=0).astype(MM_DTYPE)
        bl = jnp.stack([blk["mlp"][l][1] for blk in blocks], axis=0)
        mlp.append((wl, bl))

    return {
        "w_emb": w_emb, "pos": pos,
        "ln1_g": stack("ln1_g"), "ln1_b": stack("ln1_b"),
        "w_in": w_in.astype(MM_DTYPE), "b_in": b_in,
        "w_out": stack("w_out").astype(MM_DTYPE), "b_out": stack("b_out"),
        "ln2_g": stack("ln2_g"), "ln2_b": stack("ln2_b"),
        "mlp": mlp,
        "aux_w": aux_w.astype(MM_DTYPE), "aux_b": aux_b,
    }


# ---------------------------------- forward ------------------------------------
def vit_forward(x, packed, *, patch, num_heads, num_classes):
    B, Cin, H, W = x.shape
    ph, pw = H // patch, W // patch
    N = ph * pw
    P = Cin * patch * patch
    S = N + 1
    Sp, E = packed["pos"].shape
    P_pad = packed["w_emb"].shape[0]
    nb = packed["ln1_g"].shape[0]
    n_mlp = len(packed["mlp"])
    head_dim = E // num_heads
    assert head_dim * num_heads == E
    assert S <= Sp and P + 2 <= P_pad
    assert num_classes <= AUX_SLOT and AUX_SLOT + E <= PACK_W

    # Batch-chunk "parallel" axis only on multi-TensorCore parts (v7x, megacore v4/v5p);
    # on single-core v5e/v6e keep one chunk so per-block weights stream from HBM once and
    # the matmul row dimension R = Bc*Sp stays as large as possible.
    kind = jax.devices()[0].device_kind.lower()
    multi_tc = any(tag in kind for tag in ("v7", "7x", "v4", "v5p"))
    n_chunks = 2 if (multi_tc and B >= 2 and B % 2 == 0) else 1
    Bc = B // n_chunks
    R = Bc * Sp

    # --- wrapper-side layout glue (no compute): im2col + augmentation + seq padding ---
    patches = (x.reshape(B, Cin, ph, patch, pw, patch)
                .transpose(0, 2, 4, 1, 3, 5)
                .reshape(B, N, P))                                  # Conv2d im2col (c,kh,kw)
    aug = jnp.zeros((B, Sp, P_pad), MM_DTYPE)
    aug = aug.at[:, 1:S, :P].set(patches.astype(MM_DTYPE))
    aug = aug.at[:, 1:S, P].set(1.0)                                # conv-bias indicator
    aug = aug.at[:, 0, P + 1].set(1.0)                              # cls-token indicator
    aug = aug.reshape(n_chunks, R, P_pad)                           # padded rows stay zero

    flat_inputs = [aug, packed["pos"], packed["w_emb"],
                   packed["ln1_g"], packed["ln1_b"],
                   packed["w_in"], packed["b_in"],
                   packed["w_out"], packed["b_out"],
                   packed["ln2_g"], packed["ln2_b"]]
    for wl, bl in packed["mlp"]:
        flat_inputs += [wl, bl]
    flat_inputs += [packed["aux_w"], packed["aux_b"]]

    def blk_spec(a):       # per-block stacked weight, indexed by the block grid axis
        return pl.BlockSpec((None,) + tuple(a.shape[1:]),
                            lambda i, j: (j,) + (0,) * (a.ndim - 1))

    in_specs = [pl.BlockSpec(memory_space=pl.ANY),                  # aug: manual DMA @ blk 0
                pl.BlockSpec(packed["pos"].shape, lambda i, j: (0, 0)),
                pl.BlockSpec(memory_space=pl.ANY)]                  # w_emb: manual DMA @ blk 0
    in_specs += [blk_spec(a) for a in flat_inputs[3:]]

    out_specs = pl.BlockSpec((None, None, Bc, PACK_W), lambda i, j: (j, i, 0, 0))
    out_shape = jax.ShapeDtypeStruct((nb, n_chunks, Bc, PACK_W), jnp.float32)

    kernel = make_fused_kernel(num_heads=num_heads, head_dim=head_dim, n_mlp=n_mlp,
                               b_chunk=Bc, s_real=S, s_pad=Sp, E=E, P_pad=P_pad)

    packed_out = pl.pallas_call(
        kernel,
        out_shape=out_shape,
        grid=(n_chunks, nb),
        in_specs=in_specs,
        out_specs=out_specs,
        scratch_shapes=[pltpu.VMEM((R, E), jnp.float32)],
        compiler_params=pltpu.CompilerParams(
            dimension_semantics=("parallel", "arbitrary")),
    )(*flat_inputs)

    packed_out = packed_out.reshape(nb, B, PACK_W)
    aux_logits_list = [packed_out[l, :, :num_classes] for l in range(nb)]
    intermediate_cls_features = [packed_out[l, :, AUX_SLOT:AUX_SLOT + E] for l in range(nb)]
    return aux_logits_list, intermediate_cls_features


# ------------------------------ parameters --------------------------------------
def init_params(key, *, in_channels, patch, embed_dim, num_blocks,
                mlp_hidden, num_classes, num_patches):
    P = in_channels * patch * patch
    S = num_patches + 1

    def normal(k, shape, scale=0.02):
        return scale * jax.random.normal(k, shape, dtype=jnp.float32)

    keys = jax.random.split(key, 3 + num_blocks)
    params = {
        "patch_w": normal(keys[0], (P, embed_dim)),            # Conv2d weight, (in, out)
        "patch_b": jnp.zeros((1, embed_dim), jnp.float32),
        "cls": normal(keys[1], (1, embed_dim), scale=1.0),     # torch.randn(1,1,E)
        "pos": normal(keys[2], (S, embed_dim), scale=1.0),     # torch.randn(1,S,E)
        "blocks": [],
    }
    dims = [embed_dim] + list(mlp_hidden) + [embed_dim]
    for i in range(num_blocks):
        bkeys = jax.random.split(keys[3 + i], 3 + len(dims) - 1)
        mlp = []
        for j in range(len(dims) - 1):
            mlp.append((normal(bkeys[3 + j], (dims[j], dims[j + 1])),
                        jnp.zeros((1, dims[j + 1]), jnp.float32)))
        params["blocks"].append({
            "ln1_g": jnp.ones((1, embed_dim), jnp.float32),
            "ln1_b": jnp.zeros((1, embed_dim), jnp.float32),
            "w_in": normal(bkeys[0], (embed_dim, 3 * embed_dim)),   # fused QKV, (in, out)
            "b_in": jnp.zeros((1, 3 * embed_dim), jnp.float32),
            "w_out": normal(bkeys[1], (embed_dim, embed_dim)),
            "b_out": jnp.zeros((1, embed_dim), jnp.float32),
            "ln2_g": jnp.ones((1, embed_dim), jnp.float32),
            "ln2_b": jnp.zeros((1, embed_dim), jnp.float32),
            "mlp": mlp,
            "aux_w": normal(bkeys[2], (embed_dim, num_classes)),
            "aux_b": jnp.zeros((1, num_classes), jnp.float32),
        })
    return params


if __name__ == "__main__":
    key = jax.random.PRNGKey(0)
    k_x, k_p = jax.random.split(key)

    B, Cin, H, W = 2, 4, 16, 16
    patch = 4
    embed_dim, num_heads = 32, 4
    num_blocks = 2
    mlp_hidden = (64, 48)
    num_classes = 10

    x = jax.random.normal(k_x, (B, Cin, H, W), dtype=jnp.float32)
    params = init_params(
        k_p, in_channels=Cin, patch=patch, embed_dim=embed_dim,
        num_blocks=num_blocks, mlp_hidden=mlp_hidden, num_classes=num_classes,
        num_patches=(H // patch) * (W // patch))

    # Weight packing hoisted out of the forward path: done exactly once.
    packed = pack_params(params, num_heads=num_heads)

    fwd = jax.jit(functools.partial(vit_forward, patch=patch,
                                    num_heads=num_heads, num_classes=num_classes))
    aux_list, feat_list = fwd(x, packed)
    jax.block_until_ready((aux_list, feat_list))

    assert len(aux_list) == num_blocks and len(feat_list) == num_blocks
    assert aux_list[0].shape == (B, num_classes)
    assert feat_list[0].shape == (B, embed_dim)
    print("KERNEL_OK")
</pallas_src>

<mosaic_0001>
module attributes {stable_mosaic.version = 11 : i64} {
  func.func @kernel(%arg0: i32, %arg1: i32, %arg2: memref<1x48x128xbf16, #tpu.memory_space<any>>, %arg3: memref<24x32xf32, #tpu.memory_space<vmem>>, %arg4: memref<128x32xbf16, #tpu.memory_space<any>>, %arg5: memref<1x1x32xf32, #tpu.memory_space<vmem>>, %arg6: memref<1x1x32xf32, #tpu.memory_space<vmem>>, %arg7: memref<1x32x96xbf16, #tpu.memory_space<vmem>>, %arg8: memref<1x1x96xf32, #tpu.memory_space<vmem>>, %arg9: memref<1x32x32xbf16, #tpu.memory_space<vmem>>, %arg10: memref<1x1x32xf32, #tpu.memory_space<vmem>>, %arg11: memref<1x1x32xf32, #tpu.memory_space<vmem>>, %arg12: memref<1x1x32xf32, #tpu.memory_space<vmem>>, %arg13: memref<1x32x64xbf16, #tpu.memory_space<vmem>>, %arg14: memref<1x1x64xf32, #tpu.memory_space<vmem>>, %arg15: memref<1x64x48xbf16, #tpu.memory_space<vmem>>, %arg16: memref<1x1x48xf32, #tpu.memory_space<vmem>>, %arg17: memref<1x48x32xbf16, #tpu.memory_space<vmem>>, %arg18: memref<1x1x32xf32, #tpu.memory_space<vmem>>, %arg19: memref<1x32x64xbf16, #tpu.memory_space<vmem>>, %arg20: memref<1x1x64xf32, #tpu.memory_space<vmem>>, %arg21: memref<1x1x2x128xf32, #tpu.memory_space<vmem>>, %arg22: memref<48x32xf32, #tpu.memory_space<vmem>>) attributes {dimension_semantics = [#tpu.dimension_semantics<parallel>, #tpu.dimension_semantics<arbitrary>], iteration_bounds = array<i64: 1, 2>, scalar_prefetch = 0 : i64, scratch_operands = 1 : i64, tpu.core_type = #tpu.core_type<tc>, window_params = [{}, {pipeline_mode = #tpu.pipeline_mode<synchronous>, transform_indices = @transform_1, window_bounds = array<i64: 24, 32>}, {}, {transform_indices = @transform_3, window_bounds = array<i64: 1, 1, 32>}, {transform_indices = @transform_4, window_bounds = array<i64: 1, 1, 32>}, {transform_indices = @transform_5, window_bounds = array<i64: 1, 32, 96>}, {transform_indices = @transform_6, window_bounds = array<i64: 1, 1, 96>}, {transform_indices = @transform_7, window_bounds = array<i64: 1, 32, 32>}, {transform_indices = @transform_8, window_bounds = array<i64: 1, 1, 32>}, {transform_indices = @transform_9, window_bounds = array<i64: 1, 1, 32>}, {transform_indices = @transform_10, window_bounds = array<i64: 1, 1, 32>}, {transform_indices = @transform_11, window_bounds = array<i64: 1, 32, 64>}, {transform_indices = @transform_12, window_bounds = array<i64: 1, 1, 64>}, {transform_indices = @transform_13, window_bounds = array<i64: 1, 64, 48>}, {transform_indices = @transform_14, window_bounds = array<i64: 1, 1, 48>}, {transform_indices = @transform_15, window_bounds = array<i64: 1, 48, 32>}, {transform_indices = @transform_16, window_bounds = array<i64: 1, 1, 32>}, {transform_indices = @transform_17, window_bounds = array<i64: 1, 32, 64>}, {transform_indices = @transform_18, window_bounds = array<i64: 1, 1, 64>}, {transform_indices = @transform_19, window_bounds = array<i64: 1, 1, 2, 128>}]} {
    %c0_i32 = arith.constant 0 : i32
    %0 = arith.cmpi eq, %arg1, %c0_i32 : i32
    %1 = arith.extui %0 : i1 to i32
    %c0_i32_0 = arith.constant 0 : i32
    %2 = arith.cmpi ne, %1, %c0_i32_0 : i32
    scf.if %2 {
      "tpu.region"() ({
        %alloca = memref.alloca() : memref<48x128xbf16, #tpu.memory_space<vmem>>
        %alloca_103 = memref.alloca() : memref<128x32xbf16, #tpu.memory_space<vmem>>
        %257 = tpu.sem_alloc : memref<2x!tpu.dma_semaphore, #tpu.memory_space<semaphore_mem>>
        %c0_i32_104 = arith.constant 0 : i32
        %c0_i32_105 = arith.constant 0 : i32
        %c0_i32_106 = arith.constant 0 : i32
        %258 = tpu.memref_slice %arg2[%arg0, %c0_i32_105, %c0_i32_106] : memref<1x48x128xbf16, #tpu.memory_space<any>> -> memref<1x48x128xbf16, #tpu.memory_space<any>>
        %259 = tpu.memref_squeeze %258 : memref<1x48x128xbf16, #tpu.memory_space<any>> -> memref<48x128xbf16, #tpu.memory_space<any>>
        %260 = tpu.memref_slice %257[%c0_i32_104] : memref<2x!tpu.dma_semaphore, #tpu.memory_space<semaphore_mem>> -> memref<1x!tpu.dma_semaphore, #tpu.memory_space<semaphore_mem>>
        %261 = tpu.memref_squeeze %260 : memref<1x!tpu.dma_semaphore, #tpu.memory_space<semaphore_mem>> -> memref<!tpu.dma_semaphore, #tpu.memory_space<semaphore_mem>>
        tpu.enqueue_dma source(%259 : memref<48x128xbf16, #tpu.memory_space<any>>) target(%alloca : memref<48x128xbf16, #tpu.memory_space<vmem>>) target_semaphore(%261 : memref<!tpu.dma_semaphore, #tpu.memory_space<semaphore_mem>>)
        %c1_i32 = arith.constant 1 : i32
        %262 = tpu.memref_slice %257[%c1_i32] : memref<2x!tpu.dma_semaphore, #tpu.memory_space<semaphore_mem>> -> memref<1x!tpu.dma_semaphore, #tpu.memory_space<semaphore_mem>>
        %263 = tpu.memref_squeeze %262 : memref<1x!tpu.dma_semaphore, #tpu.memory_space<semaphore_mem>> -> memref<!tpu.dma_semaphore, #tpu.memory_space<semaphore_mem>>
        tpu.enqueue_dma source(%arg4 : memref<128x32xbf16, #tpu.memory_space<any>>) target(%alloca_103 : memref<128x32xbf16, #tpu.memory_space<vmem>>) target_semaphore(%263 : memref<!tpu.dma_semaphore, #tpu.memory_space<semaphore_mem>>)
        %c0_i32_107 = arith.constant 0 : i32
        %c0_i32_108 = arith.constant 0 : i32
        %c0_i32_109 = arith.constant 0 : i32
        %264 = tpu.memref_slice %arg2[%arg0, %c0_i32_108, %c0_i32_109] : memref<1x48x128xbf16, #tpu.memory_space<any>> -> memref<1x48x128xbf16, #tpu.memory_space<any>>
        %265 = tpu.memref_squeeze %264 : memref<1x48x128xbf16, #tpu.memory_space<any>> -> memref<48x128xbf16, #tpu.memory_space<any>>
        %266 = tpu.memref_slice %257[%c0_i32_107] : memref<2x!tpu.dma_semaphore, #tpu.memory_space<semaphore_mem>> -> memref<1x!tpu.dma_semaphore, #tpu.memory_space<semaphore_mem>>
        %267 = tpu.memref_squeeze %266 : memref<1x!tpu.dma_semaphore, #tpu.memory_space<semaphore_mem>> -> memref<!tpu.dma_semaphore, #tpu.memory_space<semaphore_mem>>
        tpu.wait_dma2 semaphore(%267 : memref<!tpu.dma_semaphore, #tpu.memory_space<semaphore_mem>>) src(%265 : memref<48x128xbf16, #tpu.memory_space<any>>) dst(%alloca : memref<48x128xbf16, #tpu.memory_space<vmem>>)
        %c1_i32_110 = arith.constant 1 : i32
        %268 = tpu.memref_slice %257[%c1_i32_110] : memref<2x!tpu.dma_semaphore, #tpu.memory_space<semaphore_mem>> -> memref<1x!tpu.dma_semaphore, #tpu.memory_space<semaphore_mem>>
        %269 = tpu.memref_squeeze %268 : memref<1x!tpu.dma_semaphore, #tpu.memory_space<semaphore_mem>> -> memref<!tpu.dma_semaphore, #tpu.memory_space<semaphore_mem>>
        tpu.wait_dma2 semaphore(%269 : memref<!tpu.dma_semaphore, #tpu.memory_space<semaphore_mem>>) src(%arg4 : memref<128x32xbf16, #tpu.memory_space<any>>) dst(%alloca_103 : memref<128x32xbf16, #tpu.memory_space<vmem>>)
        %c0_111 = arith.constant 0 : index
        %c0_112 = arith.constant 0 : index
        %270 = vector.load %alloca[%c0_111, %c0_112] : memref<48x128xbf16, #tpu.memory_space<vmem>>, vector<48x128xbf16>
        %c0_113 = arith.constant 0 : index
        %c0_114 = arith.constant 0 : index
        %271 = vector.load %alloca_103[%c0_113, %c0_114] : memref<128x32xbf16, #tpu.memory_space<vmem>>, vector<128x32xbf16>
        %cst_115 = arith.constant dense<0.000000e+00> : vector<48x32xf32>
        %272 = tpu.matmul %270, %271, %cst_115 {dimension_numbers = #tpu.dot_dimension_numbers<[1], [0], [0], [1], [0, 0, 1, 1], [], []>} : vector<48x128xbf16>, vector<128x32xbf16>, vector<48x32xf32> -> vector<48x32xf32>
        %273 = vector.shape_cast %272 : vector<48x32xf32> to vector<2x24x32xf32>
        %c0_116 = arith.constant 0 : index
        %c0_117 = arith.constant 0 : index
        %274 = vector.load %arg3[%c0_116, %c0_117] : memref<24x32xf32, #tpu.memory_space<vmem>>, vector<24x32xf32>
        %275 = vector.shape_cast %274 : vector<24x32xf32> to vector<1x24x32xf32>
        %276 = vector.broadcast %275 : vector<1x24x32xf32> to vector<2x24x32xf32>
        %277 = arith.addf %273, %276 : vector<2x24x32xf32>
        %278 = vector.shape_cast %277 : vector<2x24x32xf32> to vector<48x32xf32>
        %c0_118 = arith.constant 0 : index
        %c0_119 = arith.constant 0 : index
        %279 = vector.load %arg22[%c0_118, %c0_119] : memref<48x32xf32, #tpu.memory_space<vmem>>, vector<48x32xf32>
        tpu.vector_store %arg22[%c0_118, %c0_119], %278 {strides = array<i32>} : memref<48x32xf32, #tpu.memory_space<vmem>>, vector<48x32xf32>,
        tpu.yield
      }) : () -> ()
    } else {
    }
    %c0 = arith.constant 0 : index
    %c0_1 = arith.constant 0 : index
    %3 = vector.load %arg22[%c0, %c0_1] : memref<48x32xf32, #tpu.memory_space<vmem>>, vector<48x32xf32>
    %c0_2 = arith.constant 0 : index
    %c0_3 = arith.constant 0 : index
    %c0_4 = arith.constant 0 : index
    %4 = vector.load %arg5[%c0_2, %c0_3, %c0_4] : memref<1x1x32xf32, #tpu.memory_space<vmem>>, vector<1x1x32xf32>
    %5 = vector.shape_cast %4 : vector<1x1x32xf32> to vector<1x32xf32>
    %c0_5 = arith.constant 0 : index
    %c0_6 = arith.constant 0 : index
    %c0_7 = arith.constant 0 : index
    %6 = vector.load %arg6[%c0_5, %c0_6, %c0_7] : memref<1x1x32xf32, #tpu.memory_space<vmem>>, vector<1x1x32xf32>
    %7 = vector.shape_cast %6 : vector<1x1x32xf32> to vector<1x32xf32>
    %cst = arith.constant dense<0.000000e+00> : vector<48xf32>
    %8 = vector.multi_reduction <add>, %3, %cst [1] : vector<48x32xf32> to vector<48xf32>
    %9 = vector.shape_cast %8 : vector<48xf32> to vector<48x1xf32>
    %cst_8 = arith.constant 3.200000e+01 : f32
    %10 = vector.broadcast %cst_8 : f32 to vector<48x1xf32>
    %11 = arith.divf %9, %10 : vector<48x1xf32>
    %12 = vector.broadcast %11 : vector<48x1xf32> to vector<48x32xf32>
    %13 = arith.subf %3, %12 : vector<48x32xf32>
    %14 = arith.mulf %13, %13 : vector<48x32xf32>
    %cst_9 = arith.constant dense<0.000000e+00> : vector<48xf32>
    %15 = vector.multi_reduction <add>, %14, %cst_9 [1] : vector<48x32xf32> to vector<48xf32>
    %16 = vector.shape_cast %15 : vector<48xf32> to vector<48x1xf32>
    %cst_10 = arith.constant 3.200000e+01 : f32
    %17 = vector.broadcast %cst_10 : f32 to vector<48x1xf32>
    %18 = arith.divf %16, %17 : vector<48x1xf32>
    %19 = vector.broadcast %11 : vector<48x1xf32> to vector<48x32xf32>
    %20 = arith.subf %3, %19 : vector<48x32xf32>
    %cst_11 = arith.constant 9.99999974E-6 : f32
    %21 = vector.broadcast %cst_11 : f32 to vector<48x1xf32>
    %22 = arith.addf %18, %21 : vector<48x1xf32>
    %23 = math.rsqrt %22 : vector<48x1xf32>
    %24 = vector.broadcast %23 : vector<48x1xf32> to vector<48x32xf32>
    %25 = arith.mulf %20, %24 : vector<48x32xf32>
    %26 = vector.broadcast %5 : vector<1x32xf32> to vector<48x32xf32>
    %27 = arith.mulf %25, %26 : vector<48x32xf32>
    %28 = vector.broadcast %7 : vector<1x32xf32> to vector<48x32xf32>
    %29 = arith.addf %27, %28 : vector<48x32xf32>
    %30 = arith.truncf %29 : vector<48x32xf32> to vector<48x32xbf16>
    %c0_12 = arith.constant 0 : index
    %c0_13 = arith.constant 0 : index
    %c0_14 = arith.constant 0 : index
    %31 = vector.load %arg7[%c0_12, %c0_13, %c0_14] : memref<1x32x96xbf16, #tpu.memory_space<vmem>>, vector<1x32x96xbf16>
    %32 = vector.shape_cast %31 : vector<1x32x96xbf16> to vector<32x96xbf16>
    %cst_15 = arith.constant dense<0.000000e+00> : vector<48x96xf32>
    %33 = tpu.matmul %30, %32, %cst_15 {dimension_numbers = #tpu.dot_dimension_numbers<[1], [0], [0], [1], [0, 0, 1, 1], [], []>} : vector<48x32xbf16>, vector<32x96xbf16>, vector<48x96xf32> -> vector<48x96xf32>
    %c0_16 = arith.constant 0 : index
    %c0_17 = arith.constant 0 : index
    %c0_18 = arith.constant 0 : index
    %34 = vector.load %arg8[%c0_16, %c0_17, %c0_18] : memref<1x1x96xf32, #tpu.memory_space<vmem>>, vector<1x1x96xf32>
    %35 = vector.shape_cast %34 : vector<1x1x96xf32> to vector<1x96xf32>
    %36 = vector.broadcast %35 : vector<1x96xf32> to vector<48x96xf32>
    %37 = arith.addf %33, %36 : vector<48x96xf32>
    %38 = arith.truncf %37 : vector<48x96xf32> to vector<48x96xbf16>
    %39 = tpu.iota {dimensions = array<i32: 2>} : vector<1x1x24xi32>
    %c17_i32 = arith.constant 17 : i32
    %40 = vector.broadcast %c17_i32 : i32 to vector<1x1x24xi32>
    %41 = arith.cmpi sge, %39, %40 : vector<1x1x24xi32>
    %c0_19 = arith.constant 0 : index
    %c0_20 = arith.constant 0 : index
    %c0_21 = arith.constant 0 : index
    %42 = vector.load %arg9[%c0_19, %c0_20, %c0_21] : memref<1x32x32xbf16, #tpu.memory_space<vmem>>, vector<1x32x32xbf16>
    %43 = vector.shape_cast %42 : vector<1x32x32xbf16> to vector<32x32xbf16>
    %44 = vector.extract_strided_slice %38 {offsets = [0, 0], sizes = [48, 8], strides = [1, 1]} : vector<48x96xbf16> to vector<48x8xbf16>
    %45 = vector.shape_cast %44 : vector<48x8xbf16> to vector<2x24x8xbf16>
    %46 = vector.extract_strided_slice %38 {offsets = [0, 32], sizes = [48, 8], strides = [1, 1]} : vector<48x96xbf16> to vector<48x8xbf16>
    %47 = vector.shape_cast %46 : vector<48x8xbf16> to vector<2x24x8xbf16>
    %48 = vector.extract_strided_slice %38 {offsets = [0, 64], sizes = [48, 8], strides = [1, 1]} : vector<48x96xbf16> to vector<48x8xbf16>
    %49 = vector.shape_cast %48 : vector<48x8xbf16> to vector<2x24x8xbf16>
    "tpu.trace_start"() <{level = 10 : i32, message = "bqd,bkd->bqk"}> : () -> ()
    %cst_22 = arith.constant dense<0.000000e+00> : vector<2x24x24xf32>
    %50 = tpu.matmul %45, %47, %cst_22 {dimension_numbers = #tpu.dot_dimension_numbers<[2], [2], [1], [1], [0, 0, 0, 1, 1, 1], [0], [0]>} : vector<2x24x8xbf16>, vector<2x24x8xbf16>, vector<2x24x24xf32> -> vector<2x24x24xf32>
    %cst_23 = arith.constant -1.000000e+30 : f32
    "tpu.trace_stop"() : () -> ()
    %51 = vector.shape_cast %41 : vector<1x1x24xi1> to vector<1x1x24xi1>
    %52 = vector.broadcast %51 : vector<1x1x24xi1> to vector<2x24x24xi1>
    %53 = vector.broadcast %cst_23 : f32 to vector<2x24x24xf32>
    %54 = arith.select %52, %53, %50 : vector<2x24x24xi1>, vector<2x24x24xf32>
    %cst_24 = arith.constant dense<0xFF800000> : vector<2x24xf32>
    %55 = vector.multi_reduction <maximumf>, %54, %cst_24 [2] : vector<2x24x24xf32> to vector<2x24xf32>
    %56 = vector.shape_cast %55 : vector<2x24xf32> to vector<2x24x1xf32>
    %57 = vector.broadcast %56 : vector<2x24x1xf32> to vector<2x24x24xf32>
    %58 = arith.subf %54, %57 : vector<2x24x24xf32>
    %59 = math.exp %58 : vector<2x24x24xf32>
    %cst_25 = arith.constant dense<0.000000e+00> : vector<2x24xf32>
    %60 = vector.multi_reduction <add>, %59, %cst_25 [2] : vector<2x24x24xf32> to vector<2x24xf32>
    %61 = vector.shape_cast %60 : vector<2x24xf32> to vector<2x24x1xf32>
    %62 = tpu.reciprocal %61 {approx = true} : vector<2x24x1xf32> -> vector<2x24x1xf32>
    %63 = vector.broadcast %62 : vector<2x24x1xf32> to vector<2x24x24xf32>
    %64 = arith.mulf %59, %63 : vector<2x24x24xf32>
    %65 = arith.truncf %64 : vector<2x24x24xf32> to vector<2x24x24xbf16>
    "tpu.trace_start"() <{level = 10 : i32, message = "bqk,bkd->bqd"}> : () -> ()
    %cst_26 = arith.constant dense<0.000000e+00> : vector<2x24x8xf32>
    %66 = tpu.matmul %65, %49, %cst_26 {dimension_numbers = #tpu.dot_dimension_numbers<[2], [1], [1], [2], [0, 0, 0, 1, 1, 2], [0], [0]>} : vector<2x24x24xbf16>, vector<2x24x8xbf16>, vector<2x24x8xf32> -> vector<2x24x8xf32>
    "tpu.trace_stop"() : () -> ()
    %67 = vector.shape_cast %66 : vector<2x24x8xf32> to vector<48x8xf32>
    %68 = arith.truncf %67 : vector<48x8xf32> to vector<48x8xbf16>
    %69 = vector.extract_strided_slice %43 {offsets = [0, 0], sizes = [8, 32], strides = [1, 1]} : vector<32x32xbf16> to vector<8x32xbf16>
    %cst_27 = arith.constant dense<0.000000e+00> : vector<48x32xf32>
    %70 = tpu.matmul %68, %69, %cst_27 {dimension_numbers = #tpu.dot_dimension_numbers<[1], [0], [0], [1], [0, 0, 1, 1], [], []>} : vector<48x8xbf16>, vector<8x32xbf16>, vector<48x32xf32> -> vector<48x32xf32>
    %71 = vector.extract_strided_slice %38 {offsets = [0, 8], sizes = [48, 8], strides = [1, 1]} : vector<48x96xbf16> to vector<48x8xbf16>
    %72 = vector.shape_cast %71 : vector<48x8xbf16> to vector<2x24x8xbf16>
    %73 = vector.extract_strided_slice %38 {offsets = [0, 40], sizes = [48, 8], strides = [1, 1]} : vector<48x96xbf16> to vector<48x8xbf16>
    %74 = vector.shape_cast %73 : vector<48x8xbf16> to vector<2x24x8xbf16>
    %75 = vector.extract_strided_slice %38 {offsets = [0, 72], sizes = [48, 8], strides = [1, 1]} : vector<48x96xbf16> to vector<48x8xbf16>
    %76 = vector.shape_cast %75 : vector<48x8xbf16> to vector<2x24x8xbf16>
    "tpu.trace_start"() <{level = 10 : i32, message = "bqd,bkd->bqk"}> : () -> ()
    %cst_28 = arith.constant dense<0.000000e+00> : vector<2x24x24xf32>
    %77 = tpu.matmul %72, %74, %cst_28 {dimension_numbers = #tpu.dot_dimension_numbers<[2], [2], [1], [1], [0, 0, 0, 1, 1, 1], [0], [0]>} : vector<2x24x8xbf16>, vector<2x24x8xbf16>, vector<2x24x24xf32> -> vector<2x24x24xf32>
    %cst_29 = arith.constant -1.000000e+30 : f32
    "tpu.trace_stop"() : () -> ()
    %78 = vector.shape_cast %41 : vector<1x1x24xi1> to vector<1x1x24xi1>
    %79 = vector.broadcast %78 : vector<1x1x24xi1> to vector<2x24x24xi1>
    %80 = vector.broadcast %cst_29 : f32 to vector<2x24x24xf32>
    %81 = arith.select %79, %80, %77 : vector<2x24x24xi1>, vector<2x24x24xf32>
    %cst_30 = arith.constant dense<0xFF800000> : vector<2x24xf32>
    %82 = vector.multi_reduction <maximumf>, %81, %cst_30 [2] : vector<2x24x24xf32> to vector<2x24xf32>
    %83 = vector.shape_cast %82 : vector<2x24xf32> to vector<2x24x1xf32>
    %84 = vector.broadcast %83 : vector<2x24x1xf32> to vector<2x24x24xf32>
    %85 = arith.subf %81, %84 : vector<2x24x24xf32>
    %86 = math.exp %85 : vector<2x24x24xf32>
    %cst_31 = arith.constant dense<0.000000e+00> : vector<2x24xf32>
    %87 = vector.multi_reduction <add>, %86, %cst_31 [2] : vector<2x24x24xf32> to vector<2x24xf32>
    %88 = vector.shape_cast %87 : vector<2x24xf32> to vector<2x24x1xf32>
    %89 = tpu.reciprocal %88 {approx = true} : vector<2x24x1xf32> -> vector<2x24x1xf32>
    %90 = vector.broadcast %89 : vector<2x24x1xf32> to vector<2x24x24xf32>
    %91 = arith.mulf %86, %90 : vector<2x24x24xf32>
    %92 = arith.truncf %91 : vector<2x24x24xf32> to vector<2x24x24xbf16>
    "tpu.trace_start"() <{level = 10 : i32, message = "bqk,bkd->bqd"}> : () -> ()
    %cst_32 = arith.constant dense<0.000000e+00> : vector<2x24x8xf32>
    %93 = tpu.matmul %92, %76, %cst_32 {dimension_numbers = #tpu.dot_dimension_numbers<[2], [1], [1], [2], [0, 0, 0, 1, 1, 2], [0], [0]>} : vector<2x24x24xbf16>, vector<2x24x8xbf16>, vector<2x24x8xf32> -> vector<2x24x8xf32>
    "tpu.trace_stop"() : () -> ()
    %94 = vector.shape_cast %93 : vector<2x24x8xf32> to vector<48x8xf32>
    %95 = arith.truncf %94 : vector<48x8xf32> to vector<48x8xbf16>
    %96 = vector.extract_strided_slice %43 {offsets = [8, 0], sizes = [8, 32], strides = [1, 1]} : vector<32x32xbf16> to vector<8x32xbf16>
    %cst_33 = arith.constant dense<0.000000e+00> : vector<48x32xf32>
    %97 = tpu.matmul %95, %96, %cst_33 {dimension_numbers = #tpu.dot_dimension_numbers<[1], [0], [0], [1], [0, 0, 1, 1], [], []>} : vector<48x8xbf16>, vector<8x32xbf16>, vector<48x32xf32> -> vector<48x32xf32>
    %98 = arith.addf %70, %97 : vector<48x32xf32>
    %99 = vector.extract_strided_slice %38 {offsets = [0, 16], sizes = [48, 8], strides = [1, 1]} : vector<48x96xbf16> to vector<48x8xbf16>
    %100 = vector.shape_cast %99 : vector<48x8xbf16> to vector<2x24x8xbf16>
    %101 = vector.extract_strided_slice %38 {offsets = [0, 48], sizes = [48, 8], strides = [1, 1]} : vector<48x96xbf16> to vector<48x8xbf16>
    %102 = vector.shape_cast %101 : vector<48x8xbf16> to vector<2x24x8xbf16>
    %103 = vector.extract_strided_slice %38 {offsets = [0, 80], sizes = [48, 8], strides = [1, 1]} : vector<48x96xbf16> to vector<48x8xbf16>
    %104 = vector.shape_cast %103 : vector<48x8xbf16> to vector<2x24x8xbf16>
    "tpu.trace_start"() <{level = 10 : i32, message = "bqd,bkd->bqk"}> : () -> ()
    %cst_34 = arith.constant dense<0.000000e+00> : vector<2x24x24xf32>
    %105 = tpu.matmul %100, %102, %cst_34 {dimension_numbers = #tpu.dot_dimension_numbers<[2], [2], [1], [1], [0, 0, 0, 1, 1, 1], [0], [0]>} : vector<2x24x8xbf16>, vector<2x24x8xbf16>, vector<2x24x24xf32> -> vector<2x24x24xf32>
    %cst_35 = arith.constant -1.000000e+30 : f32
    "tpu.trace_stop"() : () -> ()
    %106 = vector.shape_cast %41 : vector<1x1x24xi1> to vector<1x1x24xi1>
    %107 = vector.broadcast %106 : vector<1x1x24xi1> to vector<2x24x24xi1>
    %108 = vector.broadcast %cst_35 : f32 to vector<2x24x24xf32>
    %109 = arith.select %107, %108, %105 : vector<2x24x24xi1>, vector<2x24x24xf32>
    %cst_36 = arith.constant dense<0xFF800000> : vector<2x24xf32>
    %110 = vector.multi_reduction <maximumf>, %109, %cst_36 [2] : vector<2x24x24xf32> to vector<2x24xf32>
    %111 = vector.shape_cast %110 : vector<2x24xf32> to vector<2x24x1xf32>
    %112 = vector.broadcast %111 : vector<2x24x1xf32> to vector<2x24x24xf32>
    %113 = arith.subf %109, %112 : vector<2x24x24xf32>
    %114 = math.exp %113 : vector<2x24x24xf32>
    %cst_37 = arith.constant dense<0.000000e+00> : vector<2x24xf32>
    %115 = vector.multi_reduction <add>, %114, %cst_37 [2] : vector<2x24x24xf32> to vector<2x24xf32>
    %116 = vector.shape_cast %115 : vector<2x24xf32> to vector<2x24x1xf32>
    %117 = tpu.reciprocal %116 {approx = true} : vector<2x24x1xf32> -> vector<2x24x1xf32>
    %118 = vector.broadcast %117 : vector<2x24x1xf32> to vector<2x24x24xf32>
    %119 = arith.mulf %114, %118 : vector<2x24x24xf32>
    %120 = arith.truncf %119 : vector<2x24x24xf32> to vector<2x24x24xbf16>
    "tpu.trace_start"() <{level = 10 : i32, message = "bqk,bkd->bqd"}> : () -> ()
    %cst_38 = arith.constant dense<0.000000e+00> : vector<2x24x8xf32>
    %121 = tpu.matmul %120, %104, %cst_38 {dimension_numbers = #tpu.dot_dimension_numbers<[2], [1], [1], [2], [0, 0, 0, 1, 1, 2], [0], [0]>} : vector<2x24x24xbf16>, vector<2x24x8xbf16>, vector<2x24x8xf32> -> vector<2x24x8xf32>
    "tpu.trace_stop"() : () -> ()
    %122 = vector.shape_cast %121 : vector<2x24x8xf32> to vector<48x8xf32>
    %123 = arith.truncf %122 : vector<48x8xf32> to vector<48x8xbf16>
    %124 = vector.extract_strided_slice %43 {offsets = [16, 0], sizes = [8, 32], strides = [1, 1]} : vector<32x32xbf16> to vector<8x32xbf16>
    %cst_39 = arith.constant dense<0.000000e+00> : vector<48x32xf32>
    %125 = tpu.matmul %123, %124, %cst_39 {dimension_numbers = #tpu.dot_dimension_numbers<[1], [0], [0], [1], [0, 0, 1, 1], [], []>} : vector<48x8xbf16>, vector<8x32xbf16>, vector<48x32xf32> -> vector<48x32xf32>
    %126 = arith.addf %98, %125 : vector<48x32xf32>
    %127 = vector.extract_strided_slice %38 {offsets = [0, 24], sizes = [48, 8], strides = [1, 1]} : vector<48x96xbf16> to vector<48x8xbf16>
    %128 = vector.shape_cast %127 : vector<48x8xbf16> to vector<2x24x8xbf16>
    %129 = vector.extract_strided_slice %38 {offsets = [0, 56], sizes = [48, 8], strides = [1, 1]} : vector<48x96xbf16> to vector<48x8xbf16>
    %130 = vector.shape_cast %129 : vector<48x8xbf16> to vector<2x24x8xbf16>
    %131 = vector.extract_strided_slice %38 {offsets = [0, 88], sizes = [48, 8], strides = [1, 1]} : vector<48x96xbf16> to vector<48x8xbf16>
    %132 = vector.shape_cast %131 : vector<48x8xbf16> to vector<2x24x8xbf16>
    "tpu.trace_start"() <{level = 10 : i32, message = "bqd,bkd->bqk"}> : () -> ()
    %cst_40 = arith.constant dense<0.000000e+00> : vector<2x24x24xf32>
    %133 = tpu.matmul %128, %130, %cst_40 {dimension_numbers = #tpu.dot_dimension_numbers<[2], [2], [1], [1], [0, 0, 0, 1, 1, 1], [0], [0]>} : vector<2x24x8xbf16>, vector<2x24x8xbf16>, vector<2x24x24xf32> -> vector<2x24x24xf32>
    %cst_41 = arith.constant -1.000000e+30 : f32
    "tpu.trace_stop"() : () -> ()
    %134 = vector.shape_cast %41 : vector<1x1x24xi1> to vector<1x1x24xi1>
    %135 = vector.broadcast %134 : vector<1x1x24xi1> to vector<2x24x24xi1>
    %136 = vector.broadcast %cst_41 : f32 to vector<2x24x24xf32>
    %137 = arith.select %135, %136, %133 : vector<2x24x24xi1>, vector<2x24x24xf32>
    %cst_42 = arith.constant dense<0xFF800000> : vector<2x24xf32>
    %138 = vector.multi_reduction <maximumf>, %137, %cst_42 [2] : vector<2x24x24xf32> to vector<2x24xf32>
    %139 = vector.shape_cast %138 : vector<2x24xf32> to vector<2x24x1xf32>
    %140 = vector.broadcast %139 : vector<2x24x1xf32> to vector<2x24x24xf32>
    %141 = arith.subf %137, %140 : vector<2x24x24xf32>
    %142 = math.exp %141 : vector<2x24x24xf32>
    %cst_43 = arith.constant dense<0.000000e+00> : vector<2x24xf32>
    %143 = vector.multi_reduction <add>, %142, %cst_43 [2] : vector<2x24x24xf32> to vector<2x24xf32>
    %144 = vector.shape_cast %143 : vector<2x24xf32> to vector<2x24x1xf32>
    %145 = tpu.reciprocal %144 {approx = true} : vector<2x24x1xf32> -> vector<2x24x1xf32>
    %146 = vector.broadcast %145 : vector<2x24x1xf32> to vector<2x24x24xf32>
    %147 = arith.mulf %142, %146 : vector<2x24x24xf32>
    %148 = arith.truncf %147 : vector<2x24x24xf32> to vector<2x24x24xbf16>
    "tpu.trace_start"() <{level = 10 : i32, message = "bqk,bkd->bqd"}> : () -> ()
    %cst_44 = arith.constant dense<0.000000e+00> : vector<2x24x8xf32>
    %149 = tpu.matmul %148, %132, %cst_44 {dimension_numbers = #tpu.dot_dimension_numbers<[2], [1], [1], [2], [0, 0, 0, 1, 1, 2], [0], [0]>} : vector<2x24x24xbf16>, vector<2x24x8xbf16>, vector<2x24x8xf32> -> vector<2x24x8xf32>
    "tpu.trace_stop"() : () -> ()
    %150 = vector.shape_cast %149 : vector<2x24x8xf32> to vector<48x8xf32>
    %151 = arith.truncf %150 : vector<48x8xf32> to vector<48x8xbf16>
    %152 = vector.extract_strided_slice %43 {offsets = [24, 0], sizes = [8, 32], strides = [1, 1]} : vector<32x32xbf16> to vector<8x32xbf16>
    %cst_45 = arith.constant dense<0.000000e+00> : vector<48x32xf32>
    %153 = tpu.matmul %151, %152, %cst_45 {dimension_numbers = #tpu.dot_dimension_numbers<[1], [0], [0], [1], [0, 0, 1, 1], [], []>} : vector<48x8xbf16>, vector<8x32xbf16>, vector<48x32xf32> -> vector<48x32xf32>
    %154 = arith.addf %126, %153 : vector<48x32xf32>
    %c0_46 = arith.constant 0 : index
    %c0_47 = arith.constant 0 : index
    %c0_48 = arith.constant 0 : index
    %155 = vector.load %arg10[%c0_46, %c0_47, %c0_48] : memref<1x1x32xf32, #tpu.memory_space<vmem>>, vector<1x1x32xf32>
    %156 = vector.shape_cast %155 : vector<1x1x32xf32> to vector<1x32xf32>
    %157 = vector.broadcast %156 : vector<1x32xf32> to vector<48x32xf32>
    %158 = arith.addf %154, %157 : vector<48x32xf32>
    %159 = arith.addf %3, %158 : vector<48x32xf32>
    %c0_49 = arith.constant 0 : index
    %c0_50 = arith.constant 0 : index
    %c0_51 = arith.constant 0 : index
    %160 = vector.load %arg11[%c0_49, %c0_50, %c0_51] : memref<1x1x32xf32, #tpu.memory_space<vmem>>, vector<1x1x32xf32>
    %161 = vector.shape_cast %160 : vector<1x1x32xf32> to vector<1x32xf32>
    %c0_52 = arith.constant 0 : index
    %c0_53 = arith.constant 0 : index
    %c0_54 = arith.constant 0 : index
    %162 = vector.load %arg12[%c0_52, %c0_53, %c0_54] : memref<1x1x32xf32, #tpu.memory_space<vmem>>, vector<1x1x32xf32>
    %163 = vector.shape_cast %162 : vector<1x1x32xf32> to vector<1x32xf32>
    %cst_55 = arith.constant dense<0.000000e+00> : vector<48xf32>
    %164 = vector.multi_reduction <add>, %159, %cst_55 [1] : vector<48x32xf32> to vector<48xf32>
    %165 = vector.shape_cast %164 : vector<48xf32> to vector<48x1xf32>
    %cst_56 = arith.constant 3.200000e+01 : f32
    %166 = vector.broadcast %cst_56 : f32 to vector<48x1xf32>
    %167 = arith.divf %165, %166 : vector<48x1xf32>
    %168 = vector.broadcast %167 : vector<48x1xf32> to vector<48x32xf32>
    %169 = arith.subf %159, %168 : vector<48x32xf32>
    %170 = arith.mulf %169, %169 : vector<48x32xf32>
    %cst_57 = arith.constant dense<0.000000e+00> : vector<48xf32>
    %171 = vector.multi_reduction <add>, %170, %cst_57 [1] : vector<48x32xf32> to vector<48xf32>
    %172 = vector.shape_cast %171 : vector<48xf32> to vector<48x1xf32>
    %cst_58 = arith.constant 3.200000e+01 : f32
    %173 = vector.broadcast %cst_58 : f32 to vector<48x1xf32>
    %174 = arith.divf %172, %173 : vector<48x1xf32>
    %175 = vector.broadcast %167 : vector<48x1xf32> to vector<48x32xf32>
    %176 = arith.subf %159, %175 : vector<48x32xf32>
    %cst_59 = arith.constant 9.99999974E-6 : f32
    %177 = vector.broadcast %cst_59 : f32 to vector<48x1xf32>
    %178 = arith.addf %174, %177 : vector<48x1xf32>
    %179 = math.rsqrt %178 : vector<48x1xf32>
    %180 = vector.broadcast %179 : vector<48x1xf32> to vector<48x32xf32>
    %181 = arith.mulf %176, %180 : vector<48x32xf32>
    %182 = vector.broadcast %161 : vector<1x32xf32> to vector<48x32xf32>
    %183 = arith.mulf %181, %182 : vector<48x32xf32>
    %184 = vector.broadcast %163 : vector<1x32xf32> to vector<48x32xf32>
    %185 = arith.addf %183, %184 : vector<48x32xf32>
    %c0_60 = arith.constant 0 : index
    %c0_61 = arith.constant 0 : index
    %c0_62 = arith.constant 0 : index
    %186 = vector.load %arg13[%c0_60, %c0_61, %c0_62] : memref<1x32x64xbf16, #tpu.memory_space<vmem>>, vector<1x32x64xbf16>
    %187 = vector.shape_cast %186 : vector<1x32x64xbf16> to vector<32x64xbf16>
    %c0_63 = arith.constant 0 : index
    %c0_64 = arith.constant 0 : index
    %c0_65 = arith.constant 0 : index
    %188 = vector.load %arg14[%c0_63, %c0_64, %c0_65] : memref<1x1x64xf32, #tpu.memory_space<vmem>>, vector<1x1x64xf32>
    %189 = vector.shape_cast %188 : vector<1x1x64xf32> to vector<1x64xf32>
    %190 = arith.truncf %185 : vector<48x32xf32> to vector<48x32xbf16>
    %cst_66 = arith.constant dense<0.000000e+00> : vector<48x64xf32>
    %191 = tpu.matmul %190, %187, %cst_66 {dimension_numbers = #tpu.dot_dimension_numbers<[1], [0], [0], [1], [0, 0, 1, 1], [], []>} : vector<48x32xbf16>, vector<32x64xbf16>, vector<48x64xf32> -> vector<48x64xf32>
    %192 = vector.broadcast %189 : vector<1x64xf32> to vector<48x64xf32>
    %193 = arith.addf %191, %192 : vector<48x64xf32>
    %194 = arith.mulf %193, %193 : vector<48x64xf32>
    %195 = arith.mulf %193, %194 : vector<48x64xf32>
    %cst_67 = arith.constant 4.471500e-02 : f32
    %196 = vector.broadcast %cst_67 : f32 to vector<48x64xf32>
    %197 = arith.mulf %196, %195 : vector<48x64xf32>
    %198 = arith.addf %193, %197 : vector<48x64xf32>
    %cst_68 = arith.constant 0.797884583 : f32
    %199 = vector.broadcast %cst_68 : f32 to vector<48x64xf32>
    %200 = arith.mulf %199, %198 : vector<48x64xf32>
    %201 = math.tanh %200 : vector<48x64xf32>
    %cst_69 = arith.constant 1.000000e+00 : f32
    %202 = vector.broadcast %cst_69 : f32 to vector<48x64xf32>
    %203 = arith.addf %202, %201 : vector<48x64xf32>
    %cst_70 = arith.constant 5.000000e-01 : f32
    %204 = vector.broadcast %cst_70 : f32 to vector<48x64xf32>
    %205 = arith.mulf %204, %203 : vector<48x64xf32>
    %206 = arith.mulf %193, %205 : vector<48x64xf32>
    %c0_71 = arith.constant 0 : index
    %c0_72 = arith.constant 0 : index
    %c0_73 = arith.constant 0 : index
    %207 = vector.load %arg15[%c0_71, %c0_72, %c0_73] : memref<1x64x48xbf16, #tpu.memory_space<vmem>>, vector<1x64x48xbf16>
    %208 = vector.shape_cast %207 : vector<1x64x48xbf16> to vector<64x48xbf16>
    %c0_74 = arith.constant 0 : index
    %c0_75 = arith.constant 0 : index
    %c0_76 = arith.constant 0 : index
    %209 = vector.load %arg16[%c0_74, %c0_75, %c0_76] : memref<1x1x48xf32, #tpu.memory_space<vmem>>, vector<1x1x48xf32>
    %210 = vector.shape_cast %209 : vector<1x1x48xf32> to vector<1x48xf32>
    %211 = arith.truncf %206 : vector<48x64xf32> to vector<48x64xbf16>
    %cst_77 = arith.constant dense<0.000000e+00> : vector<48x48xf32>
    %212 = tpu.matmul %211, %208, %cst_77 {dimension_numbers = #tpu.dot_dimension_numbers<[1], [0], [0], [1], [0, 0, 1, 1], [], []>} : vector<48x64xbf16>, vector<64x48xbf16>, vector<48x48xf32> -> vector<48x48xf32>
    %213 = vector.broadcast %210 : vector<1x48xf32> to vector<48x48xf32>
    %214 = arith.addf %212, %213 : vector<48x48xf32>
    %215 = arith.mulf %214, %214 : vector<48x48xf32>
    %216 = arith.mulf %214, %215 : vector<48x48xf32>
    %cst_78 = arith.constant 4.471500e-02 : f32
    %217 = vector.broadcast %cst_78 : f32 to vector<48x48xf32>
    %218 = arith.mulf %217, %216 : vector<48x48xf32>
    %219 = arith.addf %214, %218 : vector<48x48xf32>
    %cst_79 = arith.constant 0.797884583 : f32
    %220 = vector.broadcast %cst_79 : f32 to vector<48x48xf32>
    %221 = arith.mulf %220, %219 : vector<48x48xf32>
    %222 = math.tanh %221 : vector<48x48xf32>
    %cst_80 = arith.constant 1.000000e+00 : f32
    %223 = vector.broadcast %cst_80 : f32 to vector<48x48xf32>
    %224 = arith.addf %223, %222 : vector<48x48xf32>
    %cst_81 = arith.constant 5.000000e-01 : f32
    %225 = vector.broadcast %cst_81 : f32 to vector<48x48xf32>
    %226 = arith.mulf %225, %224 : vector<48x48xf32>
    %227 = arith.mulf %214, %226 : vector<48x48xf32>
    %c0_82 = arith.constant 0 : index
    %c0_83 = arith.constant 0 : index
    %c0_84 = arith.constant 0 : index
    %228 = vector.load %arg17[%c0_82, %c0_83, %c0_84] : memref<1x48x32xbf16, #tpu.memory_space<vmem>>, vector<1x48x32xbf16>
    %229 = vector.shape_cast %228 : vector<1x48x32xbf16> to vector<48x32xbf16>
    %c0_85 = arith.constant 0 : index
    %c0_86 = arith.constant 0 : index
    %c0_87 = arith.constant 0 : index
    %230 = vector.load %arg18[%c0_85, %c0_86, %c0_87] : memref<1x1x32xf32, #tpu.memory_space<vmem>>, vector<1x1x32xf32>
    %231 = vector.shape_cast %230 : vector<1x1x32xf32> to vector<1x32xf32>
    %232 = arith.truncf %227 : vector<48x48xf32> to vector<48x48xbf16>
    %cst_88 = arith.constant dense<0.000000e+00> : vector<48x32xf32>
    %233 = tpu.matmul %232, %229, %cst_88 {dimension_numbers = #tpu.dot_dimension_numbers<[1], [0], [0], [1], [0, 0, 1, 1], [], []>} : vector<48x48xbf16>, vector<48x32xbf16>, vector<48x32xf32> -> vector<48x32xf32>
    %234 = vector.broadcast %231 : vector<1x32xf32> to vector<48x32xf32>
    %235 = arith.addf %233, %234 : vector<48x32xf32>
    %236 = arith.addf %159, %235 : vector<48x32xf32>
    %c0_89 = arith.constant 0 : index
    %c0_90 = arith.constant 0 : index
    %237 = vector.load %arg22[%c0_89, %c0_90] : memref<48x32xf32, #tpu.memory_space<vmem>>, vector<48x32xf32>
    tpu.vector_store %arg22[%c0_89, %c0_90], %236 {strides = array<i32>} : memref<48x32xf32, #tpu.memory_space<vmem>>, vector<48x32xf32>,
    %238 = vector.shape_cast %236 : vector<48x32xf32> to vector<2x24x32xf32>
    %239 = vector.extract_strided_slice %238 {offsets = [0, 0, 0], sizes = [2, 1, 32], strides = [1, 1, 1]} : vector<2x24x32xf32> to vector<2x1x32xf32>
    %240 = vector.shape_cast %239 : vector<2x1x32xf32> to vector<2x32xf32>
    %241 = vector.shape_cast %159 : vector<48x32xf32> to vector<2x24x32xf32>
    %242 = vector.extract_strided_slice %241 {offsets = [0, 0, 0], sizes = [2, 1, 32], strides = [1, 1, 1]} : vector<2x24x32xf32> to vector<2x1x32xf32>
    %243 = vector.shape_cast %242 : vector<2x1x32xf32> to vector<2x32xf32>
    %244 = arith.truncf %240 : vector<2x32xf32> to vector<2x32xbf16>
    %c0_91 = arith.constant 0 : index
    %c0_92 = arith.constant 0 : index
    %c0_93 = arith.constant 0 : index
    %245 = vector.load %arg19[%c0_91, %c0_92, %c0_93] : memref<1x32x64xbf16, #tpu.memory_space<vmem>>, vector<1x32x64xbf16>
    %246 = vector.shape_cast %245 : vector<1x32x64xbf16> to vector<32x64xbf16>
    %cst_94 = arith.constant dense<0.000000e+00> : vector<2x64xf32>
    %247 = tpu.matmul %244, %246, %cst_94 {dimension_numbers = #tpu.dot_dimension_numbers<[1], [0], [0], [1], [0, 0, 1, 1], [], []>} : vector<2x32xbf16>, vector<32x64xbf16>, vector<2x64xf32> -> vector<2x64xf32>
    %c0_95 = arith.constant 0 : index
    %c0_96 = arith.constant 0 : index
    %c0_97 = arith.constant 0 : index
    %248 = vector.load %arg20[%c0_95, %c0_96, %c0_97] : memref<1x1x64xf32, #tpu.memory_space<vmem>>, vector<1x1x64xf32>
    %249 = vector.shape_cast %248 : vector<1x1x64xf32> to vector<1x64xf32>
    %250 = vector.broadcast %249 : vector<1x64xf32> to vector<2x64xf32>
    %251 = arith.addf %247, %250 : vector<2x64xf32>
    %cst_98 = arith.constant 0.000000e+00 : f32
    %252 = vector.broadcast %cst_98 : f32 to vector<2x32xf32>
    %253 = tpu.concatenate %251, %243, %252 in 1 : vector<2x64xf32>, vector<2x32xf32>, vector<2x32xf32> -> vector<2x128xf32>
    %c0_99 = arith.constant 0 : index
    %c0_100 = arith.constant 0 : index
    %c0_101 = arith.constant 0 : index
    %c0_102 = arith.constant 0 : index
    %254 = vector.load %arg21[%c0_99, %c0_100, %c0_101, %c0_102] : memref<1x1x2x128xf32, #tpu.memory_space<vmem>>, vector<1x1x2x128xf32>
    %255 = vector.shape_cast %254 : vector<1x1x2x128xf32> to vector<2x128xf32>
    %256 = vector.shape_cast %253 : vector<2x128xf32> to vector<1x1x2x128xf32>
    tpu.vector_store %arg21[%c0_99, %c0_100, %c0_101, %c0_102], %256 {strides = array<i32>} : memref<1x1x2x128xf32, #tpu.memory_space<vmem>>, vector<1x1x2x128xf32>,
    return
  }
  func.func @transform_1(%arg0: i32, %arg1: i32) -> (i32, i32) {
    %c0_i32 = arith.constant 0 : i32
    %c0_i32_0 = arith.constant 0 : i32
    %c0_i32_1 = arith.constant 0 : i32
    return %c0_i32, %c0_i32_0 : i32, i32
  }
  func.func @transform_3(%arg0: i32, %arg1: i32) -> (i32, i32, i32) {
    %c0_i32 = arith.constant 0 : i32
    %c0_i32_0 = arith.constant 0 : i32
    %c0_i32_1 = arith.constant 0 : i32
    return %arg1, %c0_i32, %c0_i32_0 : i32, i32, i32
  }
  func.func @transform_4(%arg0: i32, %arg1: i32) -> (i32, i32, i32) {
    %c0_i32 = arith.constant 0 : i32
    %c0_i32_0 = arith.constant 0 : i32
    %c0_i32_1 = arith.constant 0 : i32
    return %arg1, %c0_i32, %c0_i32_0 : i32, i32, i32
  }
  func.func @transform_5(%arg0: i32, %arg1: i32) -> (i32, i32, i32) {
    %c0_i32 = arith.constant 0 : i32
    %c0_i32_0 = arith.constant 0 : i32
    %c0_i32_1 = arith.constant 0 : i32
    return %arg1, %c0_i32, %c0_i32_0 : i32, i32, i32
  }
  func.func @transform_6(%arg0: i32, %arg1: i32) -> (i32, i32, i32) {
    %c0_i32 = arith.constant 0 : i32
    %c0_i32_0 = arith.constant 0 : i32
    %c0_i32_1 = arith.constant 0 : i32
    return %arg1, %c0_i32, %c0_i32_0 : i32, i32, i32
  }
  func.func @transform_7(%arg0: i32, %arg1: i32) -> (i32, i32, i32) {
    %c0_i32 = arith.constant 0 : i32
    %c0_i32_0 = arith.constant 0 : i32
    %c0_i32_1 = arith.constant 0 : i32
    return %arg1, %c0_i32, %c0_i32_0 : i32, i32, i32
  }
  func.func @transform_8(%arg0: i32, %arg1: i32) -> (i32, i32, i32) {
    %c0_i32 = arith.constant 0 : i32
    %c0_i32_0 = arith.constant 0 : i32
    %c0_i32_1 = arith.constant 0 : i32
    return %arg1, %c0_i32, %c0_i32_0 : i32, i32, i32
  }
  func.func @transform_9(%arg0: i32, %arg1: i32) -> (i32, i32, i32) {
    %c0_i32 = arith.constant 0 : i32
    %c0_i32_0 = arith.constant 0 : i32
    %c0_i32_1 = arith.constant 0 : i32
    return %arg1, %c0_i32, %c0_i32_0 : i32, i32, i32
  }
  func.func @transform_10(%arg0: i32, %arg1: i32) -> (i32, i32, i32) {
    %c0_i32 = arith.constant 0 : i32
    %c0_i32_0 = arith.constant 0 : i32
    %c0_i32_1 = arith.constant 0 : i32
    return %arg1, %c0_i32, %c0_i32_0 : i32, i32, i32
  }
  func.func @transform_11(%arg0: i32, %arg1: i32) -> (i32, i32, i32) {
    %c0_i32 = arith.constant 0 : i32
    %c0_i32_0 = arith.constant 0 : i32
    %c0_i32_1 = arith.constant 0 : i32
    return %arg1, %c0_i32, %c0_i32_0 : i32, i32, i32
  }
  func.func @transform_12(%arg0: i32, %arg1: i32) -> (i32, i32, i32) {
    %c0_i32 = arith.constant 0 : i32
    %c0_i32_0 = arith.constant 0 : i32
    %c0_i32_1 = arith.constant 0 : i32
    return %arg1, %c0_i32, %c0_i32_0 : i32, i32, i32
  }
  func.func @transform_13(%arg0: i32, %arg1: i32) -> (i32, i32, i32) {
    %c0_i32 = arith.constant 0 : i32
    %c0_i32_0 = arith.constant 0 : i32
    %c0_i32_1 = arith.constant 0 : i32
    return %arg1, %c0_i32, %c0_i32_0 : i32, i32, i32
  }
  func.func @transform_14(%arg0: i32, %arg1: i32) -> (i32, i32, i32) {
    %c0_i32 = arith.constant 0 : i32
    %c0_i32_0 = arith.constant 0 : i32
    %c0_i32_1 = arith.constant 0 : i32
    return %arg1, %c0_i32, %c0_i32_0 : i32, i32, i32
  }
  func.func @transform_15(%arg0: i32, %arg1: i32) -> (i32, i32, i32) {
    %c0_i32 = arith.constant 0 : i32
    %c0_i32_0 = arith.constant 0 : i32
    %c0_i32_1 = arith.constant 0 : i32
    return %arg1, %c0_i32, %c0_i32_0 : i32, i32, i32
  }
  func.func @transform_16(%arg0: i32, %arg1: i32) -> (i32, i32, i32) {
    %c0_i32 = arith.constant 0 : i32
    %c0_i32_0 = arith.constant 0 : i32
    %c0_i32_1 = arith.constant 0 : i32
    return %arg1, %c0_i32, %c0_i32_0 : i32, i32, i32
  }
  func.func @transform_17(%arg0: i32, %arg1: i32) -> (i32, i32, i32) {
    %c0_i32 = arith.constant 0 : i32
    %c0_i32_0 = arith.constant 0 : i32
    %c0_i32_1 = arith.constant 0 : i32
    return %arg1, %c0_i32, %c0_i32_0 : i32, i32, i32
  }
  func.func @transform_18(%arg0: i32, %arg1: i32) -> (i32, i32, i32) {
    %c0_i32 = arith.constant 0 : i32
    %c0_i32_0 = arith.constant 0 : i32
    %c0_i32_1 = arith.constant 0 : i32
    return %arg1, %c0_i32, %c0_i32_0 : i32, i32, i32
  }
  func.func @transform_19(%arg0: i32, %arg1: i32) -> (i32, i32, i32, i32) {
    %c0_i32 = arith.constant 0 : i32
    %c0_i32_0 = arith.constant 0 : i32
    %c0_i32_1 = arith.constant 0 : i32
    return %arg1, %arg0, %c0_i32, %c0_i32_0 : i32, i32, i32, i32
  }
}

</mosaic_0001>

<llo_original>
// kernel: vit_forward.1
$region0: #{vit_forward.1}
  #allocation0 [shape = 'u32[]', space=smem, size = 0x4, offset = 0x4, fixed_abs, tag = 'smem constant byte address 0x4 - core index']
  #allocation1 [shape = 'u32[144,128]{1,0:T(1,128)}', space=vmem, size = 0x12000, scoped, tag = 'internal scratch']
  #allocation2 [shape = 'f32[48,32]{1,0:T(8,128)}', space=vmem, size = 0x6000, scoped, tag = 'scratch operand']
  #allocation6 [shape = 's32[]', space=sflag, size = 0x4, offset = 0, fixed_abs, tag = 'sflag constant byte address 0x0 - dummy sync flag']
  #allocation7 [shape = 's32[]', space=sflag, size = 0x4, offset = 0, fixed_abs, tag = 'sflag constant byte address 0x0 - dummy sync flag']
  %s0 = inlined_call_operand.vmem [shape: bf16[1,48,128], index: 0, kind: input, shape index: {}]
  %s1 = inlined_call_operand.vmem [shape: f32[24,32], index: 1, kind: input, shape index: {}]
  %s2 = inlined_call_operand.vmem [shape: bf16[128,32], index: 2, kind: input, shape index: {}]
  %s3 = inlined_call_operand.vmem [shape: f32[2,1,32], index: 3, kind: input, shape index: {}]
  %s4 = inlined_call_operand.vmem [shape: f32[2,1,32], index: 4, kind: input, shape index: {}]
  %s5 = inlined_call_operand.vmem [shape: bf16[2,32,96], index: 5, kind: input, shape index: {}]
  %s6 = inlined_call_operand.vmem [shape: f32[2,1,96], index: 6, kind: input, shape index: {}]
  %s7 = inlined_call_operand.vmem [shape: bf16[2,32,32], index: 7, kind: input, shape index: {}]
  %s8 = inlined_call_operand.vmem [shape: f32[2,1,32], index: 8, kind: input, shape index: {}]
  %s9 = inlined_call_operand.vmem [shape: f32[2,1,32], index: 9, kind: input, shape index: {}]
  %s10 = inlined_call_operand.vmem [shape: f32[2,1,32], index: 10, kind: input, shape index: {}]
  %s11 = inlined_call_operand.vmem [shape: bf16[2,32,64], index: 11, kind: input, shape index: {}]
  %s12 = inlined_call_operand.vmem [shape: f32[2,1,64], index: 12, kind: input, shape index: {}]
  %s13 = inlined_call_operand.vmem [shape: bf16[2,64,48], index: 13, kind: input, shape index: {}]
  %s14 = inlined_call_operand.vmem [shape: f32[2,1,48], index: 14, kind: input, shape index: {}]
  %s15 = inlined_call_operand.vmem [shape: bf16[2,48,32], index: 15, kind: input, shape index: {}]
  %s16 = inlined_call_operand.vmem [shape: f32[2,1,32], index: 16, kind: input, shape index: {}]
  %s17 = inlined_call_operand.vmem [shape: bf16[2,32,64], index: 17, kind: input, shape index: {}]
  %s18 = inlined_call_operand.vmem [shape: f32[2,1,64], index: 18, kind: input, shape index: {}]
  %s19 = inlined_call_operand.vmem [shape: f32[2,1,2,128], index: 19, kind: output, shape index: {}]
  %s20 = sld [smem:[#allocation0]]
  $region174: #{vit_forward.1} parent=0
    _
  %s22 = ssub.s32 1, %s20
  %s23 = scalar_select 0, %s22, %s20
  loop: start=0, step=1, limit=4
  $region2: #{vit_forward.1} parent=0 // loop_pre_header
    _
  $region3: #{vit_forward.1} parent=0 // loop_header
    %s25 = sphi 0, %s29
    %p26 = scmp.ge.s32.totalorder %s25, 4
    %s32 = sphi 0, %s44
    %s33 = sphi 0, %s40
    %s34 = sphi 0, %s32
    %s35 = sphi 0, %s33
    %s36 = sphi 0, %s34
    %s37 = sphi 0, %s35
    %s45 = sphi 0, %s45
    %s47 = sphi 0, %s45
    %s48 = sphi 0, %s47
    %s62 = sphi 0, %s48
    %s68 = sphi 0, %s70
    %s71 = sphi 0, %s68
    %s72 = sphi 0, %s71
    %s88 = sphi 0, %s72
    %s94 = sphi 0, %s96
    %s97 = sphi 0, %s94
    %s98 = sphi 0, %s97
    %s114 = sphi 0, %s98
    %s120 = sphi 0, %s122
    %s123 = sphi 0, %s120
    %s124 = sphi 0, %s123
    %s140 = sphi 0, %s124
    %s146 = sphi 0, %s148
    %s149 = sphi 0, %s146
    %s150 = sphi 0, %s149
    %s166 = sphi 0, %s150
    %s172 = sphi 0, %s174
    %s175 = sphi 0, %s172
    %s176 = sphi 0, %s175
    %s192 = sphi 0, %s176
    %s198 = sphi 0, %s200
    %s201 = sphi 0, %s198
    %s202 = sphi 0, %s201
    %s218 = sphi 0, %s202
    %s224 = sphi 0, %s226
    %s227 = sphi 0, %s224
    %s228 = sphi 0, %s227
    %s244 = sphi 0, %s228
    %s250 = sphi 0, %s252
    %s253 = sphi 0, %s250
    %s254 = sphi 0, %s253
    %s270 = sphi 0, %s254
    %s276 = sphi 0, %s278
    %s279 = sphi 0, %s276
    %s280 = sphi 0, %s279
    %s296 = sphi 0, %s280
    %s302 = sphi 0, %s304
    %s305 = sphi 0, %s302
    %s306 = sphi 0, %s305
    %s322 = sphi 0, %s306
    %s328 = sphi 0, %s330
    %s331 = sphi 0, %s328
    %s332 = sphi 0, %s331
    %s348 = sphi 0, %s332
    %s354 = sphi 0, %s356
    %s357 = sphi 0, %s354
    %s358 = sphi 0, %s357
    %s374 = sphi 0, %s358
    %s380 = sphi 0, %s382
    %s383 = sphi 0, %s380
    %s384 = sphi 0, %s383
    %s400 = sphi 0, %s384
    %s406 = sphi 0, %s408
    %s409 = sphi 0, %s406
    %s410 = sphi 0, %s409
    %s426 = sphi 0, %s410
    %s432 = sphi 0, %s434
    %s435 = sphi 0, %s432
    %s436 = sphi 0, %s435
    %s452 = sphi 0, %s436
    %s458 = sphi 0, %s460
    %s461 = sphi 0, %s458
    %s462 = sphi 0, %s461
    %s478 = sphi 0, %s462
    %s486 = sphi 0, %s488
    %s489 = sphi 0, %s486
    %s490 = sphi 0, %s489
    %s506 = sphi 0, %s490
  $region4: #{vit_forward.1} parent=0 // loop_header_branch
    %28 = sbr.rel (%p26) target = $region8
  $region5: #{vit_forward.1} parent=0 // loop_body
    %s30 = ssub.s32 %s25, 1
    %s31 = ssub.s32 %s25, 2
    %s38 = sadd.s32 1, %s33
    %p39 = scmp.ge.s32.totalorder %s38, 2
    %s40 = scalar_select %p39, 0, %s38
    %s41 = sadd.s32 1, %s32
    %s42 = scalar_select %p39, %s41, %s32
    %p43 = scmp.ge.s32.totalorder %s42, 1
    %s44 = scalar_select %p43, 0, %s42
    %s46 = sadd.s32 %s45, 1
    %p49 = scmp.eq.s32.totalorder %s25, 1
    %p50 = scmp.ne.s32.totalorder %s45, %s47
    %p51 = scmp.eq.s32.totalorder %s25, 0
    %p52 = por %p50, %p51
    %p53 = scmp.ne.s32.totalorder %s45, %s47
    %p54 = scmp.eq.s32.totalorder %s30, 1
    %p55 = por %p53, %p54
    %p56 = scmp.ne.s32.totalorder %s47, %s48
    %p57 = scmp.eq.s32.totalorder %s30, 0
    %p58 = por %p56, %p57
    %p59 = scmp.ne.s32.totalorder %s47, %s48
    %p60 = scmp.eq.s32.totalorder %s31, 1
    %p61 = por %p59, %p60
    %p63 = scmp.ne.s32.totalorder %s48, %s62
    %p64 = scmp.eq.s32.totalorder %s31, 0
    %p65 = por %p63, %p64
    %s66 = ssub.s32 %s33, %s40
    %p67 = scmp.eq.s32.totalorder %s66, 0
    %s69 = sadd.s32 %s68, 1
    %s70 = scalar_select %p67, %s68, %s69
    %p73 = pneg %p67
    %p74 = scmp.eq.s32.totalorder %s25, 1
    %p75 = por %p73, %p74
    %p76 = scmp.ne.s32.totalorder %s68, %s71
    %p77 = scmp.eq.s32.totalorder %s25, 0
    %p78 = por %p76, %p77
    %p79 = scmp.ne.s32.totalorder %s68, %s71
    %p80 = scmp.eq.s32.totalorder %s30, 1
    %p81 = por %p79, %p80
    %p82 = scmp.ne.s32.totalorder %s71, %s72
    %p83 = scmp.eq.s32.totalorder %s30, 0
    %p84 = por %p82, %p83
    %p85 = scmp.ne.s32.totalorder %s71, %s72
    %p86 = scmp.eq.s32.totalorder %s31, 1
    %p87 = por %p85, %p86
    %p89 = scmp.ne.s32.totalorder %s72, %s88
    %p90 = scmp.eq.s32.totalorder %s31, 0
    %p91 = por %p89, %p90
    %s92 = ssub.s32 %s33, %s40
    %p93 = scmp.eq.s32.totalorder %s92, 0
    %s95 = sadd.s32 %s94, 1
    %s96 = scalar_select %p93, %s94, %s95
    %p99 = pneg %p93
    %p100 = scmp.eq.s32.totalorder %s25, 1
    %p101 = por %p99, %p100
    %p102 = scmp.ne.s32.totalorder %s94, %s97
    %p103 = scmp.eq.s32.totalorder %s25, 0
    %p104 = por %p102, %p103
    %p105 = scmp.ne.s32.totalorder %s94, %s97
    %p106 = scmp.eq.s32.totalorder %s30, 1
    %p107 = por %p105, %p106
    %p108 = scmp.ne.s32.totalorder %s97, %s98
    %p109 = scmp.eq.s32.totalorder %s30, 0
    %p110 = por %p108, %p109
    %p111 = scmp.ne.s32.totalorder %s97, %s98
    %p112 = scmp.eq.s32.totalorder %s31, 1
    %p113 = por %p111, %p112
    %p115 = scmp.ne.s32.totalorder %s98, %s114
    %p116 = scmp.eq.s32.totalorder %s31, 0
    %p117 = por %p115, %p116
    %s118 = ssub.s32 %s33, %s40
    %p119 = scmp.eq.s32.totalorder %s118, 0
    %s121 = sadd.s32 %s120, 1
    %s122 = scalar_select %p119, %s120, %s121
    %p125 = pneg %p119
    %p126 = scmp.eq.s32.totalorder %s25, 1
    %p127 = por %p125, %p126
    %p128 = scmp.ne.s32.totalorder %s120, %s123
    %p129 = scmp.eq.s32.totalorder %s25, 0
    %p130 = por %p128, %p129
    %p131 = scmp.ne.s32.totalorder %s120, %s123
    %p132 = scmp.eq.s32.totalorder %s30, 1
    %p133 = por %p131, %p132
    %p134 = scmp.ne.s32.totalorder %s123, %s124
    %p135 = scmp.eq.s32.totalorder %s30, 0
    %p136 = por %p134, %p135
    %p137 = scmp.ne.s32.totalorder %s123, %s124
    %p138 = scmp.eq.s32.totalorder %s31, 1
    %p139 = por %p137, %p138
    %p141 = scmp.ne.s32.totalorder %s124, %s140
    %p142 = scmp.eq.s32.totalorder %s31, 0
    %p143 = por %p141, %p142
    %s144 = ssub.s32 %s33, %s40
    %p145 = scmp.eq.s32.totalorder %s144, 0
    %s147 = sadd.s32 %s146, 1
    %s148 = scalar_select %p145, %s146, %s147
    %p151 = pneg %p145
    %p152 = scmp.eq.s32.totalorder %s25, 1
    %p153 = por %p151, %p152
    %p154 = scmp.ne.s32.totalorder %s146, %s149
    %p155 = scmp.eq.s32.totalorder %s25, 0
    %p156 = por %p154, %p155
    %p157 = scmp.ne.s32.totalorder %s146, %s149
    %p158 = scmp.eq.s32.totalorder %s30, 1
    %p159 = por %p157, %p158
    %p160 = scmp.ne.s32.totalorder %s149, %s150
    %p161 = scmp.eq.s32.totalorder %s30, 0
    %p162 = por %p160, %p161
    %p163 = scmp.ne.s32.totalorder %s149, %s150
    %p164 = scmp.eq.s32.totalorder %s31, 1
    %p165 = por %p163, %p164
    %p167 = scmp.ne.s32.totalorder %s150, %s166
    %p168 = scmp.eq.s32.totalorder %s31, 0
    %p169 = por %p167, %p168
    %s170 = ssub.s32 %s33, %s40
    %p171 = scmp.eq.s32.totalorder %s170, 0
    %s173 = sadd.s32 %s172, 1
    %s174 = scalar_select %p171, %s172, %s173
    %p177 = pneg %p171
    %p178 = scmp.eq.s32.totalorder %s25, 1
    %p179 = por %p177, %p178
    %p180 = scmp.ne.s32.totalorder %s172, %s175
    %p181 = scmp.eq.s32.totalorder %s25, 0
    %p182 = por %p180, %p181
    %p183 = scmp.ne.s32.totalorder %s172, %s175
    %p184 = scmp.eq.s32.totalorder %s30, 1
    %p185 = por %p183, %p184
    %p186 = scmp.ne.s32.totalorder %s175, %s176
    %p187 = scmp.eq.s32.totalorder %s30, 0
    %p188 = por %p186, %p187
    %p189 = scmp.ne.s32.totalorder %s175, %s176
    %p190 = scmp.eq.s32.totalorder %s31, 1
    %p191 = por %p189, %p190
    %p193 = scmp.ne.s32.totalorder %s176, %s192
    %p194 = scmp.eq.s32.totalorder %s31, 0
    %p195 = por %p193, %p194
    %s196 = ssub.s32 %s33, %s40
    %p197 = scmp.eq.s32.totalorder %s196, 0
    %s199 = sadd.s32 %s198, 1
    %s200 = scalar_select %p197, %s198, %s199
    %p203 = pneg %p197
    %p204 = scmp.eq.s32.totalorder %s25, 1
    %p205 = por %p203, %p204
    %p206 = scmp.ne.s32.totalorder %s198, %s201
    %p207 = scmp.eq.s32.totalorder %s25, 0
    %p208 = por %p206, %p207
    %p209 = scmp.ne.s32.totalorder %s198, %s201
    %p210 = scmp.eq.s32.totalorder %s30, 1
    %p211 = por %p209, %p210
    %p212 = scmp.ne.s32.totalorder %s201, %s202
    %p213 = scmp.eq.s32.totalorder %s30, 0
    %p214 = por %p212, %p213
    %p215 = scmp.ne.s32.totalorder %s201, %s202
    %p216 = scmp.eq.s32.totalorder %s31, 1
    %p217 = por %p215, %p216
    %p219 = scmp.ne.s32.totalorder %s202, %s218
    %p220 = scmp.eq.s32.totalorder %s31, 0
    %p221 = por %p219, %p220
    %s222 = ssub.s32 %s33, %s40
    %p223 = scmp.eq.s32.totalorder %s222, 0
    %s225 = sadd.s32 %s224, 1
    %s226 = scalar_select %p223, %s224, %s225
    %p229 = pneg %p223
    %p230 = scmp.eq.s32.totalorder %s25, 1
    %p231 = por %p229, %p230
    %p232 = scmp.ne.s32.totalorder %s224, %s227
    %p233 = scmp.eq.s32.totalorder %s25, 0
    %p234 = por %p232, %p233
    %p235 = scmp.ne.s32.totalorder %s224, %s227
    %p236 = scmp.eq.s32.totalorder %s30, 1
    %p237 = por %p235, %p236
    %p238 = scmp.ne.s32.totalorder %s227, %s228
    %p239 = scmp.eq.s32.totalorder %s30, 0
    %p240 = por %p238, %p239
    %p241 = scmp.ne.s32.totalorder %s227, %s228
    %p242 = scmp.eq.s32.totalorder %s31, 1
    %p243 = por %p241, %p242
    %p245 = scmp.ne.s32.totalorder %s228, %s244
    %p246 = scmp.eq.s32.totalorder %s31, 0
    %p247 = por %p245, %p246
    %s248 = ssub.s32 %s33, %s40
    %p249 = scmp.eq.s32.totalorder %s248, 0
    %s251 = sadd.s32 %s250, 1
    %s252 = scalar_select %p249, %s250, %s251
    %p255 = pneg %p249
    %p256 = scmp.eq.s32.totalorder %s25, 1
    %p257 = por %p255, %p256
    %p258 = scmp.ne.s32.totalorder %s250, %s253
    %p259 = scmp.eq.s32.totalorder %s25, 0
    %p260 = por %p258, %p259
    %p261 = scmp.ne.s32.totalorder %s250, %s253
    %p262 = scmp.eq.s32.totalorder %s30, 1
    %p263 = por %p261, %p262
    %p264 = scmp.ne.s32.totalorder %s253, %s254
    %p265 = scmp.eq.s32.totalorder %s30, 0
    %p266 = por %p264, %p265
    %p267 = scmp.ne.s32.totalorder %s253, %s254
    %p268 = scmp.eq.s32.totalorder %s31, 1
    %p269 = por %p267, %p268
    %p271 = scmp.ne.s32.totalorder %s254, %s270
    %p272 = scmp.eq.s32.totalorder %s31, 0
    %p273 = por %p271, %p272
    %s274 = ssub.s32 %s33, %s40
    %p275 = scmp.eq.s32.totalorder %s274, 0
    %s277 = sadd.s32 %s276, 1
    %s278 = scalar_select %p275, %s276, %s277
    %p281 = pneg %p275
    %p282 = scmp.eq.s32.totalorder %s25, 1
    %p283 = por %p281, %p282
    %p284 = scmp.ne.s32.totalorder %s276, %s279
    %p285 = scmp.eq.s32.totalorder %s25, 0
    %p286 = por %p284, %p285
    %p287 = scmp.ne.s32.totalorder %s276, %s279
    %p288 = scmp.eq.s32.totalorder %s30, 1
    %p289 = por %p287, %p288
    %p290 = scmp.ne.s32.totalorder %s279, %s280
    %p291 = scmp.eq.s32.totalorder %s30, 0
    %p292 = por %p290, %p291
    %p293 = scmp.ne.s32.totalorder %s279, %s280
    %p294 = scmp.eq.s32.totalorder %s31, 1
    %p295 = por %p293, %p294
    %p297 = scmp.ne.s32.totalorder %s280, %s296
    %p298 = scmp.eq.s32.totalorder %s31, 0
    %p299 = por %p297, %p298
    %s300 = ssub.s32 %s33, %s40
    %p301 = scmp.eq.s32.totalorder %s300, 0
    %s303 = sadd.s32 %s302, 1
    %s304 = scalar_select %p301, %s302, %s303
    %p307 = pneg %p301
    %p308 = scmp.eq.s32.totalorder %s25, 1
    %p309 = por %p307, %p308
    %p310 = scmp.ne.s32.totalorder %s302, %s305
    %p311 = scmp.eq.s32.totalorder %s25, 0
    %p312 = por %p310, %p311
    %p313 = scmp.ne.s32.totalorder %s302, %s305
    %p314 = scmp.eq.s32.totalorder %s30, 1
    %p315 = por %p313, %p314
    %p316 = scmp.ne.s32.totalorder %s305, %s306
    %p317 = scmp.eq.s32.totalorder %s30, 0
    %p318 = por %p316, %p317
    %p319 = scmp.ne.s32.totalorder %s305, %s306
    %p320 = scmp.eq.s32.totalorder %s31, 1
    %p321 = por %p319, %p320
    %p323 = scmp.ne.s32.totalorder %s306, %s322
    %p324 = scmp.eq.s32.totalorder %s31, 0
    %p325 = por %p323, %p324
    %s326 = ssub.s32 %s33, %s40
    %p327 = scmp.eq.s32.totalorder %s326, 0
    %s329 = sadd.s32 %s328, 1
    %s330 = scalar_select %p327, %s328, %s329
    %p333 = pneg %p327
    %p334 = scmp.eq.s32.totalorder %s25, 1
    %p335 = por %p333, %p334
    %p336 = scmp.ne.s32.totalorder %s328, %s331
    %p337 = scmp.eq.s32.totalorder %s25, 0
    %p338 = por %p336, %p337
    %p339 = scmp.ne.s32.totalorder %s328, %s331
    %p340 = scmp.eq.s32.totalorder %s30, 1
    %p341 = por %p339, %p340
    %p342 = scmp.ne.s32.totalorder %s331, %s332
    %p343 = scmp.eq.s32.totalorder %s30, 0
    %p344 = por %p342, %p343
    %p345 = scmp.ne.s32.totalorder %s331, %s332
    %p346 = scmp.eq.s32.totalorder %s31, 1
    %p347 = por %p345, %p346
    %p349 = scmp.ne.s32.totalorder %s332, %s348
    %p350 = scmp.eq.s32.totalorder %s31, 0
    %p351 = por %p349, %p350
    %s352 = ssub.s32 %s33, %s40
    %p353 = scmp.eq.s32.totalorder %s352, 0
    %s355 = sadd.s32 %s354, 1
    %s356 = scalar_select %p353, %s354, %s355
    %p359 = pneg %p353
    %p360 = scmp.eq.s32.totalorder %s25, 1
    %p361 = por %p359, %p360
    %p362 = scmp.ne.s32.totalorder %s354, %s357
    %p363 = scmp.eq.s32.totalorder %s25, 0
    %p364 = por %p362, %p363
    %p365 = scmp.ne.s32.totalorder %s354, %s357
    %p366 = scmp.eq.s32.totalorder %s30, 1
    %p367 = por %p365, %p366
    %p368 = scmp.ne.s32.totalorder %s357, %s358
    %p369 = scmp.eq.s32.totalorder %s30, 0
    %p370 = por %p368, %p369
    %p371 = scmp.ne.s32.totalorder %s357, %s358
    %p372 = scmp.eq.s32.totalorder %s31, 1
    %p373 = por %p371, %p372
    %p375 = scmp.ne.s32.totalorder %s358, %s374
    %p376 = scmp.eq.s32.totalorder %s31, 0
    %p377 = por %p375, %p376
    %s378 = ssub.s32 %s33, %s40
    %p379 = scmp.eq.s32.totalorder %s378, 0
    %s381 = sadd.s32 %s380, 1
    %s382 = scalar_select %p379, %s380, %s381
    %p385 = pneg %p379
    %p386 = scmp.eq.s32.totalorder %s25, 1
    %p387 = por %p385, %p386
    %p388 = scmp.ne.s32.totalorder %s380, %s383
    %p389 = scmp.eq.s32.totalorder %s25, 0
    %p390 = por %p388, %p389
    %p391 = scmp.ne.s32.totalorder %s380, %s383
    %p392 = scmp.eq.s32.totalorder %s30, 1
    %p393 = por %p391, %p392
    %p394 = scmp.ne.s32.totalorder %s383, %s384
    %p395 = scmp.eq.s32.totalorder %s30, 0
    %p396 = por %p394, %p395
    %p397 = scmp.ne.s32.totalorder %s383, %s384
    %p398 = scmp.eq.s32.totalorder %s31, 1
    %p399 = por %p397, %p398
    %p401 = scmp.ne.s32.totalorder %s384, %s400
    %p402 = scmp.eq.s32.totalorder %s31, 0
    %p403 = por %p401, %p402
    %s404 = ssub.s32 %s33, %s40
    %p405 = scmp.eq.s32.totalorder %s404, 0
    %s407 = sadd.s32 %s406, 1
    %s408 = scalar_select %p405, %s406, %s407
    %p411 = pneg %p405
    %p412 = scmp.eq.s32.totalorder %s25, 1
    %p413 = por %p411, %p412
    %p414 = scmp.ne.s32.totalorder %s406, %s409
    %p415 = scmp.eq.s32.totalorder %s25, 0
    %p416 = por %p414, %p415
    %p417 = scmp.ne.s32.totalorder %s406, %s409
    %p418 = scmp.eq.s32.totalorder %s30, 1
    %p419 = por %p417, %p418
    %p420 = scmp.ne.s32.totalorder %s409, %s410
    %p421 = scmp.eq.s32.totalorder %s30, 0
    %p422 = por %p420, %p421
    %p423 = scmp.ne.s32.totalorder %s409, %s410
    %p424 = scmp.eq.s32.totalorder %s31, 1
    %p425 = por %p423, %p424
    %p427 = scmp.ne.s32.totalorder %s410, %s426
    %p428 = scmp.eq.s32.totalorder %s31, 0
    %p429 = por %p427, %p428
    %s430 = ssub.s32 %s33, %s40
    %p431 = scmp.eq.s32.totalorder %s430, 0
    %s433 = sadd.s32 %s432, 1
    %s434 = scalar_select %p431, %s432, %s433
    %p437 = pneg %p431
    %p438 = scmp.eq.s32.totalorder %s25, 1
    %p439 = por %p437, %p438
    %p440 = scmp.ne.s32.totalorder %s432, %s435
    %p441 = scmp.eq.s32.totalorder %s25, 0
    %p442 = por %p440, %p441
    %p443 = scmp.ne.s32.totalorder %s432, %s435
    %p444 = scmp.eq.s32.totalorder %s30, 1
    %p445 = por %p443, %p444
    %p446 = scmp.ne.s32.totalorder %s435, %s436
    %p447 = scmp.eq.s32.totalorder %s30, 0
    %p448 = por %p446, %p447
    %p449 = scmp.ne.s32.totalorder %s435, %s436
    %p450 = scmp.eq.s32.totalorder %s31, 1
    %p451 = por %p449, %p450
    %p453 = scmp.ne.s32.totalorder %s436, %s452
    %p454 = scmp.eq.s32.totalorder %s31, 0
    %p455 = por %p453, %p454
    %s456 = ssub.s32 %s33, %s40
    %p457 = scmp.eq.s32.totalorder %s456, 0
    %s459 = sadd.s32 %s458, 1
    %s460 = scalar_select %p457, %s458, %s459
    %p463 = pneg %p457
    %p464 = scmp.eq.s32.totalorder %s25, 1
    %p465 = por %p463, %p464
    %p466 = scmp.ne.s32.totalorder %s458, %s461
    %p467 = scmp.eq.s32.totalorder %s25, 0
    %p468 = por %p466, %p467
    %p469 = scmp.ne.s32.totalorder %s458, %s461
    %p470 = scmp.eq.s32.totalorder %s30, 1
    %p471 = por %p469, %p470
    %p472 = scmp.ne.s32.totalorder %s461, %s462
    %p473 = scmp.eq.s32.totalorder %s30, 0
    %p474 = por %p472, %p473
    %p475 = scmp.ne.s32.totalorder %s461, %s462
    %p476 = scmp.eq.s32.totalorder %s31, 1
    %p477 = por %p475, %p476
    %p479 = scmp.ne.s32.totalorder %s462, %s478
    %p480 = scmp.eq.s32.totalorder %s31, 0
    %p481 = por %p479, %p480
    %s482 = ssub.s32 %s33, %s40
    %s483 = ssub.s32 %s32, %s44
    %s484 = sor.u32 %s482, %s483
    %p485 = scmp.eq.s32.totalorder %s484, 0
    %s487 = sadd.s32 %s486, 1
    %s488 = scalar_select %p485, %s486, %s487
    %p491 = pneg %p485
    %p492 = scmp.eq.s32.totalorder %s25, 1
    %p493 = por %p491, %p492
    %p494 = scmp.ne.s32.totalorder %s486, %s489
    %p495 = scmp.eq.s32.totalorder %s25, 0
    %p496 = por %p494, %p495
    %p497 = scmp.ne.s32.totalorder %s486, %s489
    %p498 = scmp.eq.s32.totalorder %s30, 1
    %p499 = por %p497, %p498
    %p500 = scmp.ne.s32.totalorder %s489, %s490
    %p501 = scmp.eq.s32.totalorder %s30, 0
    %p502 = por %p500, %p501
    %p503 = scmp.ne.s32.totalorder %s489, %s490
    %p504 = scmp.eq.s32.totalorder %s31, 1
    %p505 = por %p503, %p504
    %p507 = scmp.ne.s32.totalorder %s490, %s506
    %p508 = scmp.eq.s32.totalorder %s31, 0
    %p509 = por %p507, %p508
    %p510 = scmp.le.s32.totalorder 1, %s25
    %p511 = scmp.lt.s32.totalorder %s25, 3
    %p512 = pnand %p510, %p511
    %p513 = pneg %p512
    // Predicated region
    $region9: #{vit_forward.1} parent=5 // pred_check
      _
    $region10: #{vit_forward.1} parent=5 // pred_check_branch
      %515 = sbr.rel (%p512) target = $region12
    $region11: #{vit_forward.1} parent=5 // pred_region
      %s516 = ssub.s32 %s25, 1
      // Predicated region
      $region13: #{vit_forward.1} parent=11 // pred_check
        %p517 = pneg %p58
      $region14: #{vit_forward.1} parent=11 // pred_check_branch
        %519 = sbr.rel (%p517) target = $region16
      $region15: #{vit_forward.1} parent=11 // pred_region
        _
      $region16: #{vit_forward.1} parent=11 // pred_fallthru
        _
    $region12: #{vit_forward.1} parent=5 // pred_fallthru
      _
    %p520 = scmp.lt.s32.totalorder %s25, 2
    // Predicated region
    $region17: #{vit_forward.1} parent=5 // pred_check
      %p521 = pneg %p520
    $region18: #{vit_forward.1} parent=5 // pred_check_branch
      %523 = sbr.rel (%p521) target = $region20
    $region19: #{vit_forward.1} parent=5 // pred_region
      // Predicated region
      $region21: #{vit_forward.1} parent=19 // pred_check
        %p524 = pneg %p78
      $region22: #{vit_forward.1} parent=19 // pred_check_branch
        %526 = sbr.rel (%p524) target = $region24
      $region23: #{vit_forward.1} parent=19 // pred_region
        %p527 = scmp.lt.s32.totalorder %s33, 1
        %s528 = scalar_select %p527, %s33, 1
        %s529 = scalar_lea.vmem %s3, %s528
      $region24: #{vit_forward.1} parent=19 // pred_fallthru
        _
      // Predicated region
      $region25: #{vit_forward.1} parent=19 // pred_check
        %p530 = pneg %p104
      $region26: #{vit_forward.1} parent=19 // pred_check_branch
        %532 = sbr.rel (%p530) target = $region28
      $region27: #{vit_forward.1} parent=19 // pred_region
        %p533 = scmp.lt.s32.totalorder %s33, 1
        %s534 = scalar_select %p533, %s33, 1
        %s535 = scalar_lea.vmem %s4, %s534
      $region28: #{vit_forward.1} parent=19 // pred_fallthru
        _
      // Predicated region
      $region29: #{vit_forward.1} parent=19 // pred_check
        %p536 = pneg %p130
      $region30: #{vit_forward.1} parent=19 // pred_check_branch
        %538 = sbr.rel (%p536) target = $region32
      $region31: #{vit_forward.1} parent=19 // pred_region
        %p539 = scmp.lt.s32.totalorder %s33, 1
        %s540 = scalar_select %p539, %s33, 1
        %s541 = smul.addr %s540, 4
        %s542 = smul.addr %s541, 4
        %s543 = scalar_lea.vmem %s5, %s542
      $region32: #{vit_forward.1} parent=19 // pred_fallthru
        _
      // Predicated region
      $region33: #{vit_forward.1} parent=19 // pred_check
        %p544 = pneg %p156
      $region34: #{vit_forward.1} parent=19 // pred_check_branch
        %546 = sbr.rel (%p544) target = $region36
      $region35: #{vit_forward.1} parent=19 // pred_region
        %p547 = scmp.lt.s32.totalorder %s33, 1
        %s548 = scalar_select %p547, %s33, 1
        %s549 = scalar_lea.vmem %s6, %s548
      $region36: #{vit_forward.1} parent=19 // pred_fallthru
        _
      // Predicated region
      $region37: #{vit_forward.1} parent=19 // pred_check
        %p550 = pneg %p182
      $region38: #{vit_forward.1} parent=19 // pred_check_branch
        %552 = sbr.rel (%p550) target = $region40
      $region39: #{vit_forward.1} parent=19 // pred_region
        %p553 = scmp.lt.s32.totalorder %s33, 1
        %s554 = scalar_select %p553, %s33, 1
        %s555 = smul.addr %s554, 4
        %s556 = smul.addr %s555, 4
        %s557 = scalar_lea.vmem %s7, %s556
      $region40: #{vit_forward.1} parent=19 // pred_fallthru
        _
      // Predicated region
      $region41: #{vit_forward.1} parent=19 // pred_check
        %p558 = pneg %p208
      $region42: #{vit_forward.1} parent=19 // pred_check_branch
        %560 = sbr.rel (%p558) target = $region44
      $region43: #{vit_forward.1} parent=19 // pred_region
        %p561 = scmp.lt.s32.totalorder %s33, 1
        %s562 = scalar_select %p561, %s33, 1
        %s563 = scalar_lea.vmem %s8, %s562
      $region44: #{vit_forward.1} parent=19 // pred_fallthru
        _
      // Predicated region
      $region45: #{vit_forward.1} parent=19 // pred_check
        %p564 = pneg %p234
      $region46: #{vit_forward.1} parent=19 // pred_check_branch
        %566 = sbr.rel (%p564) target = $region48
      $region47: #{vit_forward.1} parent=19 // pred_region
        %p567 = scmp.lt.s32.totalorder %s33, 1
        %s568 = scalar_select %p567, %s33, 1
        %s569 = scalar_lea.vmem %s9, %s568
      $region48: #{vit_forward.1} parent=19 // pred_fallthru
        _
      // Predicated region
      $region49: #{vit_forward.1} parent=19 // pred_check
        %p570 = pneg %p260
      $region50: #{vit_forward.1} parent=19 // pred_check_branch
        %572 = sbr.rel (%p570) target = $region52
      $region51: #{vit_forward.1} parent=19 // pred_region
        %p573 = scmp.lt.s32.totalorder %s33, 1
        %s574 = scalar_select %p573, %s33, 1
        %s575 = scalar_lea.vmem %s10, %s574
      $region52: #{vit_forward.1} parent=19 // pred_fallthru
        _
      // Predicated region
      $region53: #{vit_forward.1} parent=19 // pred_check
        %p576 = pneg %p286
      $region54: #{vit_forward.1} parent=19 // pred_check_branch
        %578 = sbr.rel (%p576) target = $region56
      $region55: #{vit_forward.1} parent=19 // pred_region
        %p579 = scmp.lt.s32.totalorder %s33, 1
        %s580 = scalar_select %p579, %s33, 1
        %s581 = smul.addr %s580, 4
        %s582 = smul.addr %s581, 4
        %s583 = scalar_lea.vmem %s11, %s582
      $region56: #{vit_forward.1} parent=19 // pred_fallthru
        _
      // Predicated region
      $region57: #{vit_forward.1} parent=19 // pred_check
        %p584 = pneg %p312
      $region58: #{vit_forward.1} parent=19 // pred_check_branch
        %586 = sbr.rel (%p584) target = $region60
      $region59: #{vit_forward.1} parent=19 // pred_region
        %p587 = scmp.lt.s32.totalorder %s33, 1
        %s588 = scalar_select %p587, %s33, 1
        %s589 = scalar_lea.vmem %s12, %s588
      $region60: #{vit_forward.1} parent=19 // pred_fallthru
        _
      // Predicated region
      $region61: #{vit_forward.1} parent=19 // pred_check
        %p590 = pneg %p338
      $region62: #{vit_forward.1} parent=19 // pred_check_branch
        %592 = sbr.rel (%p590) target = $region64
      $region63: #{vit_forward.1} parent=19 // pred_region
        %p593 = scmp.lt.s32.totalorder %s33, 1
        %s594 = scalar_select %p593, %s33, 1
        %s595 = smul.addr %s594, 8
        %s596 = smul.addr %s595, 4
        %s597 = scalar_lea.vmem %s13, %s596
      $region64: #{vit_forward.1} parent=19 // pred_fallthru
        _
      // Predicated region
      $region65: #{vit_forward.1} parent=19 // pred_check
        %p598 = pneg %p364
      $region66: #{vit_forward.1} parent=19 // pred_check_branch
        %600 = sbr.rel (%p598) target = $region68
      $region67: #{vit_forward.1} parent=19 // pred_region
        %p601 = scmp.lt.s32.totalorder %s33, 1
        %s602 = scalar_select %p601, %s33, 1
        %s603 = scalar_lea.vmem %s14, %s602
      $region68: #{vit_forward.1} parent=19 // pred_fallthru
        _
      // Predicated region
      $region69: #{vit_forward.1} parent=19 // pred_check
        %p604 = pneg %p390
      $region70: #{vit_forward.1} parent=19 // pred_check_branch
        %606 = sbr.rel (%p604) target = $region72
      $region71: #{vit_forward.1} parent=19 // pred_region
        %p607 = scmp.lt.s32.totalorder %s33, 1
        %s608 = scalar_select %p607, %s33, 1
        %s609 = smul.addr %s608, 6
        %s610 = smul.addr %s609, 4
        %s611 = scalar_lea.vmem %s15, %s610
      $region72: #{vit_forward.1} parent=19 // pred_fallthru
        _
      // Predicated region
      $region73: #{vit_forward.1} parent=19 // pred_check
        %p612 = pneg %p416
      $region74: #{vit_forward.1} parent=19 // pred_check_branch
        %614 = sbr.rel (%p612) target = $region76
      $region75: #{vit_forward.1} parent=19 // pred_region
        %p615 = scmp.lt.s32.totalorder %s33, 1
        %s616 = scalar_select %p615, %s33, 1
        %s617 = scalar_lea.vmem %s16, %s616
      $region76: #{vit_forward.1} parent=19 // pred_fallthru
        _
      // Predicated region
      $region77: #{vit_forward.1} parent=19 // pred_check
        %p618 = pneg %p442
      $region78: #{vit_forward.1} parent=19 // pred_check_branch
        %620 = sbr.rel (%p618) target = $region80
      $region79: #{vit_forward.1} parent=19 // pred_region
        %p621 = scmp.lt.s32.totalorder %s33, 1
        %s622 = scalar_select %p621, %s33, 1
        %s623 = smul.addr %s622, 4
        %s624 = smul.addr %s623, 4
        %s625 = scalar_lea.vmem %s17, %s624
      $region80: #{vit_forward.1} parent=19 // pred_fallthru
        _
      // Predicated region
      $region81: #{vit_forward.1} parent=19 // pred_check
        %p626 = pneg %p468
      $region82: #{vit_forward.1} parent=19 // pred_check_branch
        %628 = sbr.rel (%p626) target = $region84
      $region83: #{vit_forward.1} parent=19 // pred_region
        %p629 = scmp.lt.s32.totalorder %s33, 1
        %s630 = scalar_select %p629, %s33, 1
        %s631 = scalar_lea.vmem %s18, %s630
      $region84: #{vit_forward.1} parent=19 // pred_fallthru
        _
    $region20: #{vit_forward.1} parent=5 // pred_fallthru
      _
    %p632 = scmp.le.s32.totalorder 1, %s25
    %p633 = scmp.lt.s32.totalorder %s25, 3
    %p634 = pnand %p632, %p633
    %p635 = pneg %p634
    // Predicated region
    $region85: #{vit_forward.1} parent=5 // pred_check
      _
    $region86: #{vit_forward.1} parent=5 // pred_check_branch
      %637 = sbr.rel (%p634) target = $region88
    $region87: #{vit_forward.1} parent=5 // pred_region
      %s638 = ssub.s32 %s25, 1
      %p639 = pneg %p58
      %p640 = pneg %p55
      %p641 = scmp.lt.s32.totalorder %s35, 1
      %s642 = scalar_select %p641, %s35, 1
      %s643 = scalar_lea.vmem %s3, %s642
      %p644 = pneg %p84
      %p645 = pneg %p81
      %p646 = scmp.lt.s32.totalorder %s35, 1
      %s647 = scalar_select %p646, %s35, 1
      %s648 = scalar_lea.vmem %s4, %s647
      %p649 = pneg %p110
      %p650 = pneg %p107
      %p651 = scmp.lt.s32.totalorder %s35, 1
      %s652 = scalar_select %p651, %s35, 1
      %s653 = smul.addr %s652, 4
      %s654 = smul.addr %s653, 4
      %s655 = scalar_lea.vmem %s5, %s654
      %p656 = pneg %p136
      %p657 = pneg %p133
      %p658 = scmp.lt.s32.totalorder %s35, 1
      %s659 = scalar_select %p658, %s35, 1
      %s660 = scalar_lea.vmem %s6, %s659
      %p661 = pneg %p162
      %p662 = pneg %p159
      %p663 = scmp.lt.s32.totalorder %s35, 1
      %s664 = scalar_select %p663, %s35, 1
      %s665 = smul.addr %s664, 4
      %s666 = smul.addr %s665, 4
      %s667 = scalar_lea.vmem %s7, %s666
      %p668 = pneg %p188
      %p669 = pneg %p185
      %p670 = scmp.lt.s32.totalorder %s35, 1
      %s671 = scalar_select %p670, %s35, 1
      %s672 = scalar_lea.vmem %s8, %s671
      %p673 = pneg %p214
      %p674 = pneg %p211
      %p675 = scmp.lt.s32.totalorder %s35, 1
      %s676 = scalar_select %p675, %s35, 1
      %s677 = scalar_lea.vmem %s9, %s676
      %p678 = pneg %p240
      %p679 = pneg %p237
      %p680 = scmp.lt.s32.totalorder %s35, 1
      %s681 = scalar_select %p680, %s35, 1
      %s682 = scalar_lea.vmem %s10, %s681
      %p683 = pneg %p266
      %p684 = pneg %p263
      %p685 = scmp.lt.s32.totalorder %s35, 1
      %s686 = scalar_select %p685, %s35, 1
      %s687 = smul.addr %s686, 4
      %s688 = smul.addr %s687, 4
      %s689 = scalar_lea.vmem %s11, %s688
      %p690 = pneg %p292
      %p691 = pneg %p289
      %p692 = scmp.lt.s32.totalorder %s35, 1
      %s693 = scalar_select %p692, %s35, 1
      %s694 = scalar_lea.vmem %s12, %s693
      %p695 = pneg %p318
      %p696 = pneg %p315
      %p697 = scmp.lt.s32.totalorder %s35, 1
      %s698 = scalar_select %p697, %s35, 1
      %s699 = smul.addr %s698, 8
      %s700 = smul.addr %s699, 4
      %s701 = scalar_lea.vmem %s13, %s700
      %p702 = pneg %p344
      %p703 = pneg %p341
      %p704 = scmp.lt.s32.totalorder %s35, 1
      %s705 = scalar_select %p704, %s35, 1
      %s706 = scalar_lea.vmem %s14, %s705
      %p707 = pneg %p370
      %p708 = pneg %p367
      %p709 = scmp.lt.s32.totalorder %s35, 1
      %s710 = scalar_select %p709, %s35, 1
      %s711 = smul.addr %s710, 6
      %s712 = smul.addr %s711, 4
      %s713 = scalar_lea.vmem %s15, %s712
      %p714 = pneg %p396
      %p715 = pneg %p393
      %p716 = scmp.lt.s32.totalorder %s35, 1
      %s717 = scalar_select %p716, %s35, 1
      %s718 = scalar_lea.vmem %s16, %s717
      %p719 = pneg %p422
      %p720 = pneg %p419
      %p721 = scmp.lt.s32.totalorder %s35, 1
      %s722 = scalar_select %p721, %s35, 1
      %s723 = smul.addr %s722, 4
      %s724 = smul.addr %s723, 4
      %s725 = scalar_lea.vmem %s17, %s724
      %p726 = pneg %p448
      %p727 = pneg %p445
      %p728 = scmp.lt.s32.totalorder %s35, 1
      %s729 = scalar_select %p728, %s35, 1
      %s730 = scalar_lea.vmem %s18, %s729
      %p731 = pneg %p474
      %p732 = pneg %p471
      %p733 = pneg %p502
      %p734 = pneg %p499
      %p735 = scmp.lt.s32.totalorder %s35, 1
      %s736 = scalar_select %p735, %s35, 1
      %p737 = scmp.lt.s32.totalorder %s34, 0
      %s738 = scalar_select %p737, %s34, 0
      %s739 = sadd.s32 %s738, %s736
      %s740 = smul.addr %s739, 2
      %s741 = scalar_lea.vmem %s19, %s740
      %p742 = scmp.lt.s32.totalorder %s35, 1
      %s743 = scalar_select %p742, %s35, 1
      %s744 = scalar_lea.vmem %s3, %s743
      %p745 = scmp.lt.s32.totalorder %s35, 1
      %s746 = scalar_select %p745, %s35, 1
      %s747 = scalar_lea.vmem %s4, %s746
      %p748 = scmp.lt.s32.totalorder %s35, 1
      %s749 = scalar_select %p748, %s35, 1
      %s750 = smul.addr %s749, 4
      %s751 = smul.addr %s750, 4
      %s752 = scalar_lea.vmem %s5, %s751
      %p753 = scmp.lt.s32.totalorder %s35, 1
      %s754 = scalar_select %p753, %s35, 1
      %s755 = scalar_lea.vmem %s6, %s754
      %p756 = scmp.lt.s32.totalorder %s35, 1
      %s757 = scalar_select %p756, %s35, 1
      %s758 = smul.addr %s757, 4
      %s759 = smul.addr %s758, 4
      %s760 = scalar_lea.vmem %s7, %s759
      %p761 = scmp.lt.s32.totalorder %s35, 1
      %s762 = scalar_select %p761, %s35, 1
      %s763 = scalar_lea.vmem %s8, %s762
      %p764 = scmp.lt.s32.totalorder %s35, 1
      %s765 = scalar_select %p764, %s35, 1
      %s766 = scalar_lea.vmem %s9, %s765
      %p767 = scmp.lt.s32.totalorder %s35, 1
      %s768 = scalar_select %p767, %s35, 1
      %s769 = scalar_lea.vmem %s10, %s768
      %p770 = scmp.lt.s32.totalorder %s35, 1
      %s771 = scalar_select %p770, %s35, 1
      %s772 = smul.addr %s771, 4
      %s773 = smul.addr %s772, 4
      %s774 = scalar_lea.vmem %s11, %s773
      %p775 = scmp.lt.s32.totalorder %s35, 1
      %s776 = scalar_select %p775, %s35, 1
      %s777 = scalar_lea.vmem %s12, %s776
      %p778 = scmp.lt.s32.totalorder %s35, 1
      %s779 = scalar_select %p778, %s35, 1
      %s780 = smul.addr %s779, 8
      %s781 = smul.addr %s780, 4
      %s782 = scalar_lea.vmem %s13, %s781
      %p783 = scmp.lt.s32.totalorder %s35, 1
      %s784 = scalar_select %p783, %s35, 1
      %s785 = scalar_lea.vmem %s14, %s784
      %p786 = scmp.lt.s32.totalorder %s35, 1
      %s787 = scalar_select %p786, %s35, 1
      %s788 = smul.addr %s787, 6
      %s789 = smul.addr %s788, 4
      %s790 = scalar_lea.vmem %s15, %s789
      %p791 = scmp.lt.s32.totalorder %s35, 1
      %s792 = scalar_select %p791, %s35, 1
      %s793 = scalar_lea.vmem %s16, %s792
      %p794 = scmp.lt.s32.totalorder %s35, 1
      %s795 = scalar_select %p794, %s35, 1
      %s796 = smul.addr %s795, 4
      %s797 = smul.addr %s796, 4
      %s798 = scalar_lea.vmem %s17, %s797
      %p799 = scmp.lt.s32.totalorder %s35, 1
      %s800 = scalar_select %p799, %s35, 1
      %s801 = scalar_lea.vmem %s18, %s800
      %p802 = scmp.lt.s32.totalorder %s35, 1
      %s803 = scalar_select %p802, %s35, 1
      %p804 = scmp.lt.s32.totalorder %s34, 0
      %s805 = scalar_select %p804, %s34, 0
      %s806 = sadd.s32 %s805, %s803
      %s807 = smul.addr %s806, 2
      %s808 = scalar_lea.vmem %s19, %s807
      %p810 = scmp.eq.s32.totalorder %s35, 0
      // Predicated region
      $region89: #{vit_forward.1} parent=87 // pred_check
        %p811 = pneg %p810
      $region90: #{vit_forward.1} parent=87 // pred_check_branch
        %813 = sbr.rel (%p811) target = $region92
      $region91: #{vit_forward.1} parent=87 // pred_region
        $region93: #{vit_forward.1} parent=91
          #allocation3 [shape = 'u8[12288]{0}', space=vmem, size = 0x3000, scoped, tag = 'scoped memory for vit_forward.1']
          #allocation4 [shape = 'u8[32768]{0}', space=vmem, size = 0x8000, scoped, tag = 'scoped memory for vit_forward.1']
          #allocation5 [shape = 's32[2]{0}', space=sflag, size = 0x8, scoped, tag = 'scoped memory for vit_forward.1']
          %s814 = smul.u32 %s34, 6
          %s815 = smul.addr %s814, 4
          %s816 = scalar_lea.vmem %s0, %s815
          %p818 = scmp.lt.u32.totalorder 24, 8
          %p819 = pneg %p818
          // Predicated region
          $region94: #{vit_forward.1} parent=93 // pred_check
            _
          $region95: #{vit_forward.1} parent=93 // pred_check_branch
            %821 = sbr.rel (%p818) target = $region97
          $region96: #{vit_forward.1} parent=93 // pred_region
            %s836 = sand.u32 24, 7
            %p837 = scmp.eq.s32.totalorder %s836, 0
            // Predicated region
            $region109: #{vit_forward.1} parent=96 // pred_check
              %p838 = pneg %p837
            $region110: #{vit_forward.1} parent=96 // pred_check_branch
              %840 = sbr.rel (%p838) target = $region112
            $region111: #{vit_forward.1} parent=96 // pred_region
              loop: start=0, step=1, limit=1
              $region113: #{vit_forward.1} parent=111 // loop_pre_header
                _
              $region114: #{vit_forward.1} parent=111 // loop_header
                %s842 = sphi 0, %s846
                %p843 = scmp.ge.s32.totalorder %s842, 1
                %s847 = sphi %s816, %s816
                %s848 = sphi [#allocation3], [#allocation3]
              $region115: #{vit_forward.1} parent=111 // loop_header_branch
                %845 = sbr.rel (%p843) target = $region119
              $region116: #{vit_forward.1} parent=111 // loop_body
                %v849 = vld [vmem:[%s847] sm:$0xff]
                %850 = vst [vmem:[%s848] sm:$0xff] %v849
                %v851 = vld [vmem:[%s847 + $0x8] sm:$0xff]
                %852 = vst [vmem:[%s848 + $0x8] sm:$0xff] %v851
                %v853 = vld [vmem:[%s847 + $0x10] sm:$0xff]
                %854 = vst [vmem:[%s848 + $0x10] sm:$0xff] %v853
              $region117: #{vit_forward.1} parent=111 // loop_footer
                %s846 = sadd.s32 1, %s842
              $region118: #{vit_forward.1} parent=111 // loop_footer_branch
                %841 = sbr.rel target = $region114
              $region119: #{vit_forward.1} parent=111 // loop_exit
                _
            $region112: #{vit_forward.1} parent=96 // pred_fallthru
              _
            %p855 = pneg %p837
            // Predicated region
            $region120: #{vit_forward.1} parent=96 // pred_check
              _
            $region121: #{vit_forward.1} parent=96 // pred_check_branch
              %857 = sbr.rel (%p837) target = $region123
            $region122: #{vit_forward.1} parent=96 // pred_region
              %s858 = sand.u32 24, 7
            $region123: #{vit_forward.1} parent=96 // pred_fallthru
              _
          $region97: #{vit_forward.1} parent=93 // pred_fallthru
            _
          // Predicated region
          $region98: #{vit_forward.1} parent=93 // pred_check
            %p822 = pneg %p818
          $region99: #{vit_forward.1} parent=93 // pred_check_branch
            %824 = sbr.rel (%p822) target = $region101
          $region100: #{vit_forward.1} parent=93 // pred_region
            %s825 = sshllo.u32 0, 24
            loop: start=0, step=1, limit=1
            $region102: #{vit_forward.1} parent=100 // loop_pre_header
              _
            $region103: #{vit_forward.1} parent=100 // loop_header
              %s827 = sphi 0, %s831
              %p828 = scmp.ge.s32.totalorder %s827, 1
              %s832 = sphi %s816, %s816
              %s833 = sphi [#allocation3], [#allocation3]
            $region104: #{vit_forward.1} parent=100 // loop_header_branch
              %830 = sbr.rel (%p828) target = $region108
            $region105: #{vit_forward.1} parent=100 // loop_body
              %v834 = vld [vmem:[%s832] sm:%s825]
              %835 = vst [vmem:[%s833] sm:%s825] %v834
            $region106: #{vit_forward.1} parent=100 // loop_footer
              %s831 = sadd.s32 1, %s827
            $region107: #{vit_forward.1} parent=100 // loop_footer_branch
              %826 = sbr.rel target = $region103
            $region108: #{vit_forward.1} parent=100 // loop_exit
              _
          $region101: #{vit_forward.1} parent=93 // pred_fallthru
            _
          // Predicated region
          $region124: #{vit_forward.1} parent=93 // pred_check
            _
          $region125: #{vit_forward.1} parent=93 // pred_check_branch
            %861 = sbr.rel (0) target = $region127
          $region126: #{vit_forward.1} parent=93 // pred_region
            %862 = vsyncadd [#allocation5], 384
          $region127: #{vit_forward.1} parent=93 // pred_fallthru
            _
          %s863 = scalar_lea.sflag [#allocation5], 1
          %p865 = scmp.lt.u32.totalorder 64, 8
          %p866 = pneg %p865
          // Predicated region
          $region128: #{vit_forward.1} parent=93 // pred_check
            _
          $region129: #{vit_forward.1} parent=93 // pred_check_branch
            %868 = sbr.rel (%p865) target = $region131
          $region130: #{vit_forward.1} parent=93 // pred_region
            %s883 = sand.u32 64, 7
            %p884 = scmp.eq.s32.totalorder %s883, 0
            // Predicated region
            $region143: #{vit_forward.1} parent=130 // pred_check
              %p885 = pneg %p884
            $region144: #{vit_forward.1} parent=130 // pred_check_branch
              %887 = sbr.rel (%p885) target = $region146
            $region145: #{vit_forward.1} parent=130 // pred_region
              loop: start=0, step=1, limit=1
              $region147: #{vit_forward.1} parent=145 // loop_pre_header
                _
              $region148: #{vit_forward.1} parent=145 // loop_header
                %s889 = sphi 0, %s893
                %p890 = scmp.ge.s32.totalorder %s889, 1
                %s894 = sphi %s2, %s2
                %s895 = sphi [#allocation4], [#allocation4]
              $region149: #{vit_forward.1} parent=145 // loop_header_branch
                %892 = sbr.rel (%p890) target = $region153
              $region150: #{vit_forward.1} parent=145 // loop_body
                %v896 = vld [vmem:[%s894] sm:$0xff]
                %897 = vst [vmem:[%s895] sm:$0xff] %v896
                %v898 = vld [vmem:[%s894 + $0x8] sm:$0xff]
                %899 = vst [vmem:[%s895 + $0x8] sm:$0xff] %v898
                %v900 = vld [vmem:[%s894 + $0x10] sm:$0xff]
                %901 = vst [vmem:[%s895 + $0x10] sm:$0xff] %v900
                %v902 = vld [vmem:[%s894 + $0x18] sm:$0xff]
                %903 = vst [vmem:[%s895 + $0x18] sm:$0xff] %v902
                %v904 = vld [vmem:[%s894 + $0x20] sm:$0xff]
                %905 = vst [vmem:[%s895 + $0x20] sm:$0xff] %v904
                %v906 = vld [vmem:[%s894 + $0x28] sm:$0xff]
                %907 = vst [vmem:[%s895 + $0x28] sm:$0xff] %v906
                %v908 = vld [vmem:[%s894 + $0x30] sm:$0xff]
                %909 = vst [vmem:[%s895 + $0x30] sm:$0xff] %v908
                %v910 = vld [vmem:[%s894 + $0x38] sm:$0xff]
                %911 = vst [vmem:[%s895 + $0x38] sm:$0xff] %v910
              $region151: #{vit_forward.1} parent=145 // loop_footer
                %s893 = sadd.s32 1, %s889
              $region152: #{vit_forward.1} parent=145 // loop_footer_branch
                %888 = sbr.rel target = $region148
              $region153: #{vit_forward.1} parent=145 // loop_exit
                _
            $region146: #{vit_forward.1} parent=130 // pred_fallthru
              _
            %p912 = pneg %p884
            // Predicated region
            $region154: #{vit_forward.1} parent=130 // pred_check
              _
            $region155: #{vit_forward.1} parent=130 // pred_check_branch
              %914 = sbr.rel (%p884) target = $region157
            $region156: #{vit_forward.1} parent=130 // pred_region
              %s915 = sand.u32 64, 7
            $region157: #{vit_forward.1} parent=130 // pred_fallthru
              _
          $region131: #{vit_forward.1} parent=93 // pred_fallthru
            _
          // Predicated region
          $region132: #{vit_forward.1} parent=93 // pred_check
            %p869 = pneg %p865
          $region133: #{vit_forward.1} parent=93 // pred_check_branch
            %871 = sbr.rel (%p869) target = $region135
          $region134: #{vit_forward.1} parent=93 // pred_region
            %s872 = sshllo.u32 0, 64
            loop: start=0, step=1, limit=1
            $region136: #{vit_forward.1} parent=134 // loop_pre_header
              _
            $region137: #{vit_forward.1} parent=134 // loop_header
              %s874 = sphi 0, %s878
              %p875 = scmp.ge.s32.totalorder %s874, 1
              %s879 = sphi %s2, %s2
              %s880 = sphi [#allocation4], [#allocation4]
            $region138: #{vit_forward.1} parent=134 // loop_header_branch
              %877 = sbr.rel (%p875) target = $region142
            $region139: #{vit_forward.1} parent=134 // loop_body
              %v881 = vld [vmem:[%s879] sm:%s872]
              %882 = vst [vmem:[%s880] sm:%s872] %v881
            $region140: #{vit_forward.1} parent=134 // loop_footer
              %s878 = sadd.s32 1, %s874
            $region141: #{vit_forward.1} parent=134 // loop_footer_branch
              %873 = sbr.rel target = $region137
            $region142: #{vit_forward.1} parent=134 // loop_exit
              _
          $region135: #{vit_forward.1} parent=93 // pred_fallthru
            _
          // Predicated region
          $region158: #{vit_forward.1} parent=93 // pred_check
            _
          $region159: #{vit_forward.1} parent=93 // pred_check_branch
            %918 = sbr.rel (0) target = $region161
          $region160: #{vit_forward.1} parent=93 // pred_region
            %919 = vsyncadd %s863, 1024
          $region161: #{vit_forward.1} parent=93 // pred_fallthru
            _
          %s920 = smul.u32 4, 6
          %s921 = smul.u32 %s920, 1
          %s922 = sshll.u32 %s921, 4
          %923 = dma.done [#allocation5], %s922
          %s924 = smul.u32 4, 16
          %s925 = smul.u32 %s924, 1
          %s926 = sshll.u32 %s925, 4
          %927 = dma.done %s863, %s926
          %v928 = vld [vmem:[#allocation3] sm:$0xff]
          %v929 = vld [vmem:[#allocation3 + $0x8] sm:$0xff]
          %v930 = vld [vmem:[#allocation3 + $0x10] sm:$0xff]
          %v931 = vld [vmem:[#allocation4] sm:$0xff]
          %v932 = vld [vmem:[#allocation4 + $0x8] sm:$0xff]
          %v933 = vld [vmem:[#allocation4 + $0x10] sm:$0xff]
          %v934 = vld [vmem:[#allocation4 + $0x18] sm:$0xff]
          %v935 = vld [vmem:[#allocation4 + $0x20] sm:$0xff]
          %v936 = vld [vmem:[#allocation4 + $0x28] sm:$0xff]
          %v937 = vld [vmem:[#allocation4 + $0x30] sm:$0xff]
          %v938 = vld [vmem:[#allocation4 + $0x38] sm:$0xff]
          %939 = vmatprep.subr.bf16.mxu0 0
          %940 = vmatpush1.bf16.msra.mxu0 %v931
          %941 = vmatprep.subr.bf16.mxu0 0
          %942 = vmatpush1.bf16.msra.mxu0 %v932
          %943 = vmatprep.subr.bf16.mxu0 0
          %944 = vmatpush1.bf16.msra.mxu0 %v933
          %945 = vmatprep.subr.bf16.mxu0 0
          %946 = vmatpush1.bf16.msra.mxu0 %v934
          %947 = vmatprep.subr.bf16.mxu0 0
          %948 = vmatpush1.bf16.msra.mxu0 %v935
          %949 = vmatprep.subr.bf16.mxu0 0
          %950 = vmatpush1.bf16.msra.mxu0 %v936
          %951 = vmatprep.subr.bf16.mxu0 0
          %952 = vmatpush1.bf16.msra.mxu0 %v937
          %953 = vmatprep.subr.bf16.mxu0 0
          %954 = vmatpush1.bf16.msra.mxu0 %v938
          %955 = vmatprep.subr.bf16.mxu0 0
          %956 = vmatpush1.bf16.msra.mxu0 0
          %957 = vmatprep.subr.bf16.mxu0 0
          %958 = vmatpush1.bf16.msra.mxu0 0
          %959 = vmatprep.subr.bf16.mxu0 0
          %960 = vmatpush1.bf16.msra.mxu0 0
          %961 = vmatprep.subr.bf16.mxu0 0
          %962 = vmatpush1.bf16.msra.mxu0 0
          %963 = vmatprep.subr.bf16.mxu0 0
          %964 = vmatpush1.bf16.msra.mxu0 0
          %965 = vmatprep.subr.bf16.mxu0 0
          %966 = vmatpush1.bf16.msra.mxu0 0
          %967 = vmatprep.subr.bf16.mxu0 0
          %968 = vmatpush1.bf16.msra.mxu0 0
          %969 = vmatprep.subr.bf16.mxu0 0
          %970 = vmatpush1.bf16.msra.mxu0 0
          %971 = vmatprep.mubr.bf16.mxu0 0
          %972 = vmatmul.mubr.bf16.gmra.mrb[0].mxu0 %v928
          %v973 = vpop.f32.mrb[0].mxu0
          %v974 = vadd.f32 0.0, %v973
          %v975 = vpop.f32.mrb[0].mxu0
          %v976 = vpop.f32.mrb[0].mxu0
          %v977 = vadd.f32 0.0, %v976
          %v978 = vpop.f32.mrb[0].mxu0
          %979 = vmatprep.mubr.bf16.mxu0 0
          %980 = vmatmul.mubr.bf16.gmra.mrb[0].mxu0 %v929
          %v981 = vpop.f32.mrb[0].mxu0
          %v982 = vadd.f32 0.0, %v981
          %v983 = vpop.f32.mrb[0].mxu0
          %v984 = vpop.f32.mrb[0].mxu0
          %v985 = vadd.f32 0.0, %v984
          %v986 = vpop.f32.mrb[0].mxu0
          %987 = vmatprep.mubr.bf16.mxu0 0
          %988 = vmatmul.mubr.bf16.gmra.mrb[0].mxu0 %v930
          %v989 = vpop.f32.mrb[0].mxu0
          %v990 = vadd.f32 0.0, %v989
          %v991 = vpop.f32.mrb[0].mxu0
          %v992 = vpop.f32.mrb[0].mxu0
          %v993 = vadd.f32 0.0, %v992
          %v994 = vpop.f32.mrb[0].mxu0
          %995 = vdwg.mxu0
          %v996 = vld [vmem:[%s1] sm:$0xff]
          %v997 = vld [vmem:[%s1 + $0x8] sm:$0xff]
          %v998 = vld [vmem:[%s1 + $0x10] sm:$0xff]
          %v999 = vadd.f32 %v974, %v996
          %v1000 = vadd.f32 %v977, %v997
          %v1001 = vadd.f32 %v982, %v998
          %v1002 = vadd.f32 %v985, %v996
          %v1003 = vadd.f32 %v990, %v997
          %v1004 = vadd.f32 %v993, %v998
          %vm1005 = vcmask 261120
          %1006 = vst.msk [vmem:[#allocation2] sm:$0xff] %vm1005, %v999
          %1007 = vst.msk [vmem:[#allocation2 + $0x8] sm:$0xff] %vm1005, %v1000
          %1008 = vst.msk [vmem:[#allocation2 + $0x10] sm:$0xff] %vm1005, %v1001
          %1009 = vst.msk [vmem:[#allocation2 + $0x18] sm:$0xff] %vm1005, %v1002
          %1010 = vst.msk [vmem:[#allocation2 + $0x20] sm:$0xff] %vm1005, %v1003
          %1011 = vst.msk [vmem:[#allocation2 + $0x28] sm:$0xff] %vm1005, %v1004
      $region92: #{vit_forward.1} parent=87 // pred_fallthru
        _
      %v1012 = vld [vmem:[#allocation2] sm:$0xff]
      %v1013 = vld [vmem:[#allocation2 + $0x8] sm:$0xff]
      %v1014 = vld [vmem:[#allocation2 + $0x10] sm:$0xff]
      %v1015 = vld [vmem:[#allocation2 + $0x18] sm:$0xff]
      %v1016 = vld [vmem:[#allocation2 + $0x20] sm:$0xff]
      %v1017 = vld [vmem:[#allocation2 + $0x28] sm:$0xff]
      %v1018 = vld [vmem:[%s744] sm:$0x1]
      %v1019 = vld [vmem:[%s747] sm:$0x1]
      %vm1020 = vcmask 261120
      %v1021 = vsel %vm1020, %v1012, 0.0
      %1022 = vadd.xlane.f32.xlu0 %v1021
      %v1023 = vpop.xlane.xlu0 %1022
      %v1024 = vsel %vm1020, %v1013, 0.0
      %1025 = vadd.xlane.f32.xlu0 %v1024
      %v1026 = vpop.xlane.xlu0 %1025
      %v1027 = vsel %vm1020, %v1014, 0.0
      %1028 = vadd.xlane.f32.xlu0 %v1027
      %v1029 = vpop.xlane.xlu0 %1028
      %v1030 = vsel %vm1020, %v1015, 0.0
      %1031 = vadd.xlane.f32.xlu0 %v1030
      %v1032 = vpop.xlane.xlu0 %1031
      %v1033 = vsel %vm1020, %v1016, 0.0
      %1034 = vadd.xlane.f32.xlu0 %v1033
      %v1035 = vpop.xlane.xlu0 %1034
      %v1036 = vsel %vm1020, %v1017, 0.0
      %1037 = vadd.xlane.f32.xlu0 %v1036
      %v1038 = vpop.xlane.xlu0 %1037
      %v1039 = vrcp.pop 32.0
      %v1040 = vmul.f32 %v1023, %v1039
      %v1041 = vmul.f32 %v1026, %v1039
      %v1042 = vmul.f32 %v1029, %v1039
      %v1043 = vmul.f32 %v1032, %v1039
      %v1044 = vmul.f32 %v1035, %v1039
      %v1045 = vmul.f32 %v1038, %v1039
      %v1046 = vsub.f32 %v1012, %v1040
      %v1047 = vsub.f32 %v1013, %v1041
      %v1048 = vsub.f32 %v1014, %v1042
      %v1049 = vsub.f32 %v1015, %v1043
      %v1050 = vsub.f32 %v1016, %v1044
      %v1051 = vsub.f32 %v1017, %v1045
      %v1052 = vmul.f32 %v1046, %v1046
      %v1053 = vmul.f32 %v1047, %v1047
      %v1054 = vmul.f32 %v1048, %v1048
      %v1055 = vmul.f32 %v1049, %v1049
      %v1056 = vmul.f32 %v1050, %v1050
      %v1057 = vmul.f32 %v1051, %v1051
      %v1058 = vsel %vm1020, %v1052, 0.0
      %1059 = vadd.xlane.f32.xlu0 %v1058
      %v1060 = vpop.xlane.xlu0 %1059
      %v1061 = vsel %vm1020, %v1053, 0.0
      %1062 = vadd.xlane.f32.xlu0 %v1061
      %v1063 = vpop.xlane.xlu0 %1062
      %v1064 = vsel %vm1020, %v1054, 0.0
      %1065 = vadd.xlane.f32.xlu0 %v1064
      %v1066 = vpop.xlane.xlu0 %1065
      %v1067 = vsel %vm1020, %v1055, 0.0
      %1068 = vadd.xlane.f32.xlu0 %v1067
      %v1069 = vpop.xlane.xlu0 %1068
      %v1070 = vsel %vm1020, %v1056, 0.0
      %1071 = vadd.xlane.f32.xlu0 %v1070
      %v1072 = vpop.xlane.xlu0 %1071
      %v1073 = vsel %vm1020, %v1057, 0.0
      %1074 = vadd.xlane.f32.xlu0 %v1073
      %v1075 = vpop.xlane.xlu0 %1074
      %v1076 = vmul.f32 %v1060, %v1039
      %v1077 = vmul.f32 %v1063, %v1039
      %v1078 = vmul.f32 %v1066, %v1039
      %v1079 = vmul.f32 %v1069, %v1039
      %v1080 = vmul.f32 %v1072, %v1039
      %v1081 = vmul.f32 %v1075, %v1039
      %v1082 = vadd.f32 %v1076, 1e-05
      %v1083 = vadd.f32 %v1077, 1e-05
      %v1084 = vadd.f32 %v1078, 1e-05
      %v1085 = vadd.f32 %v1079, 1e-05
      %v1086 = vadd.f32 %v1080, 1e-05
      %v1087 = vadd.f32 %v1081, 1e-05
      %v1088 = vrsqrt.pop %v1082
      %v1089 = vrsqrt.pop %v1083
      %v1090 = vrsqrt.pop %v1084
      %v1091 = vrsqrt.pop %v1085
      %v1092 = vrsqrt.pop %v1086
      %v1093 = vrsqrt.pop %v1087
      %v1094 = vmul.f32 %v1046, %v1088
      %v1095 = vmul.f32 %v1047, %v1089
      %v1096 = vmul.f32 %v1048, %v1090
      %v1097 = vmul.f32 %v1049, %v1091
      %v1098 = vmul.f32 %v1050, %v1092
      %v1099 = vmul.f32 %v1051, %v1093
      %v1101 = vlaneseq
      %v1102 = vshrl.u32 %v1101, 7
      %v1103 = vsub.s32 0, %v1102
      %v1104 = vrot.slane %v1018, %v1103
      %v1106 = vmul.f32 %v1094, %v1104
      %v1107 = vmul.f32 %v1095, %v1104
      %v1108 = vmul.f32 %v1096, %v1104
      %v1109 = vmul.f32 %v1097, %v1104
      %v1110 = vmul.f32 %v1098, %v1104
      %v1111 = vmul.f32 %v1099, %v1104
      %v1113 = vlaneseq
      %v1114 = vshrl.u32 %v1113, 7
      %v1115 = vsub.s32 0, %v1114
      %v1116 = vrot.slane %v1019, %v1115
      %v1118 = vadd.f32 %v1106, %v1116
      %v1119 = vadd.f32 %v1107, %v1116
      %v1120 = vadd.f32 %v1108, %v1116
      %v1121 = vadd.f32 %v1109, %v1116
      %v1122 = vadd.f32 %v1110, %v1116
      %v1123 = vadd.f32 %v1111, %v1116
      %v1124 = vpack.c.bf16 %v1119, %v1118
      %v1125 = vpack.c.bf16 %v1121, %v1120
      %v1126 = vpack.c.bf16 %v1123, %v1122
      %v1127 = vld [vmem:[%s752] sm:$0xf]
      %v1128 = vld [vmem:[%s752 + $0x4] sm:$0xf]
      %v1129 = vld [vmem:[%s752 + $0x8] sm:$0xf]
      %v1130 = vld [vmem:[%s752 + $0xc] sm:$0xf]
      %v1131 = vld [vmem:[%s755] sm:$0x1]
      %v1133 = vlaneseq
      %v1134 = vshrl.u32 %v1133, 7
      %v1135 = vsub.s32 0, %v1134
      %v1136 = vrot.slane %v1131, %v1135
      %v1142 = vunpack.c.l.b16 %v1127
      %v1143 = vunpack.c.l.b16 %v1128
      %v1144 = vunpack.c.l.b16 %v1129
      %v1145 = vunpack.c.l.b16 %v1130
      %v1146 = vpack.c.b16 %v1143, %v1142
      %v1147 = vpack.c.b16 %v1145, %v1144
      %v1151 = vsel %vm1020, %v1124, 0
      %v1154 = vsel %vm1020, %v1125, 0
      %v1157 = vsel %vm1020, %v1126, 0
      %1159 = vmatprep.subr.bf16.mxu0 0
      %1160 = vmatpush1.bf16.msra.mxu0 %v1146
      %1161 = vmatprep.subr.bf16.mxu0 0
      %1162 = vmatpush1.bf16.msra.mxu0 %v1147
      %1163 = vmatprep.subr.bf16.mxu0 0
      %1164 = vmatpush1.bf16.msra.mxu0 0
      %1165 = vmatprep.subr.bf16.mxu0 0
      %1166 = vmatpush1.bf16.msra.mxu0 0
      %1167 = vmatprep.subr.bf16.mxu0 0
      %1168 = vmatpush1.bf16.msra.mxu0 0
      %1169 = vmatprep.subr.bf16.mxu0 0
      %1170 = vmatpush1.bf16.msra.mxu0 0
      %1171 = vmatprep.subr.bf16.mxu0 0
      %1172 = vmatpush1.bf16.msra.mxu0 0
      %1173 = vmatprep.subr.bf16.mxu0 0
      %1174 = vmatpush1.bf16.msra.mxu0 0
      %1175 = vmatprep.subr.bf16.mxu0 0
      %1176 = vmatpush1.bf16.msra.mxu0 0
      %1177 = vmatprep.subr.bf16.mxu0 0
      %1178 = vmatpush1.bf16.msra.mxu0 0
      %1179 = vmatprep.subr.bf16.mxu0 0
      %1180 = vmatpush1.bf16.msra.mxu0 0
      %1181 = vmatprep.subr.bf16.mxu0 0
      %1182 = vmatpush1.bf16.msra.mxu0 0
      %1183 = vmatprep.subr.bf16.mxu0 0
      %1184 = vmatpush1.bf16.msra.mxu0 0
      %1185 = vmatprep.subr.bf16.mxu0 0
      %1186 = vmatpush1.bf16.msra.mxu0 0
      %1187 = vmatprep.subr.bf16.mxu0 0
      %1188 = vmatpush1.bf16.msra.mxu0 0
      %1189 = vmatprep.subr.bf16.mxu0 0
      %1190 = vmatpush1.bf16.msra.mxu0 0
      %1191 = vmatprep.mubr.bf16.mxu0 0
      %1192 = vmatmul.mubr.bf16.gmra.mrb[0].mxu0 %v1151
      %v1193 = vpop.f32.mrb[0].mxu0
      %v1194 = vadd.f32 %v1136, %v1193
      %v1195 = vpop.f32.mrb[0].mxu0
      %v1196 = vpop.f32.mrb[0].mxu0
      %v1197 = vadd.f32 %v1136, %v1196
      %v1198 = vpop.f32.mrb[0].mxu0
      %1199 = vmatprep.mubr.bf16.mxu0 0
      %1200 = vmatmul.mubr.bf16.gmra.mrb[0].mxu0 %v1154
      %v1201 = vpop.f32.mrb[0].mxu0
      %v1202 = vadd.f32 %v1136, %v1201
      %v1203 = vpop.f32.mrb[0].mxu0
      %v1204 = vpop.f32.mrb[0].mxu0
      %v1205 = vadd.f32 %v1136, %v1204
      %v1206 = vpop.f32.mrb[0].mxu0
      %1207 = vmatprep.mubr.bf16.mxu0 0
      %1208 = vmatmul.mubr.bf16.gmra.mrb[0].mxu0 %v1157
      %v1209 = vpop.f32.mrb[0].mxu0
      %v1210 = vadd.f32 %v1136, %v1209
      %v1211 = vpop.f32.mrb[0].mxu0
      %v1212 = vpop.f32.mrb[0].mxu0
      %v1213 = vadd.f32 %v1136, %v1212
      %v1214 = vpop.f32.mrb[0].mxu0
      %1215 = vdwg.mxu0
      %v1216 = vpack.c.bf16 %v1197, %v1194
      %v1217 = vpack.c.bf16 %v1205, %v1202
      %v1218 = vpack.c.bf16 %v1213, %v1210
      %v1219 = vlaneseq
      %v1220 = vand.u32 %v1219, 127
      %vm1221 = vcmp.ge.s32.totalorder %v1220, 17
      %v1222 = vld [vmem:[%s760] sm:$0xf]
      %v1223 = vld [vmem:[%s760 + $0x4] sm:$0xf]
      %v1224 = vld [vmem:[%s760 + $0x8] sm:$0xf]
      %v1225 = vld [vmem:[%s760 + $0xc] sm:$0xf]
      %v1229 = vunpack.c.l.b16 %v1216
      %v1230 = vunpack.c.h.b16 %v1216
      %v1231 = vunpack.c.l.b16 %v1217
      %v1232 = vunpack.c.h.b16 %v1217
      %v1233 = vunpack.c.l.b16 %v1218
      %v1234 = vunpack.c.h.b16 %v1218
      %v1235 = vpack.c.b16 %v1230, %v1229
      %v1236 = vpack.c.b16 %v1231, %v1231
      %1237 = vrot.lane.b32.xlu0 %v1235, 96
      %v1238 = vpop.permute.xlu0 %1237
      %1239 = vrot.lane.b32.xlu0 %v1236, 96
      %v1240 = vpop.permute.xlu0 %1239
      %vm1241 = vcmask 64512
      %v1243 = vsel %vm1241, %v1235, 0
      %v1246 = vsel %vm1241, %v1236, 0
      %v1249 = vsel %vm1241, %v1238, 0
      %v1252 = vsel %vm1241, %v1240, 0
      %1254 = vmatprep.subr.bf16.mxu0 0
      %1255 = vmatpush1.bf16.xpose.msra.mxu0 %v1249
      %1256 = vmatprep.subr.bf16.mxu0 0
      %1257 = vmatpush1.bf16.xpose.msra.mxu0 %v1252
      %1258 = vmatprep.subr.bf16.mxu0 0
      %1259 = vmatpush1.bf16.xpose.msra.mxu0 0
      %1260 = vmatprep.subr.bf16.mxu0 0
      %1261 = vmatpush1.bf16.xpose.msra.mxu0 0
      %1262 = vmatprep.subr.bf16.mxu0 0
      %1263 = vmatpush1.bf16.xpose.msra.mxu0 0
      %1264 = vmatprep.subr.bf16.mxu0 0
      %1265 = vmatpush1.bf16.xpose.msra.mxu0 0
      %1266 = vmatprep.subr.bf16.mxu0 0
      %1267 = vmatpush1.bf16.xpose.msra.mxu0 0
      %1268 = vmatprep.subr.bf16.mxu0 0
      %1269 = vmatpush1.bf16.xpose.msra.mxu0 0
      %1270 = vmatprep.subr.bf16.mxu0 0
      %1271 = vmatpush1.bf16.xpose.msra.mxu0 0
      %1272 = vmatprep.subr.bf16.mxu0 0
      %1273 = vmatpush1.bf16.xpose.msra.mxu0 0
      %1274 = vmatprep.subr.bf16.mxu0 0
      %1275 = vmatpush1.bf16.xpose.msra.mxu0 0
      %1276 = vmatprep.subr.bf16.mxu0 0
      %1277 = vmatpush1.bf16.xpose.msra.mxu0 0
      %1278 = vmatprep.subr.bf16.mxu0 0
      %1279 = vmatpush1.bf16.xpose.msra.mxu0 0
      %1280 = vmatprep.subr.bf16.mxu0 0
      %1281 = vmatpush1.bf16.xpose.msra.mxu0 0
      %1282 = vmatprep.subr.bf16.mxu0 0
      %1283 = vmatpush1.bf16.xpose.msra.mxu0 0
      %1284 = vmatprep.subr.bf16.mxu0 0
      %1285 = vmatpush1.bf16.xpose.msra.mxu0 0
      %1286 = vmatprep.mubr.bf16.mxu0 0
      %1287 = vmatmul.mubr.bf16.gmra.mrb[0].mxu0 %v1243
      %v1288 = vpop.f32.mrb[0].mxu0
      %v1289 = vadd.f32 0.0, %v1288
      %v1290 = vpop.f32.mrb[0].mxu0
      %v1291 = vpop.f32.mrb[0].mxu0
      %v1292 = vadd.f32 0.0, %v1291
      %v1293 = vpop.f32.mrb[0].mxu0
      %1294 = vmatprep.mubr.bf16.mxu0 0
      %1295 = vmatmul.mubr.bf16.gmra.mrb[0].mxu0 %v1246
      %v1296 = vpop.f32.mrb[0].mxu0
      %v1297 = vadd.f32 0.0, %v1296
      %v1298 = vpop.f32.mrb[0].mxu0
      %v1299 = vpop.f32.mrb[0].mxu0
      %v1300 = vpop.f32.mrb[0].mxu0
      %1301 = vdwg.mxu0
      %v1302 = vpack.c.b16 %v1233, %v1232
      %v1303 = vpack.c.b16 %v1234, %v1234
      %1304 = vrot.lane.b32.xlu0 %v1302, 96
      %v1305 = vpop.permute.xlu0 %1304
      %1306 = vrot.lane.b32.xlu0 %v1303, 96
      %v1307 = vpop.permute.xlu0 %1306
      %v1309 = vsel %vm1241, %v1302, 0
      %v1312 = vsel %vm1241, %v1303, 0
      %v1315 = vsel %vm1241, %v1305, 0
      %v1318 = vsel %vm1241, %v1307, 0
      %1320 = vmatprep.subr.bf16.mxu0 0
      %1321 = vmatpush1.bf16.xpose.msra.mxu0 %v1315
      %1322 = vmatprep.subr.bf16.mxu0 0
      %1323 = vmatpush1.bf16.xpose.msra.mxu0 %v1318
      %1324 = vmatprep.subr.bf16.mxu0 0
      %1325 = vmatpush1.bf16.xpose.msra.mxu0 0
      %1326 = vmatprep.subr.bf16.mxu0 0
      %1327 = vmatpush1.bf16.xpose.msra.mxu0 0
      %1328 = vmatprep.subr.bf16.mxu0 0
      %1329 = vmatpush1.bf16.xpose.msra.mxu0 0
      %1330 = vmatprep.subr.bf16.mxu0 0
      %1331 = vmatpush1.bf16.xpose.msra.mxu0 0
      %1332 = vmatprep.subr.bf16.mxu0 0
      %1333 = vmatpush1.bf16.xpose.msra.mxu0 0
      %1334 = vmatprep.subr.bf16.mxu0 0
      %1335 = vmatpush1.bf16.xpose.msra.mxu0 0
      %1336 = vmatprep.subr.bf16.mxu0 0
      %1337 = vmatpush1.bf16.xpose.msra.mxu0 0
      %1338 = vmatprep.subr.bf16.mxu0 0
      %1339 = vmatpush1.bf16.xpose.msra.mxu0 0
      %1340 = vmatprep.subr.bf16.mxu0 0
      %1341 = vmatpush1.bf16.xpose.msra.mxu0 0
      %1342 = vmatprep.subr.bf16.mxu0 0
      %1343 = vmatpush1.bf16.xpose.msra.mxu0 0
      %1344 = vmatprep.subr.bf16.mxu0 0
      %1345 = vmatpush1.bf16.xpose.msra.mxu0 0
      %1346 = vmatprep.subr.bf16.mxu0 0
      %1347 = vmatpush1.bf16.xpose.msra.mxu0 0
      %1348 = vmatprep.subr.bf16.mxu0 0
      %1349 = vmatpush1.bf16.xpose.msra.mxu0 0
      %1350 = vmatprep.subr.bf16.mxu0 0
      %1351 = vmatpush1.bf16.xpose.msra.mxu0 0
      %1352 = vmatprep.mubr.bf16.mxu0 0
      %1353 = vmatmul.mubr.bf16.gmra.mrb[0].mxu0 %v1309
      %v1354 = vpop.f32.mrb[0].mxu0
      %v1355 = vadd.f32 0.0, %v1354
      %v1356 = vpop.f32.mrb[0].mxu0
      %v1357 = vpop.f32.mrb[0].mxu0
      %v1358 = vadd.f32 0.0, %v1357
      %v1359 = vpop.f32.mrb[0].mxu0
      %1360 = vmatprep.mubr.bf16.mxu0 0
      %1361 = vmatmul.mubr.bf16.gmra.mrb[0].mxu0 %v1312
      %v1362 = vpop.f32.mrb[0].mxu0
      %v1363 = vadd.f32 0.0, %v1362
      %v1364 = vpop.f32.mrb[0].mxu0
      %v1365 = vpop.f32.mrb[0].mxu0
      %v1366 = vpop.f32.mrb[0].mxu0
      %1367 = vdwg.mxu0
      %v1368 = vsel %vm1221, 1, 0
      %vm1369 = vcmp.eq.s32.totalorder %v1368, 1
      %v1370 = vsel %vm1369, -1e+30, %v1289
      %v1371 = vsel %vm1369, -1e+30, %v1292
      %v1372 = vsel %vm1369, -1e+30, %v1297
      %v1373 = vsel %vm1369, -1e+30, %v1355
      %v1374 = vsel %vm1369, -1e+30, %v1358
      %v1375 = vsel %vm1369, -1e+30, %v1363
      %vm1376 = vcmask 195584
      %v1377 = vsel %vm1376, %v1370, -inf
      %1378 = vmax.xlane.f32.xlu0 %v1377
      %v1379 = vpop.xlane.xlu0 %1378
      %v1380 = vsel %vm1376, %v1371, -inf
      %1381 = vmax.xlane.f32.xlu0 %v1380
      %v1382 = vpop.xlane.xlu0 %1381
      %v1383 = vsel %vm1376, %v1372, -inf
      %1384 = vmax.xlane.f32.xlu0 %v1383
      %v1385 = vpop.xlane.xlu0 %1384
      %v1386 = vsel %vm1376, %v1373, -inf
      %1387 = vmax.xlane.f32.xlu0 %v1386
      %v1388 = vpop.xlane.xlu0 %1387
      %v1389 = vsel %vm1376, %v1374, -inf
      %1390 = vmax.xlane.f32.xlu0 %v1389
      %v1391 = vpop.xlane.xlu0 %1390
      %v1392 = vsel %vm1376, %v1375, -inf
      %1393 = vmax.xlane.f32.xlu0 %v1392
      %v1394 = vpop.xlane.xlu0 %1393
      %v1395 = vsub.f32 %v1370, %v1379
      %v1396 = vsub.f32 %v1371, %v1382
      %v1397 = vsub.f32 %v1372, %v1385
      %v1398 = vsub.f32 %v1373, %v1388
      %v1399 = vsub.f32 %v1374, %v1391
      %v1400 = vsub.f32 %v1375, %v1394
      %v1401 = vmul.f32 %v1395, 1.442695
      %v1402 = vpow.pop %v1401
      %v1403 = vmul.f32 %v1396, 1.442695
      %v1404 = vpow.pop %v1403
      %v1405 = vmul.f32 %v1397, 1.442695
      %v1406 = vpow.pop %v1405
      %v1407 = vmul.f32 %v1398, 1.442695
      %v1408 = vpow.pop %v1407
      %v1409 = vmul.f32 %v1399, 1.442695
      %v1410 = vpow.pop %v1409
      %v1411 = vmul.f32 %v1400, 1.442695
      %v1412 = vpow.pop %v1411
      %v1413 = vsel %vm1376, %v1402, 0.0
      %1414 = vadd.xlane.f32.xlu0 %v1413
      %v1415 = vpop.xlane.xlu0 %1414
      %v1416 = vsel %vm1376, %v1404, 0.0
      %1417 = vadd.xlane.f32.xlu0 %v1416
      %v1418 = vpop.xlane.xlu0 %1417
      %v1419 = vsel %vm1376, %v1406, 0.0
      %1420 = vadd.xlane.f32.xlu0 %v1419
      %v1421 = vpop.xlane.xlu0 %1420
      %v1422 = vsel %vm1376, %v1408, 0.0
      %1423 = vadd.xlane.f32.xlu0 %v1422
      %v1424 = vpop.xlane.xlu0 %1423
      %v1425 = vsel %vm1376, %v1410, 0.0
      %1426 = vadd.xlane.f32.xlu0 %v1425
      %v1427 = vpop.xlane.xlu0 %1426
      %v1428 = vsel %vm1376, %v1412, 0.0
      %1429 = vadd.xlane.f32.xlu0 %v1428
      %v1430 = vpop.xlane.xlu0 %1429
      %v1431 = vrcp.pop %v1415
      %v1432 = vrcp.pop %v1418
      %v1433 = vrcp.pop %v1421
      %v1434 = vrcp.pop %v1424
      %v1435 = vrcp.pop %v1427
      %v1436 = vrcp.pop %v1430
      %v1437 = vmul.f32 %v1402, %v1431
      %v1438 = vmul.f32 %v1404, %v1432
      %v1439 = vmul.f32 %v1406, %v1433
      %v1440 = vmul.f32 %v1408, %v1434
      %v1441 = vmul.f32 %v1410, %v1435
      %v1442 = vmul.f32 %v1412, %v1436
      %v1443 = vpack.c.bf16 %v1438, %v1437
      %v1444 = vpack.c.bf16 %v1439, %v1439
      %v1445 = vpack.c.bf16 %v1441, %v1440
      %v1446 = vpack.c.bf16 %v1442, %v1442
      %1447 = vrot.lane.b32.xlu0 %v1235, 64
      %v1448 = vpop.permute.xlu0 %1447
      %1449 = vrot.lane.b32.xlu0 %v1236, 64
      %v1450 = vpop.permute.xlu0 %1449
      %v1453 = vsel %vm1376, %v1443, 0
      %v1456 = vsel %vm1376, %v1444, 0
      %vm1458 = vcmask 1043456
      %v1460 = vsel %vm1458, %v1450, 0
      %1462 = vmatprep.subr.bf16.mxu0 0
      %1463 = vmatpush1.bf16.msra.mxu0 %v1448
      %1464 = vmatprep.subr.bf16.mxu0 0
      %1465 = vmatpush1.bf16.msra.mxu0 %v1460
      %1466 = vmatprep.subr.bf16.mxu0 0
      %1467 = vmatpush1.bf16.msra.mxu0 0
      %1468 = vmatprep.subr.bf16.mxu0 0
      %1469 = vmatpush1.bf16.msra.mxu0 0
      %1470 = vmatprep.subr.bf16.mxu0 0
      %1471 = vmatpush1.bf16.msra.mxu0 0
      %1472 = vmatprep.subr.bf16.mxu0 0
      %1473 = vmatpush1.bf16.msra.mxu0 0
      %1474 = vmatprep.subr.bf16.mxu0 0
      %1475 = vmatpush1.bf16.msra.mxu0 0
      %1476 = vmatprep.subr.bf16.mxu0 0
      %1477 = vmatpush1.bf16.msra.mxu0 0
      %1478 = vmatprep.subr.bf16.mxu0 0
      %1479 = vmatpush1.bf16.msra.mxu0 0
      %1480 = vmatprep.subr.bf16.mxu0 0
      %1481 = vmatpush1.bf16.msra.mxu0 0
      %1482 = vmatprep.subr.bf16.mxu0 0
      %1483 = vmatpush1.bf16.msra.mxu0 0
      %1484 = vmatprep.subr.bf16.mxu0 0
      %1485 = vmatpush1.bf16.msra.mxu0 0
      %1486 = vmatprep.subr.bf16.mxu0 0
      %1487 = vmatpush1.bf16.msra.mxu0 0
      %1488 = vmatprep.subr.bf16.mxu0 0
      %1489 = vmatpush1.bf16.msra.mxu0 0
      %1490 = vmatprep.subr.bf16.mxu0 0
      %1491 = vmatpush1.bf16.msra.mxu0 0
      %1492 = vmatprep.subr.bf16.mxu0 0
      %1493 = vmatpush1.bf16.msra.mxu0 0
      %1494 = vmatprep.mubr.bf16.mxu0 0
      %1495 = vmatmul.mubr.bf16.gmra.mrb[0].mxu0 %v1453
      %v1496 = vpop.f32.mrb[0].mxu0
      %v1497 = vadd.f32 0.0, %v1496
      %v1498 = vpop.f32.mrb[0].mxu0
      %v1499 = vpop.f32.mrb[0].mxu0
      %v1500 = vadd.f32 0.0, %v1499
      %v1501 = vpop.f32.mrb[0].mxu0
      %1502 = vmatprep.mubr.bf16.mxu0 0
      %1503 = vmatmul.mubr.bf16.gmra.mrb[0].mxu0 %v1456
      %v1504 = vpop.f32.mrb[0].mxu0
      %v1505 = vadd.f32 0.0, %v1504
      %v1506 = vpop.f32.mrb[0].mxu0
      %v1507 = vpop.f32.mrb[0].mxu0
      %v1508 = vpop.f32.mrb[0].mxu0
      %1509 = vdwg.mxu0
      %1510 = vrot.lane.b32.xlu0 %v1302, 64
      %v1511 = vpop.permute.xlu0 %1510
      %1512 = vrot.lane.b32.xlu0 %v1303, 64
      %v1513 = vpop.permute.xlu0 %1512
      %v1516 = vsel %vm1376, %v1445, 0
      %v1519 = vsel %vm1376, %v1446, 0
      %v1522 = vsel %vm1458, %v1513, 0
      %1524 = vmatprep.subr.bf16.mxu0 0
      %1525 = vmatpush1.bf16.msra.mxu0 %v1511
      %1526 = vmatprep.subr.bf16.mxu0 0
      %1527 = vmatpush1.bf16.msra.mxu0 %v1522
      %1528 = vmatprep.subr.bf16.mxu0 0
      %1529 = vmatpush1.bf16.msra.mxu0 0
      %1530 = vmatprep.subr.bf16.mxu0 0
      %1531 = vmatpush1.bf16.msra.mxu0 0
      %1532 = vmatprep.subr.bf16.mxu0 0
      %1533 = vmatpush1.bf16.msra.mxu0 0
      %1534 = vmatprep.subr.bf16.mxu0 0
      %1535 = vmatpush1.bf16.msra.mxu0 0
      %1536 = vmatprep.subr.bf16.mxu0 0
      %1537 = vmatpush1.bf16.msra.mxu0 0
      %1538 = vmatprep.subr.bf16.mxu0 0
      %1539 = vmatpush1.bf16.msra.mxu0 0
      %1540 = vmatprep.subr.bf16.mxu0 0
      %1541 = vmatpush1.bf16.msra.mxu0 0
      %1542 = vmatprep.subr.bf16.mxu0 0
      %1543 = vmatpush1.bf16.msra.mxu0 0
      %1544 = vmatprep.subr.bf16.mxu0 0
      %1545 = vmatpush1.bf16.msra.mxu0 0
      %1546 = vmatprep.subr.bf16.mxu0 0
      %1547 = vmatpush1.bf16.msra.mxu0 0
      %1548 = vmatprep.subr.bf16.mxu0 0
      %1549 = vmatpush1.bf16.msra.mxu0 0
      %1550 = vmatprep.subr.bf16.mxu0 0
      %1551 = vmatpush1.bf16.msra.mxu0 0
      %1552 = vmatprep.subr.bf16.mxu0 0
      %1553 = vmatpush1.bf16.msra.mxu0 0
      %1554 = vmatprep.subr.bf16.mxu0 0
      %1555 = vmatpush1.bf16.msra.mxu0 0
      %1556 = vmatprep.mubr.bf16.mxu0 0
      %1557 = vmatmul.mubr.bf16.gmra.mrb[0].mxu0 %v1516
      %v1558 = vpop.f32.mrb[0].mxu0
      %v1559 = vadd.f32 0.0, %v1558
      %v1560 = vpop.f32.mrb[0].mxu0
      %v1561 = vpop.f32.mrb[0].mxu0
      %v1562 = vadd.f32 0.0, %v1561
      %v1563 = vpop.f32.mrb[0].mxu0
      %1564 = vmatprep.mubr.bf16.mxu0 0
      %1565 = vmatmul.mubr.bf16.gmra.mrb[0].mxu0 %v1519
      %v1566 = vpop.f32.mrb[0].mxu0
      %v1567 = vadd.f32 0.0, %v1566
      %v1568 = vpop.f32.mrb[0].mxu0
      %v1569 = vpop.f32.mrb[0].mxu0
      %v1570 = vpop.f32.mrb[0].mxu0
      %1571 = vdwg.mxu0
      %v1572 = vpack.c.bf16 %v1500, %v1497
      %v1573 = vpack.c.bf16 %v1559, %v1505
      %v1574 = vpack.c.bf16 %v1567, %v1562
      %1575 = vrot.lane.b32.xlu0 %v1235, 120
      %v1576 = vpop.permute.xlu0 %1575
      %1577 = vrot.lane.b32.xlu0 %v1236, 120
      %v1578 = vpop.permute.xlu0 %1577
      %1579 = vrot.lane.b32.xlu0 %v1235, 88
      %v1580 = vpop.permute.xlu0 %1579
      %1581 = vrot.lane.b32.xlu0 %v1236, 88
      %v1582 = vpop.permute.xlu0 %1581
      %v1584 = vsel %vm1241, %v1576, 0
      %v1587 = vsel %vm1241, %v1578, 0
      %v1590 = vsel %vm1241, %v1580, 0
      %v1593 = vsel %vm1241, %v1582, 0
      %1595 = vmatprep.subr.bf16.mxu0 0
      %1596 = vmatpush1.bf16.xpose.msra.mxu0 %v1590
      %1597 = vmatprep.subr.bf16.mxu0 0
      %1598 = vmatpush1.bf16.xpose.msra.mxu0 %v1593
      %1599 = vmatprep.subr.bf16.mxu0 0
      %1600 = vmatpush1.bf16.xpose.msra.mxu0 0
      %1601 = vmatprep.subr.bf16.mxu0 0
      %1602 = vmatpush1.bf16.xpose.msra.mxu0 0
      %1603 = vmatprep.subr.bf16.mxu0 0
      %1604 = vmatpush1.bf16.xpose.msra.mxu0 0
      %1605 = vmatprep.subr.bf16.mxu0 0
      %1606 = vmatpush1.bf16.xpose.msra.mxu0 0
      %1607 = vmatprep.subr.bf16.mxu0 0
      %1608 = vmatpush1.bf16.xpose.msra.mxu0 0
      %1609 = vmatprep.subr.bf16.mxu0 0
      %1610 = vmatpush1.bf16.xpose.msra.mxu0 0
      %1611 = vmatprep.subr.bf16.mxu0 0
      %1612 = vmatpush1.bf16.xpose.msra.mxu0 0
      %1613 = vmatprep.subr.bf16.mxu0 0
      %1614 = vmatpush1.bf16.xpose.msra.mxu0 0
      %1615 = vmatprep.subr.bf16.mxu0 0
      %1616 = vmatpush1.bf16.xpose.msra.mxu0 0
      %1617 = vmatprep.subr.bf16.mxu0 0
      %1618 = vmatpush1.bf16.xpose.msra.mxu0 0
      %1619 = vmatprep.subr.bf16.mxu0 0
      %1620 = vmatpush1.bf16.xpose.msra.mxu0 0
      %1621 = vmatprep.subr.bf16.mxu0 0
      %1622 = vmatpush1.bf16.xpose.msra.mxu0 0
      %1623 = vmatprep.subr.bf16.mxu0 0
      %1624 = vmatpush1.bf16.xpose.msra.mxu0 0
      %1625 = vmatprep.subr.bf16.mxu0 0
      %1626 = vmatpush1.bf16.xpose.msra.mxu0 0
      %1627 = vmatprep.mubr.bf16.mxu0 0
      %1628 = vmatmul.mubr.bf16.gmra.mrb[0].mxu0 %v1584
      %v1629 = vpop.f32.mrb[0].mxu0
      %v1630 = vadd.f32 0.0, %v1629
      %v1631 = vpop.f32.mrb[0].mxu0
      %v1632 = vpop.f32.mrb[0].mxu0
      %v1633 = vadd.f32 0.0, %v1632
      %v1634 = vpop.f32.mrb[0].mxu0
      %1635 = vmatprep.mubr.bf16.mxu0 0
      %1636 = vmatmul.mubr.bf16.gmra.mrb[0].mxu0 %v1587
      %v1637 = vpop.f32.mrb[0].mxu0
      %v1638 = vadd.f32 0.0, %v1637
      %v1639 = vpop.f32.mrb[0].mxu0
      %v1640 = vpop.f32.mrb[0].mxu0
      %v1641 = vpop.f32.mrb[0].mxu0
      %1642 = vdwg.mxu0
      %1643 = vrot.lane.b32.xlu0 %v1302, 120
      %v1644 = vpop.permute.xlu0 %1643
      %1645 = vrot.lane.b32.xlu0 %v1303, 120
      %v1646 = vpop.permute.xlu0 %1645
      %1647 = vrot.lane.b32.xlu0 %v1302, 88
      %v1648 = vpop.permute.xlu0 %1647
      %1649 = vrot.lane.b32.xlu0 %v1303, 88
      %v1650 = vpop.permute.xlu0 %1649
      %v1652 = vsel %vm1241, %v1644, 0
      %v1655 = vsel %vm1241, %v1646, 0
      %v1658 = vsel %vm1241, %v1648, 0
      %v1661 = vsel %vm1241, %v1650, 0
      %1663 = vmatprep.subr.bf16.mxu0 0
      %1664 = vmatpush1.bf16.xpose.msra.mxu0 %v1658
      %1665 = vmatprep.subr.bf16.mxu0 0
      %1666 = vmatpush1.bf16.xpose.msra.mxu0 %v1661
      %1667 = vmatprep.subr.bf16.mxu0 0
      %1668 = vmatpush1.bf16.xpose.msra.mxu0 0
      %1669 = vmatprep.subr.bf16.mxu0 0
      %1670 = vmatpush1.bf16.xpose.msra.mxu0 0
      %1671 = vmatprep.subr.bf16.mxu0 0
      %1672 = vmatpush1.bf16.xpose.msra.mxu0 0
      %1673 = vmatprep.subr.bf16.mxu0 0
      %1674 = vmatpush1.bf16.xpose.msra.mxu0 0
      %1675 = vmatprep.subr.bf16.mxu0 0
      %1676 = vmatpush1.bf16.xpose.msra.mxu0 0
      %1677 = vmatprep.subr.bf16.mxu0 0
      %1678 = vmatpush1.bf16.xpose.msra.mxu0 0
      %1679 = vmatprep.subr.bf16.mxu0 0
      %1680 = vmatpush1.bf16.xpose.msra.mxu0 0
      %1681 = vmatprep.subr.bf16.mxu0 0
      %1682 = vmatpush1.bf16.xpose.msra.mxu0 0
      %1683 = vmatprep.subr.bf16.mxu0 0
      %1684 = vmatpush1.bf16.xpose.msra.mxu0 0
      %1685 = vmatprep.subr.bf16.mxu0 0
      %1686 = vmatpush1.bf16.xpose.msra.mxu0 0
      %1687 = vmatprep.subr.bf16.mxu0 0
      %1688 = vmatpush1.bf16.xpose.msra.mxu0 0
      %1689 = vmatprep.subr.bf16.mxu0 0
      %1690 = vmatpush1.bf16.xpose.msra.mxu0 0
      %1691 = vmatprep.subr.bf16.mxu0 0
      %1692 = vmatpush1.bf16.xpose.msra.mxu0 0
      %1693 = vmatprep.subr.bf16.mxu0 0
      %1694 = vmatpush1.bf16.xpose.msra.mxu0 0
      %1695 = vmatprep.mubr.bf16.mxu0 0
      %1696 = vmatmul.mubr.bf16.gmra.mrb[0].mxu0 %v1652
      %v1697 = vpop.f32.mrb[0].mxu0
      %v1698 = vadd.f32 0.0, %v1697
      %v1699 = vpop.f32.mrb[0].mxu0
      %v1700 = vpop.f32.mrb[0].mxu0
      %v1701 = vadd.f32 0.0, %v1700
      %v1702 = vpop.f32.mrb[0].mxu0
      %1703 = vmatprep.mubr.bf16.mxu0 0
      %1704 = vmatmul.mubr.bf16.gmra.mrb[0].mxu0 %v1655
      %v1705 = vpop.f32.mrb[0].mxu0
      %v1706 = vadd.f32 0.0, %v1705
      %v1707 = vpop.f32.mrb[0].mxu0
      %v1708 = vpop.f32.mrb[0].mxu0
      %v1709 = vpop.f32.mrb[0].mxu0
      %1710 = vdwg.mxu0
      %v1711 = vsel %vm1369, -1e+30, %v1630
      %v1712 = vsel %vm1369, -1e+30, %v1633
      %v1713 = vsel %vm1369, -1e+30, %v1638
      %v1714 = vsel %vm1369, -1e+30, %v1698
      %v1715 = vsel %vm1369, -1e+30, %v1701
      %v1716 = vsel %vm1369, -1e+30, %v1706
      %v1717 = vsel %vm1376, %v1711, -inf
      %1718 = vmax.xlane.f32.xlu0 %v1717
      %v1719 = vpop.xlane.xlu0 %1718
      %v1720 = vsel %vm1376, %v1712, -inf
      %1721 = vmax.xlane.f32.xlu0 %v1720
      %v1722 = vpop.xlane.xlu0 %1721
      %v1723 = vsel %vm1376, %v1713, -inf
      %1724 = vmax.xlane.f32.xlu0 %v1723
      %v1725 = vpop.xlane.xlu0 %1724
      %v1726 = vsel %vm1376, %v1714, -inf
      %1727 = vmax.xlane.f32.xlu0 %v1726
      %v1728 = vpop.xlane.xlu0 %1727
      %v1729 = vsel %vm1376, %v1715, -inf
      %1730 = vmax.xlane.f32.xlu0 %v1729
      %v1731 = vpop.xlane.xlu0 %1730
      %v1732 = vsel %vm1376, %v1716, -inf
      %1733 = vmax.xlane.f32.xlu0 %v1732
      %v1734 = vpop.xlane.xlu0 %1733
      %v1735 = vsub.f32 %v1711, %v1719
      %v1736 = vsub.f32 %v1712, %v1722
      %v1737 = vsub.f32 %v1713, %v1725
      %v1738 = vsub.f32 %v1714, %v1728
      %v1739 = vsub.f32 %v1715, %v1731
      %v1740 = vsub.f32 %v1716, %v1734
      %v1741 = vmul.f32 %v1735, 1.442695
      %v1742 = vpow.pop %v1741
      %v1743 = vmul.f32 %v1736, 1.442695
      %v1744 = vpow.pop %v1743
      %v1745 = vmul.f32 %v1737, 1.442695
      %v1746 = vpow.pop %v1745
      %v1747 = vmul.f32 %v1738, 1.442695
      %v1748 = vpow.pop %v1747
      %v1749 = vmul.f32 %v1739, 1.442695
      %v1750 = vpow.pop %v1749
      %v1751 = vmul.f32 %v1740, 1.442695
      %v1752 = vpow.pop %v1751
      %v1753 = vsel %vm1376, %v1742, 0.0
      %1754 = vadd.xlane.f32.xlu0 %v1753
      %v1755 = vpop.xlane.xlu0 %1754
      %v1756 = vsel %vm1376, %v1744, 0.0
      %1757 = vadd.xlane.f32.xlu0 %v1756
      %v1758 = vpop.xlane.xlu0 %1757
      %v1759 = vsel %vm1376, %v1746, 0.0
      %1760 = vadd.xlane.f32.xlu0 %v1759
      %v1761 = vpop.xlane.xlu0 %1760
      %v1762 = vsel %vm1376, %v1748, 0.0
      %1763 = vadd.xlane.f32.xlu0 %v1762
      %v1764 = vpop.xlane.xlu0 %1763
      %v1765 = vsel %vm1376, %v1750, 0.0
      %1766 = vadd.xlane.f32.xlu0 %v1765
      %v1767 = vpop.xlane.xlu0 %1766
      %v1768 = vsel %vm1376, %v1752, 0.0
      %1769 = vadd.xlane.f32.xlu0 %v1768
      %v1770 = vpop.xlane.xlu0 %1769
      %v1771 = vrcp.pop %v1755
      %v1772 = vrcp.pop %v1758
      %v1773 = vrcp.pop %v1761
      %v1774 = vrcp.pop %v1764
      %v1775 = vrcp.pop %v1767
      %v1776 = vrcp.pop %v1770
      %v1777 = vmul.f32 %v1742, %v1771
      %v1778 = vmul.f32 %v1744, %v1772
      %v1779 = vmul.f32 %v1746, %v1773
      %v1780 = vmul.f32 %v1748, %v1774
      %v1781 = vmul.f32 %v1750, %v1775
      %v1782 = vmul.f32 %v1752, %v1776
      %v1783 = vpack.c.bf16 %v1778, %v1777
      %v1784 = vpack.c.bf16 %v1779, %v1779
      %v1785 = vpack.c.bf16 %v1781, %v1780
      %v1786 = vpack.c.bf16 %v1782, %v1782
      %1787 = vrot.lane.b32.xlu0 %v1235, 56
      %v1788 = vpop.permute.xlu0 %1787
      %1789 = vrot.lane.b32.xlu0 %v1236, 56
      %v1790 = vpop.permute.xlu0 %1789
      %v1793 = vsel %vm1376, %v1783, 0
      %v1796 = vsel %vm1376, %v1784, 0
      %v1799 = vsel %vm1458, %v1790, 0
      %1801 = vmatprep.subr.bf16.mxu0 0
      %1802 = vmatpush1.bf16.msra.mxu0 %v1788
      %1803 = vmatprep.subr.bf16.mxu0 0
      %1804 = vmatpush1.bf16.msra.mxu0 %v1799
      %1805 = vmatprep.subr.bf16.mxu0 0
      %1806 = vmatpush1.bf16.msra.mxu0 0
      %1807 = vmatprep.subr.bf16.mxu0 0
      %1808 = vmatpush1.bf16.msra.mxu0 0
      %1809 = vmatprep.subr.bf16.mxu0 0
      %1810 = vmatpush1.bf16.msra.mxu0 0
      %1811 = vmatprep.subr.bf16.mxu0 0
      %1812 = vmatpush1.bf16.msra.mxu0 0
      %1813 = vmatprep.subr.bf16.mxu0 0
      %1814 = vmatpush1.bf16.msra.mxu0 0
      %1815 = vmatprep.subr.bf16.mxu0 0
      %1816 = vmatpush1.bf16.msra.mxu0 0
      %1817 = vmatprep.subr.bf16.mxu0 0
      %1818 = vmatpush1.bf16.msra.mxu0 0
      %1819 = vmatprep.subr.bf16.mxu0 0
      %1820 = vmatpush1.bf16.msra.mxu0 0
      %1821 = vmatprep.subr.bf16.mxu0 0
      %1822 = vmatpush1.bf16.msra.mxu0 0
      %1823 = vmatprep.subr.bf16.mxu0 0
      %1824 = vmatpush1.bf16.msra.mxu0 0
      %1825 = vmatprep.subr.bf16.mxu0 0
      %1826 = vmatpush1.bf16.msra.mxu0 0
      %1827 = vmatprep.subr.bf16.mxu0 0
      %1828 = vmatpush1.bf16.msra.mxu0 0
      %1829 = vmatprep.subr.bf16.mxu0 0
      %1830 = vmatpush1.bf16.msra.mxu0 0
      %1831 = vmatprep.subr.bf16.mxu0 0
      %1832 = vmatpush1.bf16.msra.mxu0 0
      %1833 = vmatprep.mubr.bf16.mxu0 0
      %1834 = vmatmul.mubr.bf16.gmra.mrb[0].mxu0 %v1793
      %v1835 = vpop.f32.mrb[0].mxu0
      %v1836 = vadd.f32 0.0, %v1835
      %v1837 = vpop.f32.mrb[0].mxu0
      %v1838 = vpop.f32.mrb[0].mxu0
      %v1839 = vadd.f32 0.0, %v1838
      %v1840 = vpop.f32.mrb[0].mxu0
      %1841 = vmatprep.mubr.bf16.mxu0 0
      %1842 = vmatmul.mubr.bf16.gmra.mrb[0].mxu0 %v1796
      %v1843 = vpop.f32.mrb[0].mxu0
      %v1844 = vadd.f32 0.0, %v1843
      %v1845 = vpop.f32.mrb[0].mxu0
      %v1846 = vpop.f32.mrb[0].mxu0
      %v1847 = vpop.f32.mrb[0].mxu0
      %1848 = vdwg.mxu0
      %1849 = vrot.lane.b32.xlu0 %v1302, 56
      %v1850 = vpop.permute.xlu0 %1849
      %1851 = vrot.lane.b32.xlu0 %v1303, 56
      %v1852 = vpop.permute.xlu0 %1851
      %v1855 = vsel %vm1376, %v1785, 0
      %v1858 = vsel %vm1376, %v1786, 0
      %v1861 = vsel %vm1458, %v1852, 0
      %1863 = vmatprep.subr.bf16.mxu0 0
      %1864 = vmatpush1.bf16.msra.mxu0 %v1850
      %1865 = vmatprep.subr.bf16.mxu0 0
      %1866 = vmatpush1.bf16.msra.mxu0 %v1861
      %1867 = vmatprep.subr.bf16.mxu0 0
      %1868 = vmatpush1.bf16.msra.mxu0 0
      %1869 = vmatprep.subr.bf16.mxu0 0
      %1870 = vmatpush1.bf16.msra.mxu0 0
      %1871 = vmatprep.subr.bf16.mxu0 0
      %1872 = vmatpush1.bf16.msra.mxu0 0
      %1873 = vmatprep.subr.bf16.mxu0 0
      %1874 = vmatpush1.bf16.msra.mxu0 0
      %1875 = vmatprep.subr.bf16.mxu0 0
      %1876 = vmatpush1.bf16.msra.mxu0 0
      %1877 = vmatprep.subr.bf16.mxu0 0
      %1878 = vmatpush1.bf16.msra.mxu0 0
      %1879 = vmatprep.subr.bf16.mxu0 0
      %1880 = vmatpush1.bf16.msra.mxu0 0
      %1881 = vmatprep.subr.bf16.mxu0 0
      %1882 = vmatpush1.bf16.msra.mxu0 0
      %1883 = vmatprep.subr.bf16.mxu0 0
      %1884 = vmatpush1.bf16.msra.mxu0 0
      %1885 = vmatprep.subr.bf16.mxu0 0
      %1886 = vmatpush1.bf16.msra.mxu0 0
      %1887 = vmatprep.subr.bf16.mxu0 0
      %1888 = vmatpush1.bf16.msra.mxu0 0
      %1889 = vmatprep.subr.bf16.mxu0 0
      %1890 = vmatpush1.bf16.msra.mxu0 0
      %1891 = vmatprep.subr.bf16.mxu0 0
      %1892 = vmatpush1.bf16.msra.mxu0 0
      %1893 = vmatprep.subr.bf16.mxu0 0
      %1894 = vmatpush1.bf16.msra.mxu0 0
      %1895 = vmatprep.mubr.bf16.mxu0 0
      %1896 = vmatmul.mubr.bf16.gmra.mrb[0].mxu0 %v1855
      %v1897 = vpop.f32.mrb[0].mxu0
      %v1898 = vadd.f32 0.0, %v1897
      %v1899 = vpop.f32.mrb[0].mxu0
      %v1900 = vpop.f32.mrb[0].mxu0
      %v1901 = vadd.f32 0.0, %v1900
      %v1902 = vpop.f32.mrb[0].mxu0
      %1903 = vmatprep.mubr.bf16.mxu0 0
      %1904 = vmatmul.mubr.bf16.gmra.mrb[0].mxu0 %v1858
      %v1905 = vpop.f32.mrb[0].mxu0
      %v1906 = vadd.f32 0.0, %v1905
      %v1907 = vpop.f32.mrb[0].mxu0
      %v1908 = vpop.f32.mrb[0].mxu0
      %v1909 = vpop.f32.mrb[0].mxu0
      %1910 = vdwg.mxu0
      %v1911 = vpack.c.bf16 %v1839, %v1836
      %v1912 = vpack.c.bf16 %v1898, %v1844
      %v1913 = vpack.c.bf16 %v1906, %v1901
      %v1915 = vsel %vm1241, %v1911, 0
      %v1918 = vsel %vm1241, %v1912, 0
      %v1921 = vsel %vm1241, %v1913, 0
      %v1924 = vsel %vm1458, %v1223, 0
      %1926 = vmatprep.subr.bf16.mxu0 0
      %1927 = vmatpush1.bf16.msra.mxu0 %v1924
      %1928 = vmatprep.subr.bf16.mxu0 0
      %1929 = vmatpush1.bf16.msra.mxu0 0
      %1930 = vmatprep.subr.bf16.mxu0 0
      %1931 = vmatpush1.bf16.msra.mxu0 0
      %1932 = vmatprep.subr.bf16.mxu0 0
      %1933 = vmatpush1.bf16.msra.mxu0 0
      %1934 = vmatprep.subr.bf16.mxu0 0
      %1935 = vmatpush1.bf16.msra.mxu0 0
      %1936 = vmatprep.subr.bf16.mxu0 0
      %1937 = vmatpush1.bf16.msra.mxu0 0
      %1938 = vmatprep.subr.bf16.mxu0 0
      %1939 = vmatpush1.bf16.msra.mxu0 0
      %1940 = vmatprep.subr.bf16.mxu0 0
      %1941 = vmatpush1.bf16.msra.mxu0 0
      %1942 = vmatprep.subr.bf16.mxu0 0
      %1943 = vmatpush1.bf16.msra.mxu0 0
      %1944 = vmatprep.subr.bf16.mxu0 0
      %1945 = vmatpush1.bf16.msra.mxu0 0
      %1946 = vmatprep.subr.bf16.mxu0 0
      %1947 = vmatpush1.bf16.msra.mxu0 0
      %1948 = vmatprep.subr.bf16.mxu0 0
      %1949 = vmatpush1.bf16.msra.mxu0 0
      %1950 = vmatprep.subr.bf16.mxu0 0
      %1951 = vmatpush1.bf16.msra.mxu0 0
      %1952 = vmatprep.subr.bf16.mxu0 0
      %1953 = vmatpush1.bf16.msra.mxu0 0
      %1954 = vmatprep.subr.bf16.mxu0 0
      %1955 = vmatpush1.bf16.msra.mxu0 0
      %1956 = vmatprep.subr.bf16.mxu0 0
      %1957 = vmatpush1.bf16.msra.mxu0 0
      %1958 = vmatprep.mubr.bf16.mxu0 0
      %1959 = vmatmul.mubr.bf16.gmra.mrb[0].mxu0 %v1915
      %v1960 = vpop.f32.mrb[0].mxu0
      %v1961 = vadd.f32 0.0, %v1960
      %v1962 = vpop.f32.mrb[0].mxu0
      %v1963 = vpop.f32.mrb[0].mxu0
      %v1964 = vadd.f32 0.0, %v1963
      %v1965 = vpop.f32.mrb[0].mxu0
      %1966 = vmatprep.mubr.bf16.mxu0 0
      %1967 = vmatmul.mubr.bf16.gmra.mrb[0].mxu0 %v1918
      %v1968 = vpop.f32.mrb[0].mxu0
      %v1969 = vadd.f32 0.0, %v1968
      %v1970 = vpop.f32.mrb[0].mxu0
      %v1971 = vpop.f32.mrb[0].mxu0
      %v1972 = vadd.f32 0.0, %v1971
      %v1973 = vpop.f32.mrb[0].mxu0
      %1974 = vmatprep.mubr.bf16.mxu0 0
      %1975 = vmatmul.mubr.bf16.gmra.mrb[0].mxu0 %v1921
      %v1976 = vpop.f32.mrb[0].mxu0
      %v1977 = vadd.f32 0.0, %v1976
      %v1978 = vpop.f32.mrb[0].mxu0
      %v1979 = vpop.f32.mrb[0].mxu0
      %v1980 = vadd.f32 0.0, %v1979
      %v1981 = vpop.f32.mrb[0].mxu0
      %1982 = vdwg.mxu0
      %v1984 = vsel %vm1241, %v1572, 0
      %v1987 = vsel %vm1241, %v1573, 0
      %v1990 = vsel %vm1241, %v1574, 0
      %v1993 = vsel %vm1458, %v1222, 0
      %1995 = vmatprep.subr.bf16.mxu0 0
      %1996 = vmatpush1.bf16.msra.mxu0 %v1993
      %1997 = vmatprep.subr.bf16.mxu0 0
      %1998 = vmatpush1.bf16.msra.mxu0 0
      %1999 = vmatprep.subr.bf16.mxu0 0
      %2000 = vmatpush1.bf16.msra.mxu0 0
      %2001 = vmatprep.subr.bf16.mxu0 0
      %2002 = vmatpush1.bf16.msra.mxu0 0
      %2003 = vmatprep.subr.bf16.mxu0 0
      %2004 = vmatpush1.bf16.msra.mxu0 0
      %2005 = vmatprep.subr.bf16.mxu0 0
      %2006 = vmatpush1.bf16.msra.mxu0 0
      %2007 = vmatprep.subr.bf16.mxu0 0
      %2008 = vmatpush1.bf16.msra.mxu0 0
      %2009 = vmatprep.subr.bf16.mxu0 0
      %2010 = vmatpush1.bf16.msra.mxu0 0
      %2011 = vmatprep.subr.bf16.mxu0 0
      %2012 = vmatpush1.bf16.msra.mxu0 0
      %2013 = vmatprep.subr.bf16.mxu0 0
      %2014 = vmatpush1.bf16.msra.mxu0 0
      %2015 = vmatprep.subr.bf16.mxu0 0
      %2016 = vmatpush1.bf16.msra.mxu0 0
      %2017 = vmatprep.subr.bf16.mxu0 0
      %2018 = vmatpush1.bf16.msra.mxu0 0
      %2019 = vmatprep.subr.bf16.mxu0 0
      %2020 = vmatpush1.bf16.msra.mxu0 0
      %2021 = vmatprep.subr.bf16.mxu0 0
      %2022 = vmatpush1.bf16.msra.mxu0 0
      %2023 = vmatprep.subr.bf16.mxu0 0
      %2024 = vmatpush1.bf16.msra.mxu0 0
      %2025 = vmatprep.subr.bf16.mxu0 0
      %2026 = vmatpush1.bf16.msra.mxu0 0
      %2027 = vmatprep.mubr.bf16.mxu0 0
      %2028 = vmatmul.mubr.bf16.gmra.mrb[0].mxu0 %v1984
      %v2029 = vpop.f32.mrb[0].mxu0
      %v2030 = vadd.f32 %v1961, %v2029
      %v2031 = vpop.f32.mrb[0].mxu0
      %v2032 = vpop.f32.mrb[0].mxu0
      %v2033 = vadd.f32 %v1964, %v2032
      %v2034 = vpop.f32.mrb[0].mxu0
      %2035 = vmatprep.mubr.bf16.mxu0 0
      %2036 = vmatmul.mubr.bf16.gmra.mrb[0].mxu0 %v1987
      %v2037 = vpop.f32.mrb[0].mxu0
      %v2038 = vadd.f32 %v1969, %v2037
      %v2039 = vpop.f32.mrb[0].mxu0
      %v2040 = vpop.f32.mrb[0].mxu0
      %v2041 = vadd.f32 %v1972, %v2040
      %v2042 = vpop.f32.mrb[0].mxu0
      %2043 = vmatprep.mubr.bf16.mxu0 0
      %2044 = vmatmul.mubr.bf16.gmra.mrb[0].mxu0 %v1990
      %v2045 = vpop.f32.mrb[0].mxu0
      %v2046 = vadd.f32 %v1977, %v2045
      %v2047 = vpop.f32.mrb[0].mxu0
      %v2048 = vpop.f32.mrb[0].mxu0
      %v2049 = vadd.f32 %v1980, %v2048
      %v2050 = vpop.f32.mrb[0].mxu0
      %2051 = vdwg.mxu0
      %2052 = vrot.lane.b32.xlu0 %v1235, 112
      %v2053 = vpop.permute.xlu0 %2052
      %2054 = vrot.lane.b32.xlu0 %v1236, 112
      %v2055 = vpop.permute.xlu0 %2054
      %2056 = vrot.lane.b32.xlu0 %v1235, 80
      %v2057 = vpop.permute.xlu0 %2056
      %2058 = vrot.lane.b32.xlu0 %v1236, 80
      %v2059 = vpop.permute.xlu0 %2058
      %v2061 = vsel %vm1241, %v2053, 0
      %v2064 = vsel %vm1241, %v2055, 0
      %v2067 = vsel %vm1241, %v2057, 0
      %v2070 = vsel %vm1241, %v2059, 0
      %2072 = vmatprep.subr.bf16.mxu0 0
      %2073 = vmatpush1.bf16.xpose.msra.mxu0 %v2067
      %2074 = vmatprep.subr.bf16.mxu0 0
      %2075 = vmatpush1.bf16.xpose.msra.mxu0 %v2070
      %2076 = vmatprep.subr.bf16.mxu0 0
      %2077 = vmatpush1.bf16.xpose.msra.mxu0 0
      %2078 = vmatprep.subr.bf16.mxu0 0
      %2079 = vmatpush1.bf16.xpose.msra.mxu0 0
      %2080 = vmatprep.subr.bf16.mxu0 0
      %2081 = vmatpush1.bf16.xpose.msra.mxu0 0
      %2082 = vmatprep.subr.bf16.mxu0 0
      %2083 = vmatpush1.bf16.xpose.msra.mxu0 0
      %2084 = vmatprep.subr.bf16.mxu0 0
      %2085 = vmatpush1.bf16.xpose.msra.mxu0 0
      %2086 = vmatprep.subr.bf16.mxu0 0
      %2087 = vmatpush1.bf16.xpose.msra.mxu0 0
      %2088 = vmatprep.subr.bf16.mxu0 0
      %2089 = vmatpush1.bf16.xpose.msra.mxu0 0
      %2090 = vmatprep.subr.bf16.mxu0 0
      %2091 = vmatpush1.bf16.xpose.msra.mxu0 0
      %2092 = vmatprep.subr.bf16.mxu0 0
      %2093 = vmatpush1.bf16.xpose.msra.mxu0 0
      %2094 = vmatprep.subr.bf16.mxu0 0
      %2095 = vmatpush1.bf16.xpose.msra.mxu0 0
      %2096 = vmatprep.subr.bf16.mxu0 0
      %2097 = vmatpush1.bf16.xpose.msra.mxu0 0
      %2098 = vmatprep.subr.bf16.mxu0 0
      %2099 = vmatpush1.bf16.xpose.msra.mxu0 0
      %2100 = vmatprep.subr.bf16.mxu0 0
      %2101 = vmatpush1.bf16.xpose.msra.mxu0 0
      %2102 = vmatprep.subr.bf16.mxu0 0
      %2103 = vmatpush1.bf16.xpose.msra.mxu0 0
      %2104 = vmatprep.mubr.bf16.mxu0 0
      %2105 = vmatmul.mubr.bf16.gmra.mrb[0].mxu0 %v2061
      %v2106 = vpop.f32.mrb[0].mxu0
      %v2107 = vadd.f32 0.0, %v2106
      %v2108 = vpop.f32.mrb[0].mxu0
      %v2109 = vpop.f32.mrb[0].mxu0
      %v2110 = vadd.f32 0.0, %v2109
      %v2111 = vpop.f32.mrb[0].mxu0
      %2112 = vmatprep.mubr.bf16.mxu0 0
      %2113 = vmatmul.mubr.bf16.gmra.mrb[0].mxu0 %v2064
      %v2114 = vpop.f32.mrb[0].mxu0
      %v2115 = vadd.f32 0.0, %v2114
      %v2116 = vpop.f32.mrb[0].mxu0
      %v2117 = vpop.f32.mrb[0].mxu0
      %v2118 = vpop.f32.mrb[0].mxu0
      %2119 = vdwg.mxu0
      %2120 = vrot.lane.b32.xlu0 %v1302, 112
      %v2121 = vpop.permute.xlu0 %2120
      %2122 = vrot.lane.b32.xlu0 %v1303, 112
      %v2123 = vpop.permute.xlu0 %2122
      %2124 = vrot.lane.b32.xlu0 %v1302, 80
      %v2125 = vpop.permute.xlu0 %2124
      %2126 = vrot.lane.b32.xlu0 %v1303, 80
      %v2127 = vpop.permute.xlu0 %2126
      %v2129 = vsel %vm1241, %v2121, 0
      %v2132 = vsel %vm1241, %v2123, 0
      %v2135 = vsel %vm1241, %v2125, 0
      %v2138 = vsel %vm1241, %v2127, 0
      %2140 = vmatprep.subr.bf16.mxu0 0
      %2141 = vmatpush1.bf16.xpose.msra.mxu0 %v2135
      %2142 = vmatprep.subr.bf16.mxu0 0
      %2143 = vmatpush1.bf16.xpose.msra.mxu0 %v2138
      %2144 = vmatprep.subr.bf16.mxu0 0
      %2145 = vmatpush1.bf16.xpose.msra.mxu0 0
      %2146 = vmatprep.subr.bf16.mxu0 0
      %2147 = vmatpush1.bf16.xpose.msra.mxu0 0
      %2148 = vmatprep.subr.bf16.mxu0 0
      %2149 = vmatpush1.bf16.xpose.msra.mxu0 0
      %2150 = vmatprep.subr.bf16.mxu0 0
      %2151 = vmatpush1.bf16.xpose.msra.mxu0 0
      %2152 = vmatprep.subr.bf16.mxu0 0
      %2153 = vmatpush1.bf16.xpose.msra.mxu0 0
      %2154 = vmatprep.subr.bf16.mxu0 0
      %2155 = vmatpush1.bf16.xpose.msra.mxu0 0
      %2156 = vmatprep.subr.bf16.mxu0 0
      %2157 = vmatpush1.bf16.xpose.msra.mxu0 0
      %2158 = vmatprep.subr.bf16.mxu0 0
      %2159 = vmatpush1.bf16.xpose.msra.mxu0 0
      %2160 = vmatprep.subr.bf16.mxu0 0
      %2161 = vmatpush1.bf16.xpose.msra.mxu0 0
      %2162 = vmatprep.subr.bf16.mxu0 0
      %2163 = vmatpush1.bf16.xpose.msra.mxu0 0
      %2164 = vmatprep.subr.bf16.mxu0 0
      %2165 = vmatpush1.bf16.xpose.msra.mxu0 0
      %2166 = vmatprep.subr.bf16.mxu0 0
      %2167 = vmatpush1.bf16.xpose.msra.mxu0 0
      %2168 = vmatprep.subr.bf16.mxu0 0
      %2169 = vmatpush1.bf16.xpose.msra.mxu0 0
      %2170 = vmatprep.subr.bf16.mxu0 0
      %2171 = vmatpush1.bf16.xpose.msra.mxu0 0
      %2172 = vmatprep.mubr.bf16.mxu0 0
      %2173 = vmatmul.mubr.bf16.gmra.mrb[0].mxu0 %v2129
      %v2174 = vpop.f32.mrb[0].mxu0
      %v2175 = vadd.f32 0.0, %v2174
      %v2176 = vpop.f32.mrb[0].mxu0
      %v2177 = vpop.f32.mrb[0].mxu0
      %v2178 = vadd.f32 0.0, %v2177
      %v2179 = vpop.f32.mrb[0].mxu0
      %2180 = vmatprep.mubr.bf16.mxu0 0
      %2181 = vmatmul.mubr.bf16.gmra.mrb[0].mxu0 %v2132
      %v2182 = vpop.f32.mrb[0].mxu0
      %v2183 = vadd.f32 0.0, %v2182
      %v2184 = vpop.f32.mrb[0].mxu0
      %v2185 = vpop.f32.mrb[0].mxu0
      %v2186 = vpop.f32.mrb[0].mxu0
      %2187 = vdwg.mxu0
      %v2188 = vsel %vm1369, -1e+30, %v2107
      %v2189 = vsel %vm1369, -1e+30, %v2110
      %v2190 = vsel %vm1369, -1e+30, %v2115
      %v2191 = vsel %vm1369, -1e+30, %v2175
      %v2192 = vsel %vm1369, -1e+30, %v2178
      %v2193 = vsel %vm1369, -1e+30, %v2183
      %v2194 = vsel %vm1376, %v2188, -inf
      %2195 = vmax.xlane.f32.xlu0 %v2194
      %v2196 = vpop.xlane.xlu0 %2195
      %v2197 = vsel %vm1376, %v2189, -inf
      %2198 = vmax.xlane.f32.xlu0 %v2197
      %v2199 = vpop.xlane.xlu0 %2198
      %v2200 = vsel %vm1376, %v2190, -inf
      %2201 = vmax.xlane.f32.xlu0 %v2200
      %v2202 = vpop.xlane.xlu0 %2201
      %v2203 = vsel %vm1376, %v2191, -inf
      %2204 = vmax.xlane.f32.xlu0 %v2203
      %v2205 = vpop.xlane.xlu0 %2204
      %v2206 = vsel %vm1376, %v2192, -inf
      %2207 = vmax.xlane.f32.xlu0 %v2206
      %v2208 = vpop.xlane.xlu0 %2207
      %v2209 = vsel %vm1376, %v2193, -inf
      %2210 = vmax.xlane.f32.xlu0 %v2209
      %v2211 = vpop.xlane.xlu0 %2210
      %v2212 = vsub.f32 %v2188, %v2196
      %v2213 = vsub.f32 %v2189, %v2199
      %v2214 = vsub.f32 %v2190, %v2202
      %v2215 = vsub.f32 %v2191, %v2205
      %v2216 = vsub.f32 %v2192, %v2208
      %v2217 = vsub.f32 %v2193, %v2211
      %v2218 = vmul.f32 %v2212, 1.442695
      %v2219 = vpow.pop %v2218
      %v2220 = vmul.f32 %v2213, 1.442695
      %v2221 = vpow.pop %v2220
      %v2222 = vmul.f32 %v2214, 1.442695
      %v2223 = vpow.pop %v2222
      %v2224 = vmul.f32 %v2215, 1.442695
      %v2225 = vpow.pop %v2224
      %v2226 = vmul.f32 %v2216, 1.442695
      %v2227 = vpow.pop %v2226
      %v2228 = vmul.f32 %v2217, 1.442695
      %v2229 = vpow.pop %v2228
      %v2230 = vsel %vm1376, %v2219, 0.0
      %2231 = vadd.xlane.f32.xlu0 %v2230
      %v2232 = vpop.xlane.xlu0 %2231
      %v2233 = vsel %vm1376, %v2221, 0.0
      %2234 = vadd.xlane.f32.xlu0 %v2233
      %v2235 = vpop.xlane.xlu0 %2234
      %v2236 = vsel %vm1376, %v2223, 0.0
      %2237 = vadd.xlane.f32.xlu0 %v2236
      %v2238 = vpop.xlane.xlu0 %2237
      %v2239 = vsel %vm1376, %v2225, 0.0
      %2240 = vadd.xlane.f32.xlu0 %v2239
      %v2241 = vpop.xlane.xlu0 %2240
      %v2242 = vsel %vm1376, %v2227, 0.0
      %2243 = vadd.xlane.f32.xlu0 %v2242
      %v2244 = vpop.xlane.xlu0 %2243
      %v2245 = vsel %vm1376, %v2229, 0.0
      %2246 = vadd.xlane.f32.xlu0 %v2245
      %v2247 = vpop.xlane.xlu0 %2246
      %v2248 = vrcp.pop %v2232
      %v2249 = vrcp.pop %v2235
      %v2250 = vrcp.pop %v2238
      %v2251 = vrcp.pop %v2241
      %v2252 = vrcp.pop %v2244
      %v2253 = vrcp.pop %v2247
      %v2254 = vmul.f32 %v2219, %v2248
      %v2255 = vmul.f32 %v2221, %v2249
      %v2256 = vmul.f32 %v2223, %v2250
      %v2257 = vmul.f32 %v2225, %v2251
      %v2258 = vmul.f32 %v2227, %v2252
      %v2259 = vmul.f32 %v2229, %v2253
      %v2260 = vpack.c.bf16 %v2255, %v2254
      %v2261 = vpack.c.bf16 %v2256, %v2256
      %v2262 = vpack.c.bf16 %v2258, %v2257
      %v2263 = vpack.c.bf16 %v2259, %v2259
      %2264 = vrot.lane.b32.xlu0 %v1235, 48
      %v2265 = vpop.permute.xlu0 %2264
      %2266 = vrot.lane.b32.xlu0 %v1236, 48
      %v2267 = vpop.permute.xlu0 %2266
      %v2270 = vsel %vm1376, %v2260, 0
      %v2273 = vsel %vm1376, %v2261, 0
      %v2276 = vsel %vm1458, %v2267, 0
      %2278 = vmatprep.subr.bf16.mxu0 0
      %2279 = vmatpush1.bf16.msra.mxu0 %v2265
      %2280 = vmatprep.subr.bf16.mxu0 0
      %2281 = vmatpush1.bf16.msra.mxu0 %v2276
      %2282 = vmatprep.subr.bf16.mxu0 0
      %2283 = vmatpush1.bf16.msra.mxu0 0
      %2284 = vmatprep.subr.bf16.mxu0 0
      %2285 = vmatpush1.bf16.msra.mxu0 0
      %2286 = vmatprep.subr.bf16.mxu0 0
      %2287 = vmatpush1.bf16.msra.mxu0 0
      %2288 = vmatprep.subr.bf16.mxu0 0
      %2289 = vmatpush1.bf16.msra.mxu0 0
      %2290 = vmatprep.subr.bf16.mxu0 0
      %2291 = vmatpush1.bf16.msra.mxu0 0
      %2292 = vmatprep.subr.bf16.mxu0 0
      %2293 = vmatpush1.bf16.msra.mxu0 0
      %2294 = vmatprep.subr.bf16.mxu0 0
      %2295 = vmatpush1.bf16.msra.mxu0 0
      %2296 = vmatprep.subr.bf16.mxu0 0
      %2297 = vmatpush1.bf16.msra.mxu0 0
      %2298 = vmatprep.subr.bf16.mxu0 0
      %2299 = vmatpush1.bf16.msra.mxu0 0
      %2300 = vmatprep.subr.bf16.mxu0 0
      %2301 = vmatpush1.bf16.msra.mxu0 0
      %2302 = vmatprep.subr.bf16.mxu0 0
      %2303 = vmatpush1.bf16.msra.mxu0 0
      %2304 = vmatprep.subr.bf16.mxu0 0
      %2305 = vmatpush1.bf16.msra.mxu0 0
      %2306 = vmatprep.subr.bf16.mxu0 0
      %2307 = vmatpush1.bf16.msra.mxu0 0
      %2308 = vmatprep.subr.bf16.mxu0 0
      %2309 = vmatpush1.bf16.msra.mxu0 0
      %2310 = vmatprep.mubr.bf16.mxu0 0
      %2311 = vmatmul.mubr.bf16.gmra.mrb[0].mxu0 %v2270
      %v2312 = vpop.f32.mrb[0].mxu0
      %v2313 = vadd.f32 0.0, %v2312
      %v2314 = vpop.f32.mrb[0].mxu0
      %v2315 = vpop.f32.mrb[0].mxu0
      %v2316 = vadd.f32 0.0, %v2315
      %v2317 = vpop.f32.mrb[0].mxu0
      %2318 = vmatprep.mubr.bf16.mxu0 0
      %2319 = vmatmul.mubr.bf16.gmra.mrb[0].mxu0 %v2273
      %v2320 = vpop.f32.mrb[0].mxu0
      %v2321 = vadd.f32 0.0, %v2320
      %v2322 = vpop.f32.mrb[0].mxu0
      %v2323 = vpop.f32.mrb[0].mxu0
      %v2324 = vpop.f32.mrb[0].mxu0
      %2325 = vdwg.mxu0
      %2326 = vrot.lane.b32.xlu0 %v1302, 48
      %v2327 = vpop.permute.xlu0 %2326
      %2328 = vrot.lane.b32.xlu0 %v1303, 48
      %v2329 = vpop.permute.xlu0 %2328
      %v2332 = vsel %vm1376, %v2262, 0
      %v2335 = vsel %vm1376, %v2263, 0
      %v2338 = vsel %vm1458, %v2329, 0
      %2340 = vmatprep.subr.bf16.mxu0 0
      %2341 = vmatpush1.bf16.msra.mxu0 %v2327
      %2342 = vmatprep.subr.bf16.mxu0 0
      %2343 = vmatpush1.bf16.msra.mxu0 %v2338
      %2344 = vmatprep.subr.bf16.mxu0 0
      %2345 = vmatpush1.bf16.msra.mxu0 0
      %2346 = vmatprep.subr.bf16.mxu0 0
      %2347 = vmatpush1.bf16.msra.mxu0 0
      %2348 = vmatprep.subr.bf16.mxu0 0
      %2349 = vmatpush1.bf16.msra.mxu0 0
      %2350 = vmatprep.subr.bf16.mxu0 0
      %2351 = vmatpush1.bf16.msra.mxu0 0
      %2352 = vmatprep.subr.bf16.mxu0 0
      %2353 = vmatpush1.bf16.msra.mxu0 0
      %2354 = vmatprep.subr.bf16.mxu0 0
      %2355 = vmatpush1.bf16.msra.mxu0 0
      %2356 = vmatprep.subr.bf16.mxu0 0
      %2357 = vmatpush1.bf16.msra.mxu0 0
      %2358 = vmatprep.subr.bf16.mxu0 0
      %2359 = vmatpush1.bf16.msra.mxu0 0
      %2360 = vmatprep.subr.bf16.mxu0 0
      %2361 = vmatpush1.bf16.msra.mxu0 0
      %2362 = vmatprep.subr.bf16.mxu0 0
      %2363 = vmatpush1.bf16.msra.mxu0 0
      %2364 = vmatprep.subr.bf16.mxu0 0
      %2365 = vmatpush1.bf16.msra.mxu0 0
      %2366 = vmatprep.subr.bf16.mxu0 0
      %2367 = vmatpush1.bf16.msra.mxu0 0
      %2368 = vmatprep.subr.bf16.mxu0 0
      %2369 = vmatpush1.bf16.msra.mxu0 0
      %2370 = vmatprep.subr.bf16.mxu0 0
      %2371 = vmatpush1.bf16.msra.mxu0 0
      %2372 = vmatprep.mubr.bf16.mxu0 0
      %2373 = vmatmul.mubr.bf16.gmra.mrb[0].mxu0 %v2332
      %v2374 = vpop.f32.mrb[0].mxu0
      %v2375 = vadd.f32 0.0, %v2374
      %v2376 = vpop.f32.mrb[0].mxu0
      %v2377 = vpop.f32.mrb[0].mxu0
      %v2378 = vadd.f32 0.0, %v2377
      %v2379 = vpop.f32.mrb[0].mxu0
      %2380 = vmatprep.mubr.bf16.mxu0 0
      %2381 = vmatmul.mubr.bf16.gmra.mrb[0].mxu0 %v2335
      %v2382 = vpop.f32.mrb[0].mxu0
      %v2383 = vadd.f32 0.0, %v2382
      %v2384 = vpop.f32.mrb[0].mxu0
      %v2385 = vpop.f32.mrb[0].mxu0
      %v2386 = vpop.f32.mrb[0].mxu0
      %2387 = vdwg.mxu0
      %v2388 = vpack.c.bf16 %v2316, %v2313
      %v2389 = vpack.c.bf16 %v2375, %v2321
      %v2390 = vpack.c.bf16 %v2383, %v2378
      %v2392 = vsel %vm1241, %v2388, 0
      %v2395 = vsel %vm1241, %v2389, 0
      %v2398 = vsel %vm1241, %v2390, 0
      %v2401 = vsel %vm1458, %v1224, 0
      %2403 = vmatprep.subr.bf16.mxu0 0
      %2404 = vmatpush1.bf16.msra.mxu0 %v2401
      %2405 = vmatprep.subr.bf16.mxu0 0
      %2406 = vmatpush1.bf16.msra.mxu0 0
      %2407 = vmatprep.subr.bf16.mxu0 0
      %2408 = vmatpush1.bf16.msra.mxu0 0
      %2409 = vmatprep.subr.bf16.mxu0 0
      %2410 = vmatpush1.bf16.msra.mxu0 0
      %2411 = vmatprep.subr.bf16.mxu0 0
      %2412 = vmatpush1.bf16.msra.mxu0 0
      %2413 = vmatprep.subr.bf16.mxu0 0
      %2414 = vmatpush1.bf16.msra.mxu0 0
      %2415 = vmatprep.subr.bf16.mxu0 0
      %2416 = vmatpush1.bf16.msra.mxu0 0
      %2417 = vmatprep.subr.bf16.mxu0 0
      %2418 = vmatpush1.bf16.msra.mxu0 0
      %2419 = vmatprep.subr.bf16.mxu0 0
      %2420 = vmatpush1.bf16.msra.mxu0 0
      %2421 = vmatprep.subr.bf16.mxu0 0
      %2422 = vmatpush1.bf16.msra.mxu0 0
      %2423 = vmatprep.subr.bf16.mxu0 0
      %2424 = vmatpush1.bf16.msra.mxu0 0
      %2425 = vmatprep.subr.bf16.mxu0 0
      %2426 = vmatpush1.bf16.msra.mxu0 0
      %2427 = vmatprep.subr.bf16.mxu0 0
      %2428 = vmatpush1.bf16.msra.mxu0 0
      %2429 = vmatprep.subr.bf16.mxu0 0
      %2430 = vmatpush1.bf16.msra.mxu0 0
      %2431 = vmatprep.subr.bf16.mxu0 0
      %2432 = vmatpush1.bf16.msra.mxu0 0
      %2433 = vmatprep.subr.bf16.mxu0 0
      %2434 = vmatpush1.bf16.msra.mxu0 0
      %2435 = vmatprep.mubr.bf16.mxu0 0
      %2436 = vmatmul.mubr.bf16.gmra.mrb[0].mxu0 %v2392
      %v2437 = vpop.f32.mrb[0].mxu0
      %v2438 = vadd.f32 0.0, %v2437
      %v2439 = vpop.f32.mrb[0].mxu0
      %v2440 = vpop.f32.mrb[0].mxu0
      %v2441 = vadd.f32 0.0, %v2440
      %v2442 = vpop.f32.mrb[0].mxu0
      %2443 = vmatprep.mubr.bf16.mxu0 0
      %2444 = vmatmul.mubr.bf16.gmra.mrb[0].mxu0 %v2395
      %v2445 = vpop.f32.mrb[0].mxu0
      %v2446 = vadd.f32 0.0, %v2445
      %v2447 = vpop.f32.mrb[0].mxu0
      %v2448 = vpop.f32.mrb[0].mxu0
      %v2449 = vadd.f32 0.0, %v2448
      %v2450 = vpop.f32.mrb[0].mxu0
      %2451 = vmatprep.mubr.bf16.mxu0 0
      %2452 = vmatmul.mubr.bf16.gmra.mrb[0].mxu0 %v2398
      %v2453 = vpop.f32.mrb[0].mxu0
      %v2454 = vadd.f32 0.0, %v2453
      %v2455 = vpop.f32.mrb[0].mxu0
      %v2456 = vpop.f32.mrb[0].mxu0
      %v2457 = vadd.f32 0.0, %v2456
      %v2458 = vpop.f32.mrb[0].mxu0
      %2459 = vdwg.mxu0
      %v2460 = vadd.f32 %v2030, %v2438
      %v2461 = vadd.f32 %v2033, %v2441
      %v2462 = vadd.f32 %v2038, %v2446
      %v2463 = vadd.f32 %v2041, %v2449
      %v2464 = vadd.f32 %v2046, %v2454
      %v2465 = vadd.f32 %v2049, %v2457
      %2466 = vrot.lane.b32.xlu0 %v1235, 104
      %v2467 = vpop.permute.xlu0 %2466
      %2468 = vrot.lane.b32.xlu0 %v1236, 104
      %v2469 = vpop.permute.xlu0 %2468
      %2470 = vrot.lane.b32.xlu0 %v1235, 72
      %v2471 = vpop.permute.xlu0 %2470
      %2472 = vrot.lane.b32.xlu0 %v1236, 72
      %v2473 = vpop.permute.xlu0 %2472
      %v2475 = vsel %vm1241, %v2467, 0
      %v2478 = vsel %vm1241, %v2469, 0
      %v2481 = vsel %vm1241, %v2471, 0
      %v2484 = vsel %vm1241, %v2473, 0
      %2486 = vmatprep.subr.bf16.mxu0 0
      %2487 = vmatpush1.bf16.xpose.msra.mxu0 %v2481
      %2488 = vmatprep.subr.bf16.mxu0 0
      %2489 = vmatpush1.bf16.xpose.msra.mxu0 %v2484
      %2490 = vmatprep.subr.bf16.mxu0 0
      %2491 = vmatpush1.bf16.xpose.msra.mxu0 0
      %2492 = vmatprep.subr.bf16.mxu0 0
      %2493 = vmatpush1.bf16.xpose.msra.mxu0 0
      %2494 = vmatprep.subr.bf16.mxu0 0
      %2495 = vmatpush1.bf16.xpose.msra.mxu0 0
      %2496 = vmatprep.subr.bf16.mxu0 0
      %2497 = vmatpush1.bf16.xpose.msra.mxu0 0
      %2498 = vmatprep.subr.bf16.mxu0 0
      %2499 = vmatpush1.bf16.xpose.msra.mxu0 0
      %2500 = vmatprep.subr.bf16.mxu0 0
      %2501 = vmatpush1.bf16.xpose.msra.mxu0 0
      %2502 = vmatprep.subr.bf16.mxu0 0
      %2503 = vmatpush1.bf16.xpose.msra.mxu0 0
      %2504 = vmatprep.subr.bf16.mxu0 0
      %2505 = vmatpush1.bf16.xpose.msra.mxu0 0
      %2506 = vmatprep.subr.bf16.mxu0 0
      %2507 = vmatpush1.bf16.xpose.msra.mxu0 0
      %2508 = vmatprep.subr.bf16.mxu0 0
      %2509 = vmatpush1.bf16.xpose.msra.mxu0 0
      %2510 = vmatprep.subr.bf16.mxu0 0
      %2511 = vmatpush1.bf16.xpose.msra.mxu0 0
      %2512 = vmatprep.subr.bf16.mxu0 0
      %2513 = vmatpush1.bf16.xpose.msra.mxu0 0
      %2514 = vmatprep.subr.bf16.mxu0 0
      %2515 = vmatpush1.bf16.xpose.msra.mxu0 0
      %2516 = vmatprep.subr.bf16.mxu0 0
      %2517 = vmatpush1.bf16.xpose.msra.mxu0 0
      %2518 = vmatprep.mubr.bf16.mxu0 0
      %2519 = vmatmul.mubr.bf16.gmra.mrb[0].mxu0 %v2475
      %v2520 = vpop.f32.mrb[0].mxu0
      %v2521 = vadd.f32 0.0, %v2520
      %v2522 = vpop.f32.mrb[0].mxu0
      %v2523 = vpop.f32.mrb[0].mxu0
      %v2524 = vadd.f32 0.0, %v2523
      %v2525 = vpop.f32.mrb[0].mxu0
      %2526 = vmatprep.mubr.bf16.mxu0 0
      %2527 = vmatmul.mubr.bf16.gmra.mrb[0].mxu0 %v2478
      %v2528 = vpop.f32.mrb[0].mxu0
      %v2529 = vadd.f32 0.0, %v2528
      %v2530 = vpop.f32.mrb[0].mxu0
      %v2531 = vpop.f32.mrb[0].mxu0
      %v2532 = vpop.f32.mrb[0].mxu0
      %2533 = vdwg.mxu0
      %2534 = vrot.lane.b32.xlu0 %v1302, 104
      %v2535 = vpop.permute.xlu0 %2534
      %2536 = vrot.lane.b32.xlu0 %v1303, 104
      %v2537 = vpop.permute.xlu0 %2536
      %2538 = vrot.lane.b32.xlu0 %v1302, 72
      %v2539 = vpop.permute.xlu0 %2538
      %2540 = vrot.lane.b32.xlu0 %v1303, 72
      %v2541 = vpop.permute.xlu0 %2540
      %v2543 = vsel %vm1241, %v2535, 0
      %v2546 = vsel %vm1241, %v2537, 0
      %v2549 = vsel %vm1241, %v2539, 0
      %v2552 = vsel %vm1241, %v2541, 0
      %2554 = vmatprep.subr.bf16.mxu0 0
      %2555 = vmatpush1.bf16.xpose.msra.mxu0 %v2549
      %2556 = vmatprep.subr.bf16.mxu0 0
      %2557 = vmatpush1.bf16.xpose.msra.mxu0 %v2552
      %2558 = vmatprep.subr.bf16.mxu0 0
      %2559 = vmatpush1.bf16.xpose.msra.mxu0 0
      %2560 = vmatprep.subr.bf16.mxu0 0
      %2561 = vmatpush1.bf16.xpose.msra.mxu0 0
      %2562 = vmatprep.subr.bf16.mxu0 0
      %2563 = vmatpush1.bf16.xpose.msra.mxu0 0
      %2564 = vmatprep.subr.bf16.mxu0 0
      %2565 = vmatpush1.bf16.xpose.msra.mxu0 0
      %2566 = vmatprep.subr.bf16.mxu0 0
      %2567 = vmatpush1.bf16.xpose.msra.mxu0 0
      %2568 = vmatprep.subr.bf16.mxu0 0
      %2569 = vmatpush1.bf16.xpose.msra.mxu0 0
      %2570 = vmatprep.subr.bf16.mxu0 0
      %2571 = vmatpush1.bf16.xpose.msra.mxu0 0
      %2572 = vmatprep.subr.bf16.mxu0 0
      %2573 = vmatpush1.bf16.xpose.msra.mxu0 0
      %2574 = vmatprep.subr.bf16.mxu0 0
      %2575 = vmatpush1.bf16.xpose.msra.mxu0 0
      %2576 = vmatprep.subr.bf16.mxu0 0
      %2577 = vmatpush1.bf16.xpose.msra.mxu0 0
      %2578 = vmatprep.subr.bf16.mxu0 0
      %2579 = vmatpush1.bf16.xpose.msra.mxu0 0
      %2580 = vmatprep.subr.bf16.mxu0 0
      %2581 = vmatpush1.bf16.xpose.msra.mxu0 0
      %2582 = vmatprep.subr.bf16.mxu0 0
      %2583 = vmatpush1.bf16.xpose.msra.mxu0 0
      %2584 = vmatprep.subr.bf16.mxu0 0
      %2585 = vmatpush1.bf16.xpose.msra.mxu0 0
      %2586 = vmatprep.mubr.bf16.mxu0 0
      %2587 = vmatmul.mubr.bf16.gmra.mrb[0].mxu0 %v2543
      %v2588 = vpop.f32.mrb[0].mxu0
      %v2589 = vadd.f32 0.0, %v2588
      %v2590 = vpop.f32.mrb[0].mxu0
      %v2591 = vpop.f32.mrb[0].mxu0
      %v2592 = vadd.f32 0.0, %v2591
      %v2593 = vpop.f32.mrb[0].mxu0
      %2594 = vmatprep.mubr.bf16.mxu0 0
      %2595 = vmatmul.mubr.bf16.gmra.mrb[0].mxu0 %v2546
      %v2596 = vpop.f32.mrb[0].mxu0
      %v2597 = vadd.f32 0.0, %v2596
      %v2598 = vpop.f32.mrb[0].mxu0
      %v2599 = vpop.f32.mrb[0].mxu0
      %v2600 = vpop.f32.mrb[0].mxu0
      %2601 = vdwg.mxu0
      %v2602 = vsel %vm1369, -1e+30, %v2521
      %v2603 = vsel %vm1369, -1e+30, %v2524
      %v2604 = vsel %vm1369, -1e+30, %v2529
      %v2605 = vsel %vm1369, -1e+30, %v2589
      %v2606 = vsel %vm1369, -1e+30, %v2592
      %v2607 = vsel %vm1369, -1e+30, %v2597
      %v2608 = vsel %vm1376, %v2602, -inf
      %2609 = vmax.xlane.f32.xlu0 %v2608
      %v2610 = vpop.xlane.xlu0 %2609
      %v2611 = vsel %vm1376, %v2603, -inf
      %2612 = vmax.xlane.f32.xlu0 %v2611
      %v2613 = vpop.xlane.xlu0 %2612
      %v2614 = vsel %vm1376, %v2604, -inf
      %2615 = vmax.xlane.f32.xlu0 %v2614
      %v2616 = vpop.xlane.xlu0 %2615
      %v2617 = vsel %vm1376, %v2605, -inf
      %2618 = vmax.xlane.f32.xlu0 %v2617
      %v2619 = vpop.xlane.xlu0 %2618
      %v2620 = vsel %vm1376, %v2606, -inf
      %2621 = vmax.xlane.f32.xlu0 %v2620
      %v2622 = vpop.xlane.xlu0 %2621
      %v2623 = vsel %vm1376, %v2607, -inf
      %2624 = vmax.xlane.f32.xlu0 %v2623
      %v2625 = vpop.xlane.xlu0 %2624
      %v2626 = vsub.f32 %v2602, %v2610
      %v2627 = vsub.f32 %v2603, %v2613
      %v2628 = vsub.f32 %v2604, %v2616
      %v2629 = vsub.f32 %v2605, %v2619
      %v2630 = vsub.f32 %v2606, %v2622
      %v2631 = vsub.f32 %v2607, %v2625
      %v2632 = vmul.f32 %v2626, 1.442695
      %v2633 = vpow.pop %v2632
      %v2634 = vmul.f32 %v2627, 1.442695
      %v2635 = vpow.pop %v2634
      %v2636 = vmul.f32 %v2628, 1.442695
      %v2637 = vpow.pop %v2636
      %v2638 = vmul.f32 %v2629, 1.442695
      %v2639 = vpow.pop %v2638
      %v2640 = vmul.f32 %v2630, 1.442695
      %v2641 = vpow.pop %v2640
      %v2642 = vmul.f32 %v2631, 1.442695
      %v2643 = vpow.pop %v2642
      %v2644 = vsel %vm1376, %v2633, 0.0
      %2645 = vadd.xlane.f32.xlu0 %v2644
      %v2646 = vpop.xlane.xlu0 %2645
      %v2647 = vsel %vm1376, %v2635, 0.0
      %2648 = vadd.xlane.f32.xlu0 %v2647
      %v2649 = vpop.xlane.xlu0 %2648
      %v2650 = vsel %vm1376, %v2637, 0.0
      %2651 = vadd.xlane.f32.xlu0 %v2650
      %v2652 = vpop.xlane.xlu0 %2651
      %v2653 = vsel %vm1376, %v2639, 0.0
      %2654 = vadd.xlane.f32.xlu0 %v2653
      %v2655 = vpop.xlane.xlu0 %2654
      %v2656 = vsel %vm1376, %v2641, 0.0
      %2657 = vadd.xlane.f32.xlu0 %v2656
      %v2658 = vpop.xlane.xlu0 %2657
      %v2659 = vsel %vm1376, %v2643, 0.0
      %2660 = vadd.xlane.f32.xlu0 %v2659
      %v2661 = vpop.xlane.xlu0 %2660
      %v2662 = vrcp.pop %v2646
      %v2663 = vrcp.pop %v2649
      %v2664 = vrcp.pop %v2652
      %v2665 = vrcp.pop %v2655
      %v2666 = vrcp.pop %v2658
      %v2667 = vrcp.pop %v2661
      %v2668 = vmul.f32 %v2633, %v2662
      %v2669 = vmul.f32 %v2635, %v2663
      %v2670 = vmul.f32 %v2637, %v2664
      %v2671 = vmul.f32 %v2639, %v2665
      %v2672 = vmul.f32 %v2641, %v2666
      %v2673 = vmul.f32 %v2643, %v2667
      %v2674 = vpack.c.bf16 %v2669, %v2668
      %v2675 = vpack.c.bf16 %v2670, %v2670
      %v2676 = vpack.c.bf16 %v2672, %v2671
      %v2677 = vpack.c.bf16 %v2673, %v2673
      %2678 = vrot.lane.b32.xlu0 %v1235, 40
      %v2679 = vpop.permute.xlu0 %2678
      %2680 = vrot.lane.b32.xlu0 %v1236, 40
      %v2681 = vpop.permute.xlu0 %2680
      %v2684 = vsel %vm1376, %v2674, 0
      %v2687 = vsel %vm1376, %v2675, 0
      %v2690 = vsel %vm1458, %v2681, 0
      %2692 = vmatprep.subr.bf16.mxu0 0
      %2693 = vmatpush1.bf16.msra.mxu0 %v2679
      %2694 = vmatprep.subr.bf16.mxu0 0
      %2695 = vmatpush1.bf16.msra.mxu0 %v2690
      %2696 = vmatprep.subr.bf16.mxu0 0
      %2697 = vmatpush1.bf16.msra.mxu0 0
      %2698 = vmatprep.subr.bf16.mxu0 0
      %2699 = vmatpush1.bf16.msra.mxu0 0
      %2700 = vmatprep.subr.bf16.mxu0 0
      %2701 = vmatpush1.bf16.msra.mxu0 0
      %2702 = vmatprep.subr.bf16.mxu0 0
      %2703 = vmatpush1.bf16.msra.mxu0 0
      %2704 = vmatprep.subr.bf16.mxu0 0
      %2705 = vmatpush1.bf16.msra.mxu0 0
      %2706 = vmatprep.subr.bf16.mxu0 0
      %2707 = vmatpush1.bf16.msra.mxu0 0
      %2708 = vmatprep.subr.bf16.mxu0 0
      %2709 = vmatpush1.bf16.msra.mxu0 0
      %2710 = vmatprep.subr.bf16.mxu0 0
      %2711 = vmatpush1.bf16.msra.mxu0 0
      %2712 = vmatprep.subr.bf16.mxu0 0
      %2713 = vmatpush1.bf16.msra.mxu0 0
      %2714 = vmatprep.subr.bf16.mxu0 0
      %2715 = vmatpush1.bf16.msra.mxu0 0
      %2716 = vmatprep.subr.bf16.mxu0 0
      %2717 = vmatpush1.bf16.msra.mxu0 0
      %2718 = vmatprep.subr.bf16.mxu0 0
      %2719 = vmatpush1.bf16.msra.mxu0 0
      %2720 = vmatprep.subr.bf16.mxu0 0
      %2721 = vmatpush1.bf16.msra.mxu0 0
      %2722 = vmatprep.subr.bf16.mxu0 0
      %2723 = vmatpush1.bf16.msra.mxu0 0
      %2724 = vmatprep.mubr.bf16.mxu0 0
      %2725 = vmatmul.mubr.bf16.gmra.mrb[0].mxu0 %v2684
      %v2726 = vpop.f32.mrb[0].mxu0
      %v2727 = vadd.f32 0.0, %v2726
      %v2728 = vpop.f32.mrb[0].mxu0
      %v2729 = vpop.f32.mrb[0].mxu0
      %v2730 = vadd.f32 0.0, %v2729
      %v2731 = vpop.f32.mrb[0].mxu0
      %2732 = vmatprep.mubr.bf16.mxu0 0
      %2733 = vmatmul.mubr.bf16.gmra.mrb[0].mxu0 %v2687
      %v2734 = vpop.f32.mrb[0].mxu0
      %v2735 = vadd.f32 0.0, %v2734
      %v2736 = vpop.f32.mrb[0].mxu0
      %v2737 = vpop.f32.mrb[0].mxu0
      %v2738 = vpop.f32.mrb[0].mxu0
      %2739 = vdwg.mxu0
      %2740 = vrot.lane.b32.xlu0 %v1302, 40
      %v2741 = vpop.permute.xlu0 %2740
      %2742 = vrot.lane.b32.xlu0 %v1303, 40
      %v2743 = vpop.permute.xlu0 %2742
      %v2746 = vsel %vm1376, %v2676, 0
      %v2749 = vsel %vm1376, %v2677, 0
      %v2752 = vsel %vm1458, %v2743, 0
      %2754 = vmatprep.subr.bf16.mxu0 0
      %2755 = vmatpush1.bf16.msra.mxu0 %v2741
      %2756 = vmatprep.subr.bf16.mxu0 0
      %2757 = vmatpush1.bf16.msra.mxu0 %v2752
      %2758 = vmatprep.subr.bf16.mxu0 0
      %2759 = vmatpush1.bf16.msra.mxu0 0
      %2760 = vmatprep.subr.bf16.mxu0 0
      %2761 = vmatpush1.bf16.msra.mxu0 0
      %2762 = vmatprep.subr.bf16.mxu0 0
      %2763 = vmatpush1.bf16.msra.mxu0 0
      %2764 = vmatprep.subr.bf16.mxu0 0
      %2765 = vmatpush1.bf16.msra.mxu0 0
      %2766 = vmatprep.subr.bf16.mxu0 0
      %2767 = vmatpush1.bf16.msra.mxu0 0
      %2768 = vmatprep.subr.bf16.mxu0 0
      %2769 = vmatpush1.bf16.msra.mxu0 0
      %2770 = vmatprep.subr.bf16.mxu0 0
      %2771 = vmatpush1.bf16.msra.mxu0 0
      %2772 = vmatprep.subr.bf16.mxu0 0
      %2773 = vmatpush1.bf16.msra.mxu0 0
      %2774 = vmatprep.subr.bf16.mxu0 0
      %2775 = vmatpush1.bf16.msra.mxu0 0
      %2776 = vmatprep.subr.bf16.mxu0 0
      %2777 = vmatpush1.bf16.msra.mxu0 0
      %2778 = vmatprep.subr.bf16.mxu0 0
      %2779 = vmatpush1.bf16.msra.mxu0 0
      %2780 = vmatprep.subr.bf16.mxu0 0
      %2781 = vmatpush1.bf16.msra.mxu0 0
      %2782 = vmatprep.subr.bf16.mxu0 0
      %2783 = vmatpush1.bf16.msra.mxu0 0
      %2784 = vmatprep.subr.bf16.mxu0 0
      %2785 = vmatpush1.bf16.msra.mxu0 0
      %2786 = vmatprep.mubr.bf16.mxu0 0
      %2787 = vmatmul.mubr.bf16.gmra.mrb[0].mxu0 %v2746
      %v2788 = vpop.f32.mrb[0].mxu0
      %v2789 = vadd.f32 0.0, %v2788
      %v2790 = vpop.f32.mrb[0].mxu0
      %v2791 = vpop.f32.mrb[0].mxu0
      %v2792 = vadd.f32 0.0, %v2791
      %v2793 = vpop.f32.mrb[0].mxu0
      %2794 = vmatprep.mubr.bf16.mxu0 0
      %2795 = vmatmul.mubr.bf16.gmra.mrb[0].mxu0 %v2749
      %v2796 = vpop.f32.mrb[0].mxu0
      %v2797 = vadd.f32 0.0, %v2796
      %v2798 = vpop.f32.mrb[0].mxu0
      %v2799 = vpop.f32.mrb[0].mxu0
      %v2800 = vpop.f32.mrb[0].mxu0
      %2801 = vdwg.mxu0
      %v2802 = vpack.c.bf16 %v2730, %v2727
      %v2803 = vpack.c.bf16 %v2789, %v2735
      %v2804 = vpack.c.bf16 %v2797, %v2792
      %v2806 = vsel %vm1241, %v2802, 0
      %v2809 = vsel %vm1241, %v2803, 0
      %v2812 = vsel %vm1241, %v2804, 0
      %v2815 = vsel %vm1458, %v1225, 0
      %2817 = vmatprep.subr.bf16.mxu0 0
      %2818 = vmatpush1.bf16.msra.mxu0 %v2815
      %2819 = vmatprep.subr.bf16.mxu0 0
      %2820 = vmatpush1.bf16.msra.mxu0 0
      %2821 = vmatprep.subr.bf16.mxu0 0
      %2822 = vmatpush1.bf16.msra.mxu0 0
      %2823 = vmatprep.subr.bf16.mxu0 0
      %2824 = vmatpush1.bf16.msra.mxu0 0
      %2825 = vmatprep.subr.bf16.mxu0 0
      %2826 = vmatpush1.bf16.msra.mxu0 0
      %2827 = vmatprep.subr.bf16.mxu0 0
      %2828 = vmatpush1.bf16.msra.mxu0 0
      %2829 = vmatprep.subr.bf16.mxu0 0
      %2830 = vmatpush1.bf16.msra.mxu0 0
      %2831 = vmatprep.subr.bf16.mxu0 0
      %2832 = vmatpush1.bf16.msra.mxu0 0
      %2833 = vmatprep.subr.bf16.mxu0 0
      %2834 = vmatpush1.bf16.msra.mxu0 0
      %2835 = vmatprep.subr.bf16.mxu0 0
      %2836 = vmatpush1.bf16.msra.mxu0 0
      %2837 = vmatprep.subr.bf16.mxu0 0
      %2838 = vmatpush1.bf16.msra.mxu0 0
      %2839 = vmatprep.subr.bf16.mxu0 0
      %2840 = vmatpush1.bf16.msra.mxu0 0
      %2841 = vmatprep.subr.bf16.mxu0 0
      %2842 = vmatpush1.bf16.msra.mxu0 0
      %2843 = vmatprep.subr.bf16.mxu0 0
      %2844 = vmatpush1.bf16.msra.mxu0 0
      %2845 = vmatprep.subr.bf16.mxu0 0
      %2846 = vmatpush1.bf16.msra.mxu0 0
      %2847 = vmatprep.subr.bf16.mxu0 0
      %2848 = vmatpush1.bf16.msra.mxu0 0
      %2849 = vmatprep.mubr.bf16.mxu0 0
      %2850 = vmatmul.mubr.bf16.gmra.mrb[0].mxu0 %v2806
      %v2851 = vpop.f32.mrb[0].mxu0
      %v2852 = vadd.f32 0.0, %v2851
      %v2853 = vpop.f32.mrb[0].mxu0
      %v2854 = vpop.f32.mrb[0].mxu0
      %v2855 = vadd.f32 0.0, %v2854
      %v2856 = vpop.f32.mrb[0].mxu0
      %2857 = vmatprep.mubr.bf16.mxu0 0
      %2858 = vmatmul.mubr.bf16.gmra.mrb[0].mxu0 %v2809
      %v2859 = vpop.f32.mrb[0].mxu0
      %v2860 = vadd.f32 0.0, %v2859
      %v2861 = vpop.f32.mrb[0].mxu0
      %v2862 = vpop.f32.mrb[0].mxu0
      %v2863 = vadd.f32 0.0, %v2862
      %v2864 = vpop.f32.mrb[0].mxu0
      %2865 = vmatprep.mubr.bf16.mxu0 0
      %2866 = vmatmul.mubr.bf16.gmra.mrb[0].mxu0 %v2812
      %v2867 = vpop.f32.mrb[0].mxu0
      %v2868 = vadd.f32 0.0, %v2867
      %v2869 = vpop.f32.mrb[0].mxu0
      %v2870 = vpop.f32.mrb[0].mxu0
      %v2871 = vadd.f32 0.0, %v2870
      %v2872 = vpop.f32.mrb[0].mxu0
      %2873 = vdwg.mxu0
      %v2874 = vadd.f32 %v2460, %v2852
      %v2875 = vadd.f32 %v2461, %v2855
      %v2876 = vadd.f32 %v2462, %v2860
      %v2877 = vadd.f32 %v2463, %v2863
      %v2878 = vadd.f32 %v2464, %v2868
      %v2879 = vadd.f32 %v2465, %v2871
      %v2880 = vld [vmem:[%s763] sm:$0x1]
      %v2882 = vlaneseq
      %v2883 = vshrl.u32 %v2882, 7
      %v2884 = vsub.s32 0, %v2883
      %v2885 = vrot.slane %v2880, %v2884
      %v2887 = vadd.f32 %v2874, %v2885
      %v2888 = vadd.f32 %v2875, %v2885
      %v2889 = vadd.f32 %v2876, %v2885
      %v2890 = vadd.f32 %v2877, %v2885
      %v2891 = vadd.f32 %v2878, %v2885
      %v2892 = vadd.f32 %v2879, %v2885
      %v2893 = vadd.f32 %v1012, %v2887
      %v2894 = vadd.f32 %v1013, %v2888
      %v2895 = vadd.f32 %v1014, %v2889
      %v2896 = vadd.f32 %v1015, %v2890
      %v2897 = vadd.f32 %v1016, %v2891
      %v2898 = vadd.f32 %v1017, %v2892
      %v2899 = vld [vmem:[%s766] sm:$0x1]
      %v2900 = vld [vmem:[%s769] sm:$0x1]
      %v2901 = vsel %vm1020, %v2893, 0.0
      %2902 = vadd.xlane.f32.xlu0 %v2901
      %v2903 = vpop.xlane.xlu0 %2902
      %v2904 = vsel %vm1020, %v2894, 0.0
      %2905 = vadd.xlane.f32.xlu0 %v2904
      %v2906 = vpop.xlane.xlu0 %2905
      %v2907 = vsel %vm1020, %v2895, 0.0
      %2908 = vadd.xlane.f32.xlu0 %v2907
      %v2909 = vpop.xlane.xlu0 %2908
      %v2910 = vsel %vm1020, %v2896, 0.0
      %2911 = vadd.xlane.f32.xlu0 %v2910
      %v2912 = vpop.xlane.xlu0 %2911
      %v2913 = vsel %vm1020, %v2897, 0.0
      %2914 = vadd.xlane.f32.xlu0 %v2913
      %v2915 = vpop.xlane.xlu0 %2914
      %v2916 = vsel %vm1020, %v2898, 0.0
      %2917 = vadd.xlane.f32.xlu0 %v2916
      %v2918 = vpop.xlane.xlu0 %2917
      %v2919 = vmul.f32 %v2903, %v1039
      %v2920 = vmul.f32 %v2906, %v1039
      %v2921 = vmul.f32 %v2909, %v1039
      %v2922 = vmul.f32 %v2912, %v1039
      %v2923 = vmul.f32 %v2915, %v1039
      %v2924 = vmul.f32 %v2918, %v1039
      %v2925 = vsub.f32 %v2893, %v2919
      %v2926 = vsub.f32 %v2894, %v2920
      %v2927 = vsub.f32 %v2895, %v2921
      %v2928 = vsub.f32 %v2896, %v2922
      %v2929 = vsub.f32 %v2897, %v2923
      %v2930 = vsub.f32 %v2898, %v2924
      %v2931 = vmul.f32 %v2925, %v2925
      %v2932 = vmul.f32 %v2926, %v2926
      %v2933 = vmul.f32 %v2927, %v2927
      %v2934 = vmul.f32 %v2928, %v2928
      %v2935 = vmul.f32 %v2929, %v2929
      %v2936 = vmul.f32 %v2930, %v2930
      %v2937 = vsel %vm1020, %v2931, 0.0
      %2938 = vadd.xlane.f32.xlu0 %v2937
      %v2939 = vpop.xlane.xlu0 %2938
      %v2940 = vsel %vm1020, %v2932, 0.0
      %2941 = vadd.xlane.f32.xlu0 %v2940
      %v2942 = vpop.xlane.xlu0 %2941
      %v2943 = vsel %vm1020, %v2933, 0.0
      %2944 = vadd.xlane.f32.xlu0 %v2943
      %v2945 = vpop.xlane.xlu0 %2944
      %v2946 = vsel %vm1020, %v2934, 0.0
      %2947 = vadd.xlane.f32.xlu0 %v2946
      %v2948 = vpop.xlane.xlu0 %2947
      %v2949 = vsel %vm1020, %v2935, 0.0
      %2950 = vadd.xlane.f32.xlu0 %v2949
      %v2951 = vpop.xlane.xlu0 %2950
      %v2952 = vsel %vm1020, %v2936, 0.0
      %2953 = vadd.xlane.f32.xlu0 %v2952
      %v2954 = vpop.xlane.xlu0 %2953
      %v2955 = vmul.f32 %v2939, %v1039
      %v2956 = vmul.f32 %v2942, %v1039
      %v2957 = vmul.f32 %v2945, %v1039
      %v2958 = vmul.f32 %v2948, %v1039
      %v2959 = vmul.f32 %v2951, %v1039
      %v2960 = vmul.f32 %v2954, %v1039
      %v2961 = vadd.f32 %v2955, 1e-05
      %v2962 = vadd.f32 %v2956, 1e-05
      %v2963 = vadd.f32 %v2957, 1e-05
      %v2964 = vadd.f32 %v2958, 1e-05
      %v2965 = vadd.f32 %v2959, 1e-05
      %v2966 = vadd.f32 %v2960, 1e-05
      %v2967 = vrsqrt.pop %v2961
      %v2968 = vrsqrt.pop %v2962
      %v2969 = vrsqrt.pop %v2963
      %v2970 = vrsqrt.pop %v2964
      %v2971 = vrsqrt.pop %v2965
      %v2972 = vrsqrt.pop %v2966
      %v2973 = vmul.f32 %v2925, %v2967
      %v2974 = vmul.f32 %v2926, %v2968
      %v2975 = vmul.f32 %v2927, %v2969
      %v2976 = vmul.f32 %v2928, %v2970
      %v2977 = vmul.f32 %v2929, %v2971
      %v2978 = vmul.f32 %v2930, %v2972
      %v2980 = vlaneseq
      %v2981 = vshrl.u32 %v2980, 7
      %v2982 = vsub.s32 0, %v2981
      %v2983 = vrot.slane %v2899, %v2982
      %v2985 = vmul.f32 %v2973, %v2983
      %v2986 = vmul.f32 %v2974, %v2983
      %v2987 = vmul.f32 %v2975, %v2983
      %v2988 = vmul.f32 %v2976, %v2983
      %v2989 = vmul.f32 %v2977, %v2983
      %v2990 = vmul.f32 %v2978, %v2983
      %v2992 = vlaneseq
      %v2993 = vshrl.u32 %v2992, 7
      %v2994 = vsub.s32 0, %v2993
      %v2995 = vrot.slane %v2900, %v2994
      %v2997 = vadd.f32 %v2985, %v2995
      %v2998 = vadd.f32 %v2986, %v2995
      %v2999 = vadd.f32 %v2987, %v2995
      %v3000 = vadd.f32 %v2988, %v2995
      %v3001 = vadd.f32 %v2989, %v2995
      %v3002 = vadd.f32 %v2990, %v2995
      %v3003 = vld [vmem:[%s774] sm:$0xf]
      %v3004 = vld [vmem:[%s774 + $0x4] sm:$0xf]
      %v3005 = vld [vmem:[%s774 + $0x8] sm:$0xf]
      %v3006 = vld [vmem:[%s774 + $0xc] sm:$0xf]
      %v3007 = vld [vmem:[%s777] sm:$0x1]
      %v3008 = vpack.c.bf16 %v2998, %v2997
      %v3009 = vpack.c.bf16 %v3000, %v2999
      %v3010 = vpack.c.bf16 %v3002, %v3001
      %v3012 = vlaneseq
      %v3013 = vshrl.u32 %v3012, 7
      %v3014 = vsub.s32 0, %v3013
      %v3015 = vrot.slane %v3007, %v3014
      %v3021 = vunpack.c.l.b16 %v3003
      %v3022 = vunpack.c.l.b16 %v3004
      %v3023 = vunpack.c.l.b16 %v3005
      %v3024 = vunpack.c.l.b16 %v3006
      %v3025 = vpack.c.b16 %v3022, %v3021
      %v3026 = vpack.c.b16 %v3024, %v3023
      %v3030 = vsel %vm1020, %v3008, 0
      %v3033 = vsel %vm1020, %v3009, 0
      %v3036 = vsel %vm1020, %v3010, 0
      %3038 = vmatprep.subr.bf16.mxu0 0
      %3039 = vmatpush1.bf16.msra.mxu0 %v3025
      %3040 = vmatprep.subr.bf16.mxu0 0
      %3041 = vmatpush1.bf16.msra.mxu0 %v3026
      %3042 = vmatprep.subr.bf16.mxu0 0
      %3043 = vmatpush1.bf16.msra.mxu0 0
      %3044 = vmatprep.subr.bf16.mxu0 0
      %3045 = vmatpush1.bf16.msra.mxu0 0
      %3046 = vmatprep.subr.bf16.mxu0 0
      %3047 = vmatpush1.bf16.msra.mxu0 0
      %3048 = vmatprep.subr.bf16.mxu0 0
      %3049 = vmatpush1.bf16.msra.mxu0 0
      %3050 = vmatprep.subr.bf16.mxu0 0
      %3051 = vmatpush1.bf16.msra.mxu0 0
      %3052 = vmatprep.subr.bf16.mxu0 0
      %3053 = vmatpush1.bf16.msra.mxu0 0
      %3054 = vmatprep.subr.bf16.mxu0 0
      %3055 = vmatpush1.bf16.msra.mxu0 0
      %3056 = vmatprep.subr.bf16.mxu0 0
      %3057 = vmatpush1.bf16.msra.mxu0 0
      %3058 = vmatprep.subr.bf16.mxu0 0
      %3059 = vmatpush1.bf16.msra.mxu0 0
      %3060 = vmatprep.subr.bf16.mxu0 0
      %3061 = vmatpush1.bf16.msra.mxu0 0
      %3062 = vmatprep.subr.bf16.mxu0 0
      %3063 = vmatpush1.bf16.msra.mxu0 0
      %3064 = vmatprep.subr.bf16.mxu0 0
      %3065 = vmatpush1.bf16.msra.mxu0 0
      %3066 = vmatprep.subr.bf16.mxu0 0
      %3067 = vmatpush1.bf16.msra.mxu0 0
      %3068 = vmatprep.subr.bf16.mxu0 0
      %3069 = vmatpush1.bf16.msra.mxu0 0
      %3070 = vmatprep.mubr.bf16.mxu0 0
      %3071 = vmatmul.mubr.bf16.gmra.mrb[0].mxu0 %v3030
      %v3072 = vpop.f32.mrb[0].mxu0
      %v3073 = vadd.f32 %v3015, %v3072
      %v3074 = vpop.f32.mrb[0].mxu0
      %v3075 = vpop.f32.mrb[0].mxu0
      %v3076 = vadd.f32 %v3015, %v3075
      %v3077 = vpop.f32.mrb[0].mxu0
      %3078 = vmatprep.mubr.bf16.mxu0 0
      %3079 = vmatmul.mubr.bf16.gmra.mrb[0].mxu0 %v3033
      %v3080 = vpop.f32.mrb[0].mxu0
      %v3081 = vadd.f32 %v3015, %v3080
      %v3082 = vpop.f32.mrb[0].mxu0
      %v3083 = vpop.f32.mrb[0].mxu0
      %v3084 = vadd.f32 %v3015, %v3083
      %v3085 = vpop.f32.mrb[0].mxu0
      %3086 = vmatprep.mubr.bf16.mxu0 0
      %3087 = vmatmul.mubr.bf16.gmra.mrb[0].mxu0 %v3036
      %v3088 = vpop.f32.mrb[0].mxu0
      %v3089 = vadd.f32 %v3015, %v3088
      %v3090 = vpop.f32.mrb[0].mxu0
      %v3091 = vpop.f32.mrb[0].mxu0
      %v3092 = vadd.f32 %v3015, %v3091
      %v3093 = vpop.f32.mrb[0].mxu0
      %3094 = vdwg.mxu0
      %v3095 = vmul.f32 %v3073, %v3073
      %v3096 = vmul.f32 %v3076, %v3076
      %v3097 = vmul.f32 %v3081, %v3081
      %v3098 = vmul.f32 %v3084, %v3084
      %v3099 = vmul.f32 %v3089, %v3089
      %v3100 = vmul.f32 %v3092, %v3092
      %v3101 = vmul.f32 %v3073, %v3095
      %v3102 = vmul.f32 %v3076, %v3096
      %v3103 = vmul.f32 %v3081, %v3097
      %v3104 = vmul.f32 %v3084, %v3098
      %v3105 = vmul.f32 %v3089, %v3099
      %v3106 = vmul.f32 %v3092, %v3100
      %v3107 = vmul.f32 %v3101, 0.044715
      %v3108 = vmul.f32 %v3102, 0.044715
      %v3109 = vmul.f32 %v3103, 0.044715
      %v3110 = vmul.f32 %v3104, 0.044715
      %v3111 = vmul.f32 %v3105, 0.044715
      %v3112 = vmul.f32 %v3106, 0.044715
      %v3113 = vadd.f32 %v3073, %v3107
      %v3114 = vadd.f32 %v3076, %v3108
      %v3115 = vadd.f32 %v3081, %v3109
      %v3116 = vadd.f32 %v3084, %v3110
      %v3117 = vadd.f32 %v3089, %v3111
      %v3118 = vadd.f32 %v3092, %v3112
      %v3119 = vmul.f32 %v3113, 0.7978846
      %v3120 = vmul.f32 %v3114, 0.7978846
      %v3121 = vmul.f32 %v3115, 0.7978846
      %v3122 = vmul.f32 %v3116, 0.7978846
      %v3123 = vmul.f32 %v3117, 0.7978846
      %v3124 = vmul.f32 %v3118, 0.7978846
      %v3125 = vtanh.pop %v3119
      %v3126 = vtanh.pop %v3120
      %v3127 = vtanh.pop %v3121
      %v3128 = vtanh.pop %v3122
      %v3129 = vtanh.pop %v3123
      %v3130 = vtanh.pop %v3124
      %v3131 = vadd.f32 %v3125, 1.0
      %v3132 = vadd.f32 %v3126, 1.0
      %v3133 = vadd.f32 %v3127, 1.0
      %v3134 = vadd.f32 %v3128, 1.0
      %v3135 = vadd.f32 %v3129, 1.0
      %v3136 = vadd.f32 %v3130, 1.0
      %v3137 = vmul.f32 %v3131, 0.5
      %v3138 = vmul.f32 %v3132, 0.5
      %v3139 = vmul.f32 %v3133, 0.5
      %v3140 = vmul.f32 %v3134, 0.5
      %v3141 = vmul.f32 %v3135, 0.5
      %v3142 = vmul.f32 %v3136, 0.5
      %v3143 = vmul.f32 %v3073, %v3137
      %v3144 = vmul.f32 %v3076, %v3138
      %v3145 = vmul.f32 %v3081, %v3139
      %v3146 = vmul.f32 %v3084, %v3140
      %v3147 = vmul.f32 %v3089, %v3141
      %v3148 = vmul.f32 %v3092, %v3142
      %v3149 = vld [vmem:[%s782] sm:$0xf]
      %v3150 = vld [vmem:[%s782 + $0x4] sm:$0xf]
      %v3151 = vld [vmem:[%s782 + $0x8] sm:$0xf]
      %v3152 = vld [vmem:[%s782 + $0xc] sm:$0xf]
      %v3153 = vld [vmem:[%s782 + $0x10] sm:$0xf]
      %v3154 = vld [vmem:[%s782 + $0x14] sm:$0xf]
      %v3155 = vld [vmem:[%s782 + $0x18] sm:$0xf]
      %v3156 = vld [vmem:[%s782 + $0x1c] sm:$0xf]
      %v3157 = vld [vmem:[%s785] sm:$0x1]
      %v3158 = vpack.c.bf16 %v3144, %v3143
      %v3159 = vpack.c.bf16 %v3146, %v3145
      %v3160 = vpack.c.bf16 %v3148, %v3147
      %v3162 = vlaneseq
      %v3163 = vshrl.u32 %v3162, 7
      %v3164 = vsub.s32 0, %v3163
      %v3165 = vrot.slane %v3157, %v3164
      %v3175 = vunpack.c.l.b16 %v3149
      %v3176 = vunpack.c.l.b16 %v3150
      %v3177 = vunpack.c.l.b16 %v3151
      %v3178 = vunpack.c.l.b16 %v3152
      %v3179 = vunpack.c.l.b16 %v3153
      %v3180 = vunpack.c.l.b16 %v3154
      %v3181 = vunpack.c.l.b16 %v3155
      %v3182 = vunpack.c.l.b16 %v3156
      %v3183 = vpack.c.b16 %v3176, %v3175
      %v3184 = vpack.c.b16 %v3178, %v3177
      %v3185 = vpack.c.b16 %v3180, %v3179
      %v3186 = vpack.c.b16 %v3182, %v3181
      %vm3191 = vcmask 523264
      %v3193 = vsel %vm3191, %v3158, 0
      %v3196 = vsel %vm3191, %v3159, 0
      %v3199 = vsel %vm3191, %v3160, 0
      %3201 = vmatprep.subr.bf16.mxu0 0
      %3202 = vmatpush1.bf16.msra.mxu0 %v3183
      %3203 = vmatprep.subr.bf16.mxu0 0
      %3204 = vmatpush1.bf16.msra.mxu0 %v3184
      %3205 = vmatprep.subr.bf16.mxu0 0
      %3206 = vmatpush1.bf16.msra.mxu0 %v3185
      %3207 = vmatprep.subr.bf16.mxu0 0
      %3208 = vmatpush1.bf16.msra.mxu0 %v3186
      %3209 = vmatprep.subr.bf16.mxu0 0
      %3210 = vmatpush1.bf16.msra.mxu0 0
      %3211 = vmatprep.subr.bf16.mxu0 0
      %3212 = vmatpush1.bf16.msra.mxu0 0
      %3213 = vmatprep.subr.bf16.mxu0 0
      %3214 = vmatpush1.bf16.msra.mxu0 0
      %3215 = vmatprep.subr.bf16.mxu0 0
      %3216 = vmatpush1.bf16.msra.mxu0 0
      %3217 = vmatprep.subr.bf16.mxu0 0
      %3218 = vmatpush1.bf16.msra.mxu0 0
      %3219 = vmatprep.subr.bf16.mxu0 0
      %3220 = vmatpush1.bf16.msra.mxu0 0
      %3221 = vmatprep.subr.bf16.mxu0 0
      %3222 = vmatpush1.bf16.msra.mxu0 0
      %3223 = vmatprep.subr.bf16.mxu0 0
      %3224 = vmatpush1.bf16.msra.mxu0 0
      %3225 = vmatprep.subr.bf16.mxu0 0
      %3226 = vmatpush1.bf16.msra.mxu0 0
      %3227 = vmatprep.subr.bf16.mxu0 0
      %3228 = vmatpush1.bf16.msra.mxu0 0
      %3229 = vmatprep.subr.bf16.mxu0 0
      %3230 = vmatpush1.bf16.msra.mxu0 0
      %3231 = vmatprep.subr.bf16.mxu0 0
      %3232 = vmatpush1.bf16.msra.mxu0 0
      %3233 = vmatprep.mubr.bf16.mxu0 0
      %3234 = vmatmul.mubr.bf16.gmra.mrb[0].mxu0 %v3193
      %v3235 = vpop.f32.mrb[0].mxu0
      %v3236 = vadd.f32 %v3165, %v3235
      %v3237 = vpop.f32.mrb[0].mxu0
      %v3238 = vpop.f32.mrb[0].mxu0
      %v3239 = vadd.f32 %v3165, %v3238
      %v3240 = vpop.f32.mrb[0].mxu0
      %3241 = vmatprep.mubr.bf16.mxu0 0
      %3242 = vmatmul.mubr.bf16.gmra.mrb[0].mxu0 %v3196
      %v3243 = vpop.f32.mrb[0].mxu0
      %v3244 = vadd.f32 %v3165, %v3243
      %v3245 = vpop.f32.mrb[0].mxu0
      %v3246 = vpop.f32.mrb[0].mxu0
      %v3247 = vadd.f32 %v3165, %v3246
      %v3248 = vpop.f32.mrb[0].mxu0
      %3249 = vmatprep.mubr.bf16.mxu0 0
      %3250 = vmatmul.mubr.bf16.gmra.mrb[0].mxu0 %v3199
      %v3251 = vpop.f32.mrb[0].mxu0
      %v3252 = vadd.f32 %v3165, %v3251
      %v3253 = vpop.f32.mrb[0].mxu0
      %v3254 = vpop.f32.mrb[0].mxu0
      %v3255 = vadd.f32 %v3165, %v3254
      %v3256 = vpop.f32.mrb[0].mxu0
      %3257 = vdwg.mxu0
      %v3258 = vmul.f32 %v3236, %v3236
      %v3259 = vmul.f32 %v3239, %v3239
      %v3260 = vmul.f32 %v3244, %v3244
      %v3261 = vmul.f32 %v3247, %v3247
      %v3262 = vmul.f32 %v3252, %v3252
      %v3263 = vmul.f32 %v3255, %v3255
      %v3264 = vmul.f32 %v3236, %v3258
      %v3265 = vmul.f32 %v3239, %v3259
      %v3266 = vmul.f32 %v3244, %v3260
      %v3267 = vmul.f32 %v3247, %v3261
      %v3268 = vmul.f32 %v3252, %v3262
      %v3269 = vmul.f32 %v3255, %v3263
      %v3270 = vmul.f32 %v3264, 0.044715
      %v3271 = vmul.f32 %v3265, 0.044715
      %v3272 = vmul.f32 %v3266, 0.044715
      %v3273 = vmul.f32 %v3267, 0.044715
      %v3274 = vmul.f32 %v3268, 0.044715
      %v3275 = vmul.f32 %v3269, 0.044715
      %v3276 = vadd.f32 %v3236, %v3270
      %v3277 = vadd.f32 %v3239, %v3271
      %v3278 = vadd.f32 %v3244, %v3272
      %v3279 = vadd.f32 %v3247, %v3273
      %v3280 = vadd.f32 %v3252, %v3274
      %v3281 = vadd.f32 %v3255, %v3275
      %v3282 = vmul.f32 %v3276, 0.7978846
      %v3283 = vmul.f32 %v3277, 0.7978846
      %v3284 = vmul.f32 %v3278, 0.7978846
      %v3285 = vmul.f32 %v3279, 0.7978846
      %v3286 = vmul.f32 %v3280, 0.7978846
      %v3287 = vmul.f32 %v3281, 0.7978846
      %v3288 = vtanh.pop %v3282
      %v3289 = vtanh.pop %v3283
      %v3290 = vtanh.pop %v3284
      %v3291 = vtanh.pop %v3285
      %v3292 = vtanh.pop %v3286
      %v3293 = vtanh.pop %v3287
      %v3294 = vadd.f32 %v3288, 1.0
      %v3295 = vadd.f32 %v3289, 1.0
      %v3296 = vadd.f32 %v3290, 1.0
      %v3297 = vadd.f32 %v3291, 1.0
      %v3298 = vadd.f32 %v3292, 1.0
      %v3299 = vadd.f32 %v3293, 1.0
      %v3300 = vmul.f32 %v3294, 0.5
      %v3301 = vmul.f32 %v3295, 0.5
      %v3302 = vmul.f32 %v3296, 0.5
      %v3303 = vmul.f32 %v3297, 0.5
      %v3304 = vmul.f32 %v3298, 0.5
      %v3305 = vmul.f32 %v3299, 0.5
      %v3306 = vmul.f32 %v3236, %v3300
      %v3307 = vmul.f32 %v3239, %v3301
      %v3308 = vmul.f32 %v3244, %v3302
      %v3309 = vmul.f32 %v3247, %v3303
      %v3310 = vmul.f32 %v3252, %v3304
      %v3311 = vmul.f32 %v3255, %v3305
      %v3312 = vld [vmem:[%s790] sm:$0xf]
      %v3313 = vld [vmem:[%s790 + $0x4] sm:$0xf]
      %v3314 = vld [vmem:[%s790 + $0x8] sm:$0xf]
      %v3315 = vld [vmem:[%s790 + $0xc] sm:$0xf]
      %v3316 = vld [vmem:[%s790 + $0x10] sm:$0xf]
      %v3317 = vld [vmem:[%s790 + $0x14] sm:$0xf]
      %v3318 = vld [vmem:[%s793] sm:$0x1]
      %v3319 = vpack.c.bf16 %v3307, %v3306
      %v3320 = vpack.c.bf16 %v3309, %v3308
      %v3321 = vpack.c.bf16 %v3311, %v3310
      %v3323 = vlaneseq
      %v3324 = vshrl.u32 %v3323, 7
      %v3325 = vsub.s32 0, %v3324
      %v3326 = vrot.slane %v3318, %v3325
      %v3334 = vunpack.c.l.b16 %v3312
      %v3335 = vunpack.c.l.b16 %v3313
      %v3336 = vunpack.c.l.b16 %v3314
      %v3337 = vunpack.c.l.b16 %v3315
      %v3338 = vunpack.c.l.b16 %v3316
      %v3339 = vunpack.c.l.b16 %v3317
      %v3340 = vpack.c.b16 %v3335, %v3334
      %v3341 = vpack.c.b16 %v3337, %v3336
      %v3342 = vpack.c.b16 %v3339, %v3338
      %vm3346 = vcmask 392192
      %v3348 = vsel %vm3346, %v3319, 0
      %v3351 = vsel %vm3346, %v3320, 0
      %v3354 = vsel %vm3346, %v3321, 0
      %3356 = vmatprep.subr.bf16.mxu0 0
      %3357 = vmatpush1.bf16.msra.mxu0 %v3340
      %3358 = vmatprep.subr.bf16.mxu0 0
      %3359 = vmatpush1.bf16.msra.mxu0 %v3341
      %3360 = vmatprep.subr.bf16.mxu0 0
      %3361 = vmatpush1.bf16.msra.mxu0 %v3342
      %3362 = vmatprep.subr.bf16.mxu0 0
      %3363 = vmatpush1.bf16.msra.mxu0 0
      %3364 = vmatprep.subr.bf16.mxu0 0
      %3365 = vmatpush1.bf16.msra.mxu0 0
      %3366 = vmatprep.subr.bf16.mxu0 0
      %3367 = vmatpush1.bf16.msra.mxu0 0
      %3368 = vmatprep.subr.bf16.mxu0 0
      %3369 = vmatpush1.bf16.msra.mxu0 0
      %3370 = vmatprep.subr.bf16.mxu0 0
      %3371 = vmatpush1.bf16.msra.mxu0 0
      %3372 = vmatprep.subr.bf16.mxu0 0
      %3373 = vmatpush1.bf16.msra.mxu0 0
      %3374 = vmatprep.subr.bf16.mxu0 0
      %3375 = vmatpush1.bf16.msra.mxu0 0
      %3376 = vmatprep.subr.bf16.mxu0 0
      %3377 = vmatpush1.bf16.msra.mxu0 0
      %3378 = vmatprep.subr.bf16.mxu0 0
      %3379 = vmatpush1.bf16.msra.mxu0 0
      %3380 = vmatprep.subr.bf16.mxu0 0
      %3381 = vmatpush1.bf16.msra.mxu0 0
      %3382 = vmatprep.subr.bf16.mxu0 0
      %3383 = vmatpush1.bf16.msra.mxu0 0
      %3384 = vmatprep.subr.bf16.mxu0 0
      %3385 = vmatpush1.bf16.msra.mxu0 0
      %3386 = vmatprep.subr.bf16.mxu0 0
      %3387 = vmatpush1.bf16.msra.mxu0 0
      %3388 = vmatprep.mubr.bf16.mxu0 0
      %3389 = vmatmul.mubr.bf16.gmra.mrb[0].mxu0 %v3348
      %v3390 = vpop.f32.mrb[0].mxu0
      %v3391 = vadd.f32 %v3326, %v3390
      %v3392 = vpop.f32.mrb[0].mxu0
      %v3393 = vpop.f32.mrb[0].mxu0
      %v3394 = vadd.f32 %v3326, %v3393
      %v3395 = vpop.f32.mrb[0].mxu0
      %3396 = vmatprep.mubr.bf16.mxu0 0
      %3397 = vmatmul.mubr.bf16.gmra.mrb[0].mxu0 %v3351
      %v3398 = vpop.f32.mrb[0].mxu0
      %v3399 = vadd.f32 %v3326, %v3398
      %v3400 = vpop.f32.mrb[0].mxu0
      %v3401 = vpop.f32.mrb[0].mxu0
      %v3402 = vadd.f32 %v3326, %v3401
      %v3403 = vpop.f32.mrb[0].mxu0
      %3404 = vmatprep.mubr.bf16.mxu0 0
      %3405 = vmatmul.mubr.bf16.gmra.mrb[0].mxu0 %v3354
      %v3406 = vpop.f32.mrb[0].mxu0
      %v3407 = vadd.f32 %v3326, %v3406
      %v3408 = vpop.f32.mrb[0].mxu0
      %v3409 = vpop.f32.mrb[0].mxu0
      %v3410 = vadd.f32 %v3326, %v3409
      %v3411 = vpop.f32.mrb[0].mxu0
      %3412 = vdwg.mxu0
      %v3413 = vadd.f32 %v2893, %v3391
      %v3414 = vadd.f32 %v2894, %v3394
      %v3415 = vadd.f32 %v2895, %v3399
      %v3416 = vadd.f32 %v2896, %v3402
      %v3417 = vadd.f32 %v2897, %v3407
      %v3418 = vadd.f32 %v2898, %v3410
      %3419 = vst.msk [vmem:[#allocation2] sm:$0xff] %vm1020, %v3413
      %3420 = vst.msk [vmem:[#allocation2 + $0x8] sm:$0xff] %vm1020, %v3414
      %3421 = vst.msk [vmem:[#allocation2 + $0x10] sm:$0xff] %vm1020, %v3415
      %3422 = vst.msk [vmem:[#allocation2 + $0x18] sm:$0xff] %vm1020, %v3416
      %3423 = vst.msk [vmem:[#allocation2 + $0x20] sm:$0xff] %vm1020, %v3417
      %3424 = vst.msk [vmem:[#allocation2 + $0x28] sm:$0xff] %vm1020, %v3418
      %v3425 = vpack.c.bf16 %v3413, %v3413
      %v3426 = vpack.c.bf16 %v3416, %v3416
      %v3427 = vld [vmem:[%s798] sm:$0xf]
      %v3428 = vld [vmem:[%s798 + $0x4] sm:$0xf]
      %v3429 = vld [vmem:[%s798 + $0x8] sm:$0xf]
      %v3430 = vld [vmem:[%s798 + $0xc] sm:$0xf]
      %v3431 = vld [vmem:[%s801] sm:$0x1]
      %v3433 = vlaneseq
      %v3434 = vshrl.u32 %v3433, 7
      %v3435 = vsub.s32 0, %v3434
      %v3436 = vrot.slane %v3431, %v3435
      %v3440 = vunpack.c.l.b16 %v3425
      %v3441 = vunpack.c.l.b16 %v3426
      %v3442 = vrot.slane %v3441, 7
      %vm3443 = vcmask 1041409
      %v3444 = vsel %vm3443, %v3442, %v3440
      %v3445 = vpack.c.b16 %v3444, %v3444
      %v3450 = vunpack.c.l.b16 %v3427
      %v3451 = vunpack.c.l.b16 %v3428
      %v3452 = vunpack.c.l.b16 %v3429
      %v3453 = vunpack.c.l.b16 %v3430
      %v3454 = vpack.c.b16 %v3451, %v3450
      %v3455 = vpack.c.b16 %v3453, %v3452
      %v3459 = vsel %vm1020, %v3445, 0
      %3461 = vmatprep.subr.bf16.mxu0 0
      %3462 = vmatpush1.bf16.msra.mxu0 %v3454
      %3463 = vmatprep.subr.bf16.mxu0 0
      %3464 = vmatpush1.bf16.msra.mxu0 %v3455
      %3465 = vmatprep.subr.bf16.mxu0 0
      %3466 = vmatpush1.bf16.msra.mxu0 0
      %3467 = vmatprep.subr.bf16.mxu0 0
      %3468 = vmatpush1.bf16.msra.mxu0 0
      %3469 = vmatprep.subr.bf16.mxu0 0
      %3470 = vmatpush1.bf16.msra.mxu0 0
      %3471 = vmatprep.subr.bf16.mxu0 0
      %3472 = vmatpush1.bf16.msra.mxu0 0
      %3473 = vmatprep.subr.bf16.mxu0 0
      %3474 = vmatpush1.bf16.msra.mxu0 0
      %3475 = vmatprep.subr.bf16.mxu0 0
      %3476 = vmatpush1.bf16.msra.mxu0 0
      %3477 = vmatprep.subr.bf16.mxu0 0
      %3478 = vmatpush1.bf16.msra.mxu0 0
      %3479 = vmatprep.subr.bf16.mxu0 0
      %3480 = vmatpush1.bf16.msra.mxu0 0
      %3481 = vmatprep.subr.bf16.mxu0 0
      %3482 = vmatpush1.bf16.msra.mxu0 0
      %3483 = vmatprep.subr.bf16.mxu0 0
      %3484 = vmatpush1.bf16.msra.mxu0 0
      %3485 = vmatprep.subr.bf16.mxu0 0
      %3486 = vmatpush1.bf16.msra.mxu0 0
      %3487 = vmatprep.subr.bf16.mxu0 0
      %3488 = vmatpush1.bf16.msra.mxu0 0
      %3489 = vmatprep.subr.bf16.mxu0 0
      %3490 = vmatpush1.bf16.msra.mxu0 0
      %3491 = vmatprep.subr.bf16.mxu0 0
      %3492 = vmatpush1.bf16.msra.mxu0 0
      %3493 = vmatprep.mubr.bf16.mxu0 0
      %3494 = vmatmul.mubr.bf16.gmra.mrb[0].mxu0 %v3459
      %v3495 = vpop.f32.mrb[0].mxu0
      %v3496 = vadd.f32 %v3436, %v3495
      %v3497 = vpop.f32.mrb[0].mxu0
      %v3498 = vpop.f32.mrb[0].mxu0
      %v3499 = vpop.f32.mrb[0].mxu0
      %3500 = vdwg.mxu0
      %v3503 = vrot.slane %v2896, 7
      %v3504 = vsel %vm3443, %v3503, %v2893
      %3505 = vrot.lane.b32.xlu0 %v3504, 64
      %v3506 = vpop.permute.xlu0 %3505
      %v3508 = vsel %vm3191, %v3496, %v3506
      %vm3509 = vcmask 785408
      %v3510 = vsel %vm3509, %v3508, 0.0
      %3511 = vst [vmem:[%s808] sm:$0x3] %v3510
      %p3512 = scmp.lt.s32.totalorder %s35, 1
      %s3513 = scalar_select %p3512, %s35, 1
      %p3514 = scmp.lt.s32.totalorder %s34, 0
      %s3515 = scalar_select %p3514, %s34, 0
      %s3516 = sadd.s32 %s3515, %s3513
      %s3517 = smul.addr %s3516, 2
      %s3518 = scalar_lea.vmem %s19, %s3517
      // Predicated region
      $region162: #{vit_forward.1} parent=87 // pred_check
        %p3519 = pneg %p499
      $region163: #{vit_forward.1} parent=87 // pred_check_branch
        %3521 = sbr.rel (%p3519) target = $region165
      $region164: #{vit_forward.1} parent=87 // pred_region
        _
      $region165: #{vit_forward.1} parent=87 // pred_fallthru
        _
    $region88: #{vit_forward.1} parent=5 // pred_fallthru
      _
    %p3522 = scmp.le.s32.totalorder 2, %s25
    // Predicated region
    $region166: #{vit_forward.1} parent=5 // pred_check
      %p3523 = pneg %p3522
    $region167: #{vit_forward.1} parent=5 // pred_check_branch
      %3525 = sbr.rel (%p3523) target = $region169
    $region168: #{vit_forward.1} parent=5 // pred_region
      %s3526 = ssub.s32 %s25, 2
      // Predicated region
      $region170: #{vit_forward.1} parent=168 // pred_check
        %p3527 = pneg %p505
      $region171: #{vit_forward.1} parent=168 // pred_check_branch
        %3529 = sbr.rel (%p3527) target = $region173
      $region172: #{vit_forward.1} parent=168 // pred_region
        %p3530 = scmp.lt.s32.totalorder %s37, 1
        %s3531 = scalar_select %p3530, %s37, 1
        %p3532 = scmp.lt.s32.totalorder %s36, 0
        %s3533 = scalar_select %p3532, %s36, 0
        %s3534 = sadd.s32 %s3533, %s3531
        %s3535 = smul.addr %s3534, 2
        %s3536 = scalar_lea.vmem %s19, %s3535
      $region173: #{vit_forward.1} parent=168 // pred_fallthru
        _
    $region169: #{vit_forward.1} parent=5 // pred_fallthru
      _
  $region6: #{vit_forward.1} parent=0 // loop_footer
    %s29 = sadd.s32 1, %s25
  $region7: #{vit_forward.1} parent=0 // loop_footer_branch
    %24 = sbr.rel target = $region3
  $region8: #{vit_forward.1} parent=0 // loop_exit
    _

</llo_original>
